<compile_context>
chip_gen: v5e
topology: v5e:2x2
jax: 0.10.0
libtpu: 0.0.40
codegen_flags: <defaults>
</compile_context>

<pallas_src>
import functools
from typing import Any, NamedTuple

import jax
import jax.numpy as jnp
from jax.experimental import pallas as pl
from jax.experimental.pallas import tpu as pltpu

_EPS = 1e-5


# ----------------------------------------------------------------------------
# Per-generation budgets / planning
# ----------------------------------------------------------------------------
@functools.lru_cache(maxsize=1)
def _device_info():
    """(vmem_limit_bytes, per-step block budget, multicore, tco_cap)."""
    try:
        kind = jax.devices()[0].device_kind.lower()
    except Exception:
        kind = ""
    if "v5" in kind or "v6" in kind:                  # 128 MiB physical VMEM
        vmem_limit, budget = 96 * 1024 * 1024, 40 * 1024 * 1024
    else:                                             # v7x (64 MiB) / unknown
        vmem_limit, budget = 48 * 1024 * 1024, 16 * 1024 * 1024
    lite = ("lite" in kind) or ("v5e" in kind) or ("v6e" in kind)
    multicore = (kind != "") and not lite             # v4/v5p megacore, v7x 2-TC
    tco_cap = 128 if ("v5" in kind and lite) else 256
    return vmem_limit, budget, multicore, tco_cap


def _pick_tco(cout, cap):
    if cout <= cap:
        return cout
    for d in (cap, 256, 128):
        if d <= cap and cout % d == 0:
            return d
    return cout                                       # e.g. 320: no 128-mult divisor


def _fused_plan(N, H, W, cin, cout, *, budget, multicore, tco_cap):
    """Return (tco, n_b) for the whole-image fused conv kernel, or None."""
    tco = _pick_tco(cout, tco_cap)
    if N % 2 == 0 and N > 1:
        nb_order = (2, 1) if multicore else (1, 2)    # multicore: feed both TCs
    else:
        nb_order = (1,)
    for nb in nb_order:
        NB = N // nb
        in_blk = NB * H * W * cin * 4                 # f32 (conservative)
        pad_tmp = NB * (H + 2) * (W + 2) * cin * 4    # in-kernel padded copy
        w_blk = 9 * cin * tco * 2                     # bf16 weights
        out_blk = NB * H * W * tco * 4                # f32 raw output
        # double-buffered DMA blocks + in-kernel temporaries (padded copy,
        # sliced windows / bf16 patches, f32 accumulator).
        foot = 2 * in_blk + 2 * w_blk + 2 * out_blk + pad_tmp + 2 * in_blk + out_blk
        if foot <= budget:
            return tco, nb
    return None


def _choose_row_tile(N, H, W, tci, tco, budget):
    """Largest row tile TH (dividing H) for the fallback kernel; footprint now
    includes the f32 accumulator and the unaligned-slice copies."""
    for th in range(H, 0, -1):
        if H % th:
            continue
        in_bytes = N * (th + 2) * (W + 2) * tci * 2
        w_bytes = 9 * tci * tco * 2
        out_bytes = N * th * W * tco * 4
        tmp = out_bytes + 2 * in_bytes
        if 2 * (in_bytes + w_bytes + out_bytes) + tmp <= budget:
            return th
    return 1


# ----------------------------------------------------------------------------
# Fused whole-image 3x3 conv kernel (BN affine + ReLU + pad folded in)
# ----------------------------------------------------------------------------
def _conv3x3_fused_kernel(x_ref, scale_ref, shift_ref, w_ref, raw_ref, stats_ref,
                          *, fuse_act):
    """One (batch-block, Cout-tile) grid step, full Cin contraction.

    x_ref:     (NB, H, W, Cin)  raw f32 (or pre-activated bf16) input
    scale_ref: (1, Cin) f32     producer BN scale (used iff fuse_act)
    shift_ref: (1, Cin) f32     producer BN shift (used iff fuse_act)
    w_ref:     (3, 3, Cin, TCO) bf16 weights
    raw_ref:   (NB, H, W, TCO)  f32 conv output (pre-BN)
    stats_ref: (1, 2, TCO)      f32 [sum, sum of squares] of this block
    """
    NB, H, W, C = x_ref.shape
    TCO = raw_ref.shape[-1]

    x = x_ref[...].astype(jnp.float32)
    if fuse_act:
        sc = scale_ref[...].reshape(1, 1, 1, C)
        sh = shift_ref[...].reshape(1, 1, 1, C)
        x = jnp.maximum(x * sc + sh, 0.0)

    # In-kernel zero padding (applied *after* the activation, matching
    # PyTorch's conv padding of the post-BN-ReLU tensor).
    zw = jnp.zeros((NB, H, 1, C), jnp.float32)
    x = jnp.concatenate([zw, x, zw], axis=2)            # (NB, H, W+2, C)
    zh = jnp.zeros((NB, 1, W + 2, C), jnp.float32)
    x = jnp.concatenate([zh, x, zh], axis=1)            # (NB, H+2, W+2, C)

    M = NB * H * W
    acc = jnp.zeros((M, TCO), jnp.float32)
    for kx in range(3):
        if W == 1 and kx != 1:
            continue                                    # pure-padding taps
        xk = x[:, :, kx:kx + W, :]                      # (NB, H+2, W, C)
        for ky in range(3):
            if H == 1 and ky != 1:
                continue
            patch = xk[:, ky:ky + H].astype(jnp.bfloat16).reshape(M, C)
            acc = acc + jnp.dot(patch, w_ref[ky, kx],
                                preferred_element_type=jnp.float32)

    raw_ref[...] = acc.reshape(NB, H, W, TCO)
    s = jnp.sum(acc, axis=0)[None, :]
    ss = jnp.sum(acc * acc, axis=0)[None, :]
    stats_ref[...] = jnp.concatenate([s, ss], axis=0)[None]


def conv3x3_fused(x, scale, shift, w, *, fuse_act, tco, n_b, vmem_limit):
    N, H, W, Cin = x.shape
    Cout = w.shape[-1]
    n_co = Cout // tco
    NB = N // n_b
    kern = functools.partial(_conv3x3_fused_kernel, fuse_act=fuse_act)
    raw, stats = pl.pallas_call(
        kern,
        out_shape=(
            jax.ShapeDtypeStruct((N, H, W, Cout), jnp.float32),
            jax.ShapeDtypeStruct((n_b, 2, Cout), jnp.float32),
        ),
        grid_spec=pltpu.PrefetchScalarGridSpec(
            num_scalar_prefetch=0,
            grid=(n_b, n_co),
            in_specs=[
                pl.BlockSpec((NB, H, W, Cin), lambda b, co: (b, 0, 0, 0)),
                pl.BlockSpec((1, Cin), lambda b, co: (0, 0)),
                pl.BlockSpec((1, Cin), lambda b, co: (0, 0)),
                pl.BlockSpec((3, 3, Cin, tco), lambda b, co: (0, 0, 0, co)),
            ],
            out_specs=[
                pl.BlockSpec((NB, H, W, tco), lambda b, co: (b, 0, 0, co)),
                pl.BlockSpec((1, 2, tco), lambda b, co: (b, 0, co)),
            ],
        ),
        compiler_params=pltpu.CompilerParams(
            dimension_semantics=("parallel", "parallel"),
            vmem_limit_bytes=vmem_limit,
        ),
    )(x, scale, shift, w.astype(jnp.bfloat16))
    return raw, stats


_FUSED_STATE = {"ok": None}


def _fused_supported():
    """Probe the fused kernel on tiny shapes; fall back to the proven
    row-tiled kernel if it fails to lower on this generation."""
    if _FUSED_STATE["ok"] is None:
        vmem_limit, _, _, _ = _device_info()
        ok = True
        try:
            for (n, h, w) in ((1, 4, 4), (1, 1, 1)):
                xp = jnp.zeros((n, h, w, 16), jnp.float32)
                sc = jnp.ones((1, 16), jnp.float32)
                sh = jnp.zeros((1, 16), jnp.float32)
                wp = jnp.zeros((3, 3, 16, 16), jnp.float32)
                r, _ = conv3x3_fused(xp, sc, sh, wp, fuse_act=True, tco=16,
                                     n_b=1, vmem_limit=vmem_limit)
                jax.block_until_ready(r)
        except Exception:
            ok = False
        _FUSED_STATE["ok"] = ok
    return _FUSED_STATE["ok"]


# ----------------------------------------------------------------------------
# Fallback: row-tiled halo-window kernel (pre-activated input) — proven path
# ----------------------------------------------------------------------------
def _conv3x3_tiled_kernel(x_ref, w_ref, raw_ref, stats_ref):
    ci = pl.program_id(2)
    last_ci = pl.num_programs(2) - 1
    N, TH, W, TCO = raw_ref.shape

    x = x_ref[...]                                   # (N, TH+2, W+2, TCI) bf16
    acc = jnp.zeros((N * TH * W, TCO), jnp.float32)
    for kx in range(3):
        xk = x[:, :, kx:kx + W, :]
        for ky in range(3):
            patch = xk[:, ky:ky + TH].reshape(N * TH * W, -1)
            acc = acc + jnp.dot(patch, w_ref[ky, kx],
                                preferred_element_type=jnp.float32)
    acc = acc.reshape(N, TH, W, TCO)

    @pl.when(ci == 0)
    def _():
        raw_ref[...] = acc

    @pl.when(ci > 0)
    def _():
        raw_ref[...] = raw_ref[...] + acc

    @pl.when(ci == last_ci)
    def _():
        y = raw_ref[...]
        s = jnp.sum(y, axis=(0, 1, 2))[None, :]
        ss = jnp.sum(y * y, axis=(0, 1, 2))[None, :]
        stats_ref[...] = jnp.concatenate([s, ss], axis=0)[None]


def conv3x3_tiled(x, w, th_override=None):
    """Row-tiled 3x3 conv on a pre-activated input (stride 1, pad 1)."""
    N, H, W, Cin = x.shape
    Cout = w.shape[-1]
    TCI = Cin if Cin <= 384 else 256
    TCO = Cout if Cout <= 384 else 256
    n_ci, n_co = Cin // TCI, Cout // TCO

    vmem_limit, budget, _, _ = _device_info()
    TH = th_override if th_override is not None else _choose_row_tile(
        N, H, W, TCI, TCO, budget)
    n_h = H // TH
    Wp = W + 2

    xp = jnp.pad(x.astype(jnp.float32),
                 ((0, 0), (1, 1), (1, 1), (0, 0))).astype(jnp.bfloat16)
    if n_h == 1:
        xw = xp
    else:
        rows = (jnp.arange(n_h)[:, None] * TH
                + jnp.arange(TH + 2)[None, :]).reshape(-1)
        xw = jnp.take(xp, rows, axis=1)
    wb = w.astype(jnp.bfloat16)

    raw, stats = pl.pallas_call(
        _conv3x3_tiled_kernel,
        out_shape=(
            jax.ShapeDtypeStruct((N, H, W, Cout), jnp.float32),
            jax.ShapeDtypeStruct((n_h, 2, Cout), jnp.float32),
        ),
        grid_spec=pltpu.PrefetchScalarGridSpec(
            num_scalar_prefetch=0,
            grid=(n_h, n_co, n_ci),
            in_specs=[
                pl.BlockSpec((N, TH + 2, Wp, TCI),
                             lambda h, co, ci: (0, h, 0, ci)),
                pl.BlockSpec((3, 3, TCI, TCO),
                             lambda h, co, ci: (0, 0, ci, co)),
            ],
            out_specs=[
                pl.BlockSpec((N, TH, W, TCO), lambda h, co, ci: (0, h, 0, co)),
                pl.BlockSpec((1, 2, TCO), lambda h, co, ci: (h, 0, co)),
            ],
        ),
        compiler_params=pltpu.CompilerParams(
            dimension_semantics=("parallel", "parallel", "arbitrary"),
            vmem_limit_bytes=vmem_limit,
        ),
    )(xw, wb)
    return raw, stats


# ----------------------------------------------------------------------------
# Lazy BatchNorm + ReLU (folded into the next consumer kernel)
# ----------------------------------------------------------------------------
class Act(NamedTuple):
    """Lazy activation: value = relu(raw * scale + shift)."""
    raw: Any
    scale: Any
    shift: Any


def val(a):
    """Materialize the activation (only for pooling / upsampling glue)."""
    if not isinstance(a, Act):
        return a
    return jnp.maximum(a.raw * a.scale + a.shift, 0.0)


def conv_bn_relu(a, w, gamma, beta):
    """3x3 conv + training-mode BatchNorm (batch stats, eps=1e-5) + ReLU.

    The BN+ReLU of the *input* Act is folded into this kernel's input path;
    the BN of this layer's output is returned lazily (Act) for its consumer.
    """
    fuse = isinstance(a, Act)
    x = a.raw if fuse else a
    N, H, W, Cin = x.shape
    Cout = w.shape[-1]
    vmem_limit, budget, multicore, tco_cap = _device_info()
    plan = _fused_plan(N, H, W, Cin, Cout, budget=budget,
                       multicore=multicore, tco_cap=tco_cap)

    if plan is not None and _fused_supported():
        tco, n_b = plan
        if fuse:
            scale = a.scale.reshape(1, Cin).astype(jnp.float32)
            shift = a.shift.reshape(1, Cin).astype(jnp.float32)
        else:
            scale = jnp.ones((1, Cin), jnp.float32)
            shift = jnp.zeros((1, Cin), jnp.float32)
        raw, stats = conv3x3_fused(x, scale, shift, w, fuse_act=fuse,
                                   tco=tco, n_b=n_b, vmem_limit=vmem_limit)
    else:
        # Too large for a whole-image VMEM block (or probe failed): activate
        # in XLA and use the row-tiled halo-window kernel.
        raw, stats = conv3x3_tiled(val(a), w)

    n = N * H * W
    s = jnp.sum(stats, axis=0)                       # (2, Cout)
    mean = s[0] / n
    var = jnp.maximum(s[1] / n - mean * mean, 0.0)   # biased variance
    scale = gamma * jax.lax.rsqrt(var + _EPS)
    shift = beta - mean * scale
    return Act(raw, scale, shift)


# ----------------------------------------------------------------------------
# 1x1 conv + bias kernel, with the input Act's BN+ReLU folded in
# ----------------------------------------------------------------------------
def _conv1x1_kernel(x_ref, scale_ref, shift_ref, w_ref, b_ref, o_ref):
    a = jnp.maximum(x_ref[...] * scale_ref[...] + shift_ref[...], 0.0)
    o_ref[...] = jnp.dot(a.astype(jnp.bfloat16), w_ref[...],
                         preferred_element_type=jnp.float32) + b_ref[...]


def conv1x1_bias(a, w1x1, bias):
    raw, scale, shift = a.raw, a.scale, a.shift
    N, H, W, Cin = raw.shape
    Cout = w1x1.shape[-1]
    Cpad = max(128, ((Cout + 127) // 128) * 128)      # lane-dense output block
    M = N * H * W

    TM = M
    if M > 2048:
        for cand in range(2048, 511, -8):             # multiple of 8, >= 512
            if M % cand == 0:
                TM = cand
                break

    w2 = jnp.zeros((Cin, Cpad), jnp.bfloat16).at[:, :Cout].set(
        w1x1.reshape(Cin, Cout).astype(jnp.bfloat16))
    b2 = jnp.zeros((1, Cpad), jnp.float32).at[:, :Cout].set(
        bias.reshape(1, Cout).astype(jnp.float32))
    xm = raw.reshape(M, Cin)
    sc = scale.reshape(1, Cin).astype(jnp.float32)
    sh = shift.reshape(1, Cin).astype(jnp.float32)

    vmem_limit, _, _, _ = _device_info()
    out = pl.pallas_call(
        _conv1x1_kernel,
        out_shape=jax.ShapeDtypeStruct((M, Cpad), jnp.float32),
        grid_spec=pltpu.PrefetchScalarGridSpec(
            num_scalar_prefetch=0,
            grid=(M // TM,),
            in_specs=[
                pl.BlockSpec((TM, Cin), lambda m: (m, 0)),
                pl.BlockSpec((1, Cin), lambda m: (0, 0)),
                pl.BlockSpec((1, Cin), lambda m: (0, 0)),
                pl.BlockSpec((Cin, Cpad), lambda m: (0, 0)),
                pl.BlockSpec((1, Cpad), lambda m: (0, 0)),
            ],
            out_specs=pl.BlockSpec((TM, Cpad), lambda m: (m, 0)),
        ),
        compiler_params=pltpu.CompilerParams(
            dimension_semantics=("parallel",),
            vmem_limit_bytes=vmem_limit,
        ),
    )(xm, sc, sh, w2, b2)
    return out[:, :Cout].reshape(N, H, W, Cout)


# ----------------------------------------------------------------------------
# Plain-JAX glue ops (pooling / upsampling / channel concat of lazy Acts)
# ----------------------------------------------------------------------------
def maxpool(a, k):
    x = val(a)
    N, H, W, C = x.shape
    y = x.reshape(N, H // k, k, W // k, k, C).max(axis=(2, 4))
    return y.astype(jnp.bfloat16)                     # consumer conv is bf16


def _interp_matrix(s_in, s_out):
    if s_in == 1:
        return jnp.ones((s_out, 1), jnp.float32)
    pos = jnp.arange(s_out, dtype=jnp.float32) * ((s_in - 1) / (s_out - 1))
    i0 = jnp.floor(pos).astype(jnp.int32)
    i1 = jnp.minimum(i0 + 1, s_in - 1)
    t = pos - i0.astype(jnp.float32)
    return (jax.nn.one_hot(i0, s_in, dtype=jnp.float32) * (1.0 - t)[:, None]
            + jax.nn.one_hot(i1, s_in, dtype=jnp.float32) * t[:, None])


def upsample_bilinear_ac(a, scale):
    """nn.Upsample(scale_factor, mode='bilinear', align_corners=True) as two
    interpolation-matrix matmuls (no gathers), bf16 output for the consumer.
    TODO(synk): fold the interpolation into the consumer conv kernel so the
    full-resolution upsampled tensor never hits HBM."""
    x = val(a)
    N, H, W, C = x.shape
    ay = _interp_matrix(H, H * scale)
    ax = _interp_matrix(W, W * scale)
    y = jnp.einsum('oh,nhwc->nowc', ay, x)
    y = jnp.einsum('pw,nhwc->nhpc', ax, y)
    return y.astype(jnp.bfloat16)


def concat_acts(branches):
    """Concatenate lazy activations along channels *without* materializing the
    activated values: raw tensors and per-channel BN folds are concatenated so
    the consumer conv still fuses BN+ReLU.
    TODO(synk): write each branch conv's output straight into its channel
    offset of a preallocated buffer (out BlockSpec + input_output_aliases)."""
    raw = jnp.concatenate([b.raw for b in branches], axis=-1)
    scale = jnp.concatenate([b.scale for b in branches], axis=-1)
    shift = jnp.concatenate([b.shift for b in branches], axis=-1)
    return Act(raw, scale, shift)


# ----------------------------------------------------------------------------
# Parameters (deterministic init)
# ----------------------------------------------------------------------------
def init_params(key, img_ch=3, num_classes=2):
    keys = iter(jax.random.split(key, 128))

    def conv_w(cin, cout, k=3):
        fan_in = float(cin * k * k)
        return jax.random.normal(next(keys), (k, k, cin, cout),
                                 jnp.float32) / (fan_in ** 0.5)

    def bn(c):
        g = 1.0 + 0.05 * jax.random.normal(next(keys), (c,), jnp.float32)
        b = 0.05 * jax.random.normal(next(keys), (c,), jnp.float32)
        return (g, b)

    def block(cin, cout):
        return dict(w1=conv_w(cin, cout), bn1=bn(cout),
                    w2=conv_w(cout, cout), bn2=bn(cout))

    def single(cin, cout):
        return dict(w=conv_w(cin, cout), bn=bn(cout))

    P = {}
    P['En_Conv11'] = block(img_ch, 64)
    P['En_Conv22'] = block(64, 128)
    P['En_Conv33'] = block(128, 256)
    P['En_Conv44'] = block(256, 512)
    P['En_Conv55'] = block(512, 1024)

    P['Conn_conv14'] = single(64, 64)
    P['Conn_conv24'] = single(128, 64)
    P['Conn_conv34'] = single(256, 64)
    P['Conn_conv44'] = single(512, 64)
    P['Up_conv54'] = single(1024, 64)

    P['Conn_conv13'] = single(64, 64)
    P['Conn_conv23'] = single(128, 64)
    P['Conn_conv33'] = single(256, 64)
    P['Up_conv43'] = single(320, 64)
    P['Up_conv53'] = single(1024, 64)

    P['Conn_conv12'] = single(64, 64)
    P['Conn_conv22'] = single(128, 64)
    P['Up_conv32'] = single(320, 64)
    P['Up_conv42'] = single(320, 64)
    P['Up_conv52'] = single(1024, 64)

    P['Conn_conv11'] = single(64, 64)
    P['Up_conv21'] = single(320, 64)
    P['Up_conv31'] = single(320, 64)
    P['Up_conv41'] = single(320, 64)
    P['Up_conv51'] = single(1024, 64)

    P['De_conv44'] = single(320, 320)
    P['De_conv33'] = single(320, 320)
    P['De_conv22'] = single(320, 320)
    P['De_conv11'] = single(320, 320)

    P['out'] = dict(
        w=jax.random.normal(next(keys), (1, 1, 320, num_classes),
                            jnp.float32) / (320.0 ** 0.5),
        b=0.05 * jax.random.normal(next(keys), (num_classes,), jnp.float32),
    )
    return P


# ----------------------------------------------------------------------------
# Module application helpers + full forward
# ----------------------------------------------------------------------------
def apply_block(a, p):              # conv_block
    a = conv_bn_relu(a, p['w1'], *p['bn1'])
    a = conv_bn_relu(a, p['w2'], *p['bn2'])
    return a


def apply_single(a, p):             # conv_block_single
    return conv_bn_relu(a, p['w'], *p['bn'])


def apply_up(a, p, scale):          # up_conv
    x = upsample_bilinear_ac(a, scale)
    return conv_bn_relu(x, p['w'], *p['bn'])


def unet3plus_forward(x_nchw, P):
    x = jnp.transpose(x_nchw, (0, 2, 3, 1)).astype(jnp.float32)   # NCHW -> NHWC

    e1 = apply_block(x, P['En_Conv11'])
    e2 = apply_block(maxpool(e1, 2), P['En_Conv22'])
    e3 = apply_block(maxpool(e2, 2), P['En_Conv33'])
    e4 = apply_block(maxpool(e3, 2), P['En_Conv44'])
    de5 = apply_block(maxpool(e4, 2), P['En_Conv55'])

    de14 = apply_single(maxpool(e1, 8), P['Conn_conv14'])
    de24 = apply_single(maxpool(e2, 4), P['Conn_conv24'])
    de34 = apply_single(maxpool(e3, 2), P['Conn_conv34'])
    de44 = apply_single(e4, P['Conn_conv44'])
    d54 = apply_up(de5, P['Up_conv54'], 2)
    d4 = apply_single(concat_acts([de14, de24, de34, de44, d54]), P['De_conv44'])

    de13 = apply_single(maxpool(e1, 4), P['Conn_conv13'])
    de23 = apply_single(maxpool(e2, 2), P['Conn_conv23'])
    de33 = apply_single(e3, P['Conn_conv33'])
    d43 = apply_up(d4, P['Up_conv43'], 2)
    d53 = apply_up(de5, P['Up_conv53'], 4)
    d3 = apply_single(concat_acts([de13, de23, de33, d43, d53]), P['De_conv33'])

    de12 = apply_single(maxpool(e1, 2), P['Conn_conv12'])
    de22 = apply_single(e2, P['Conn_conv22'])
    d32 = apply_up(d3, P['Up_conv32'], 2)
    d42 = apply_up(d4, P['Up_conv42'], 4)
    d52 = apply_up(de5, P['Up_conv52'], 8)
    d2 = apply_single(concat_acts([de12, de22, d32, d42, d52]), P['De_conv22'])

    d21 = apply_up(d2, P['Up_conv21'], 2)
    d31 = apply_up(d3, P['Up_conv31'], 4)
    d41 = apply_up(d4, P['Up_conv41'], 8)
    d51 = apply_up(de5, P['Up_conv51'], 16)
    de11 = apply_single(e1, P['Conn_conv11'])
    d1 = apply_single(concat_acts([de11, d21, d31, d41, d51]), P['De_conv11'])

    out = conv1x1_bias(d1, P['out']['w'], P['out']['b'])
    return {'out': jnp.transpose(out, (0, 3, 1, 2))}              # NHWC -> NCHW


# ----------------------------------------------------------------------------
if __name__ == "__main__":
    key = jax.random.PRNGKey(0)
    k_param, k_input, kc1, kc2, kc3, kc4 = jax.random.split(key, 6)
    vmem_limit, _, _, _ = _device_info()

    # Numerics self-check of the conv kernels (fused BN+ReLU+pad path and the
    # row-tiled halo fallback) against XLA's conv on bf16-cast inputs.
    xc = jax.random.normal(kc1, (2, 16, 16, 8), jnp.float32)
    wc = jax.random.normal(kc2, (3, 3, 8, 16), jnp.float32) * 0.1
    sc = 0.5 + jax.random.uniform(kc3, (8,), dtype=jnp.float32)
    sh = 0.1 * jax.random.normal(kc4, (8,), jnp.float32)
    act = jnp.maximum(xc * sc + sh, 0.0)
    ref = jax.lax.conv_general_dilated(
        act.astype(jnp.bfloat16).astype(jnp.float32),
        wc.astype(jnp.bfloat16).astype(jnp.float32),
        window_strides=(1, 1), padding=((1, 1), (1, 1)),
        dimension_numbers=("NHWC", "HWIO", "NHWC"))

    if _fused_supported():
        for nb in (1, 2):
            raw_f, _ = conv3x3_fused(xc, sc.reshape(1, 8), sh.reshape(1, 8), wc,
                                     fuse_act=True, tco=16, n_b=nb,
                                     vmem_limit=vmem_limit)
            assert jnp.allclose(raw_f, ref, atol=5e-2, rtol=5e-2), \
                float(jnp.max(jnp.abs(raw_f - ref)))

    raw_t, _ = conv3x3_tiled(act, wc, th_override=8)
    assert jnp.allclose(raw_t, ref, atol=5e-2, rtol=5e-2), \
        float(jnp.max(jnp.abs(raw_t - ref)))

    # Full forward: (batch=2, img_ch=3, 16, 16) -> (2, num_classes=2, 16, 16).
    params = init_params(k_param, img_ch=3, num_classes=2)
    x = jax.random.normal(k_input, (2, 3, 16, 16), jnp.float32)

    fwd = jax.jit(unet3plus_forward)
    out = jax.block_until_ready(fwd(x, params)['out'])

    assert out.shape == (2, 2, 16, 16), out.shape
    assert bool(jnp.all(jnp.isfinite(out)))
    print("KERNEL_OK")
</pallas_src>

<mosaic_0001>
module attributes {stable_mosaic.version = 11 : i64} {
  func.func @_conv3x3_fused_kernel(%arg0: i32, %arg1: i32, %arg2: memref<1x4x4x16xf32, #tpu.memory_space<vmem>>, %arg3: memref<1x16xf32, #tpu.memory_space<vmem>>, %arg4: memref<1x16xf32, #tpu.memory_space<vmem>>, %arg5: memref<3x3x16x16xbf16, #tpu.memory_space<vmem>>, %arg6: memref<1x4x4x16xf32, #tpu.memory_space<vmem>>, %arg7: memref<1x2x16xf32, #tpu.memory_space<vmem>>) attributes {dimension_semantics = [#tpu.dimension_semantics<parallel>, #tpu.dimension_semantics<parallel>], iteration_bounds = array<i64: 1, 1>, scalar_prefetch = 0 : i64, scratch_operands = 0 : i64, tpu.core_type = #tpu.core_type<tc>, window_params = [{transform_indices = @transform_0, window_bounds = array<i64: 1, 4, 4, 16>}, {pipeline_mode = #tpu.pipeline_mode<synchronous>, transform_indices = @transform_1, window_bounds = array<i64: 1, 16>}, {pipeline_mode = #tpu.pipeline_mode<synchronous>, transform_indices = @transform_2, window_bounds = array<i64: 1, 16>}, {transform_indices = @transform_3, window_bounds = array<i64: 3, 3, 16, 16>}, {transform_indices = @transform_4, window_bounds = array<i64: 1, 4, 4, 16>}, {transform_indices = @transform_5, window_bounds = array<i64: 1, 2, 16>}]} {
    %c0 = arith.constant 0 : index
    %c0_0 = arith.constant 0 : index
    %c0_1 = arith.constant 0 : index
    %c0_2 = arith.constant 0 : index
    %0 = vector.load %arg2[%c0, %c0_0, %c0_1, %c0_2] : memref<1x4x4x16xf32, #tpu.memory_space<vmem>>, vector<1x4x4x16xf32>
    %c0_3 = arith.constant 0 : index
    %c0_4 = arith.constant 0 : index
    %1 = vector.load %arg3[%c0_3, %c0_4] : memref<1x16xf32, #tpu.memory_space<vmem>>, vector<1x16xf32>
    %2 = vector.shape_cast %1 : vector<1x16xf32> to vector<1x1x1x16xf32>
    %c0_5 = arith.constant 0 : index
    %c0_6 = arith.constant 0 : index
    %3 = vector.load %arg4[%c0_5, %c0_6] : memref<1x16xf32, #tpu.memory_space<vmem>>, vector<1x16xf32>
    %4 = vector.shape_cast %3 : vector<1x16xf32> to vector<1x1x1x16xf32>
    %5 = vector.broadcast %2 : vector<1x1x1x16xf32> to vector<1x4x4x16xf32>
    %6 = arith.mulf %0, %5 : vector<1x4x4x16xf32>
    %7 = vector.broadcast %4 : vector<1x1x1x16xf32> to vector<1x4x4x16xf32>
    %8 = arith.addf %6, %7 : vector<1x4x4x16xf32>
    %cst = arith.constant 0.000000e+00 : f32
    %9 = vector.broadcast %cst : f32 to vector<1x4x4x16xf32>
    %10 = arith.maximumf %8, %9 : vector<1x4x4x16xf32>
    %cst_7 = arith.constant 0.000000e+00 : f32
    %11 = vector.broadcast %cst_7 : f32 to vector<1x4x1x16xf32>
    %12 = tpu.concatenate %11, %10, %11 in 2 : vector<1x4x1x16xf32>, vector<1x4x4x16xf32>, vector<1x4x1x16xf32> -> vector<1x4x6x16xf32>
    %cst_8 = arith.constant 0.000000e+00 : f32
    %13 = vector.broadcast %cst_8 : f32 to vector<1x1x6x16xf32>
    %14 = tpu.concatenate %13, %12, %13 in 1 : vector<1x1x6x16xf32>, vector<1x4x6x16xf32>, vector<1x1x6x16xf32> -> vector<1x6x6x16xf32>
    %cst_9 = arith.constant 0.000000e+00 : f32
    %15 = vector.broadcast %cst_9 : f32 to vector<16x16xf32>
    %16 = vector.extract_strided_slice %14 {offsets = [0, 0, 0, 0], sizes = [1, 6, 4, 16], strides = [1, 1, 1, 1]} : vector<1x6x6x16xf32> to vector<1x6x4x16xf32>
    %17 = vector.extract_strided_slice %16 {offsets = [0, 0, 0, 0], sizes = [1, 4, 4, 16], strides = [1, 1, 1, 1]} : vector<1x6x4x16xf32> to vector<1x4x4x16xf32>
    %18 = arith.truncf %17 : vector<1x4x4x16xf32> to vector<1x4x4x16xbf16>
    %19 = vector.shape_cast %18 : vector<1x4x4x16xbf16> to vector<16x16xbf16>
    %c0_10 = arith.constant 0 : index
    %c0_11 = arith.constant 0 : index
    %c0_12 = arith.constant 0 : index
    %c0_13 = arith.constant 0 : index
    %20 = vector.load %arg5[%c0_10, %c0_11, %c0_12, %c0_13] : memref<3x3x16x16xbf16, #tpu.memory_space<vmem>>, vector<1x1x16x16xbf16>
    %21 = vector.shape_cast %20 : vector<1x1x16x16xbf16> to vector<16x16xbf16>
    %cst_14 = arith.constant dense<0.000000e+00> : vector<16x16xf32>
    %22 = tpu.matmul %19, %21, %cst_14 {dimension_numbers = #tpu.dot_dimension_numbers<[1], [0], [0], [1], [0, 0, 1, 1], [], []>} : vector<16x16xbf16>, vector<16x16xbf16>, vector<16x16xf32> -> vector<16x16xf32>
    %23 = arith.addf %15, %22 : vector<16x16xf32>
    %24 = vector.extract_strided_slice %16 {offsets = [0, 1, 0, 0], sizes = [1, 4, 4, 16], strides = [1, 1, 1, 1]} : vector<1x6x4x16xf32> to vector<1x4x4x16xf32>
    %25 = arith.truncf %24 : vector<1x4x4x16xf32> to vector<1x4x4x16xbf16>
    %26 = vector.shape_cast %25 : vector<1x4x4x16xbf16> to vector<16x16xbf16>
    %c1 = arith.constant 1 : index
    %c0_15 = arith.constant 0 : index
    %c0_16 = arith.constant 0 : index
    %c0_17 = arith.constant 0 : index
    %27 = vector.load %arg5[%c1, %c0_15, %c0_16, %c0_17] : memref<3x3x16x16xbf16, #tpu.memory_space<vmem>>, vector<1x1x16x16xbf16>
    %28 = vector.shape_cast %27 : vector<1x1x16x16xbf16> to vector<16x16xbf16>
    %cst_18 = arith.constant dense<0.000000e+00> : vector<16x16xf32>
    %29 = tpu.matmul %26, %28, %cst_18 {dimension_numbers = #tpu.dot_dimension_numbers<[1], [0], [0], [1], [0, 0, 1, 1], [], []>} : vector<16x16xbf16>, vector<16x16xbf16>, vector<16x16xf32> -> vector<16x16xf32>
    %30 = arith.addf %23, %29 : vector<16x16xf32>
    %31 = vector.extract_strided_slice %16 {offsets = [0, 2, 0, 0], sizes = [1, 4, 4, 16], strides = [1, 1, 1, 1]} : vector<1x6x4x16xf32> to vector<1x4x4x16xf32>
    %32 = arith.truncf %31 : vector<1x4x4x16xf32> to vector<1x4x4x16xbf16>
    %33 = vector.shape_cast %32 : vector<1x4x4x16xbf16> to vector<16x16xbf16>
    %c2 = arith.constant 2 : index
    %c0_19 = arith.constant 0 : index
    %c0_20 = arith.constant 0 : index
    %c0_21 = arith.constant 0 : index
    %34 = vector.load %arg5[%c2, %c0_19, %c0_20, %c0_21] : memref<3x3x16x16xbf16, #tpu.memory_space<vmem>>, vector<1x1x16x16xbf16>
    %35 = vector.shape_cast %34 : vector<1x1x16x16xbf16> to vector<16x16xbf16>
    %cst_22 = arith.constant dense<0.000000e+00> : vector<16x16xf32>
    %36 = tpu.matmul %33, %35, %cst_22 {dimension_numbers = #tpu.dot_dimension_numbers<[1], [0], [0], [1], [0, 0, 1, 1], [], []>} : vector<16x16xbf16>, vector<16x16xbf16>, vector<16x16xf32> -> vector<16x16xf32>
    %37 = arith.addf %30, %36 : vector<16x16xf32>
    %38 = vector.extract_strided_slice %14 {offsets = [0, 0, 1, 0], sizes = [1, 6, 4, 16], strides = [1, 1, 1, 1]} : vector<1x6x6x16xf32> to vector<1x6x4x16xf32>
    %39 = vector.extract_strided_slice %38 {offsets = [0, 0, 0, 0], sizes = [1, 4, 4, 16], strides = [1, 1, 1, 1]} : vector<1x6x4x16xf32> to vector<1x4x4x16xf32>
    %40 = arith.truncf %39 : vector<1x4x4x16xf32> to vector<1x4x4x16xbf16>
    %41 = vector.shape_cast %40 : vector<1x4x4x16xbf16> to vector<16x16xbf16>
    %c0_23 = arith.constant 0 : index
    %c1_24 = arith.constant 1 : index
    %c0_25 = arith.constant 0 : index
    %c0_26 = arith.constant 0 : index
    %42 = vector.load %arg5[%c0_23, %c1_24, %c0_25, %c0_26] : memref<3x3x16x16xbf16, #tpu.memory_space<vmem>>, vector<1x1x16x16xbf16>
    %43 = vector.shape_cast %42 : vector<1x1x16x16xbf16> to vector<16x16xbf16>
    %cst_27 = arith.constant dense<0.000000e+00> : vector<16x16xf32>
    %44 = tpu.matmul %41, %43, %cst_27 {dimension_numbers = #tpu.dot_dimension_numbers<[1], [0], [0], [1], [0, 0, 1, 1], [], []>} : vector<16x16xbf16>, vector<16x16xbf16>, vector<16x16xf32> -> vector<16x16xf32>
    %45 = arith.addf %37, %44 : vector<16x16xf32>
    %46 = vector.extract_strided_slice %38 {offsets = [0, 1, 0, 0], sizes = [1, 4, 4, 16], strides = [1, 1, 1, 1]} : vector<1x6x4x16xf32> to vector<1x4x4x16xf32>
    %47 = arith.truncf %46 : vector<1x4x4x16xf32> to vector<1x4x4x16xbf16>
    %48 = vector.shape_cast %47 : vector<1x4x4x16xbf16> to vector<16x16xbf16>
    %c1_28 = arith.constant 1 : index
    %c1_29 = arith.constant 1 : index
    %c0_30 = arith.constant 0 : index
    %c0_31 = arith.constant 0 : index
    %49 = vector.load %arg5[%c1_28, %c1_29, %c0_30, %c0_31] : memref<3x3x16x16xbf16, #tpu.memory_space<vmem>>, vector<1x1x16x16xbf16>
    %50 = vector.shape_cast %49 : vector<1x1x16x16xbf16> to vector<16x16xbf16>
    %cst_32 = arith.constant dense<0.000000e+00> : vector<16x16xf32>
    %51 = tpu.matmul %48, %50, %cst_32 {dimension_numbers = #tpu.dot_dimension_numbers<[1], [0], [0], [1], [0, 0, 1, 1], [], []>} : vector<16x16xbf16>, vector<16x16xbf16>, vector<16x16xf32> -> vector<16x16xf32>
    %52 = arith.addf %45, %51 : vector<16x16xf32>
    %53 = vector.extract_strided_slice %38 {offsets = [0, 2, 0, 0], sizes = [1, 4, 4, 16], strides = [1, 1, 1, 1]} : vector<1x6x4x16xf32> to vector<1x4x4x16xf32>
    %54 = arith.truncf %53 : vector<1x4x4x16xf32> to vector<1x4x4x16xbf16>
    %55 = vector.shape_cast %54 : vector<1x4x4x16xbf16> to vector<16x16xbf16>
    %c2_33 = arith.constant 2 : index
    %c1_34 = arith.constant 1 : index
    %c0_35 = arith.constant 0 : index
    %c0_36 = arith.constant 0 : index
    %56 = vector.load %arg5[%c2_33, %c1_34, %c0_35, %c0_36] : memref<3x3x16x16xbf16, #tpu.memory_space<vmem>>, vector<1x1x16x16xbf16>
    %57 = vector.shape_cast %56 : vector<1x1x16x16xbf16> to vector<16x16xbf16>
    %cst_37 = arith.constant dense<0.000000e+00> : vector<16x16xf32>
    %58 = tpu.matmul %55, %57, %cst_37 {dimension_numbers = #tpu.dot_dimension_numbers<[1], [0], [0], [1], [0, 0, 1, 1], [], []>} : vector<16x16xbf16>, vector<16x16xbf16>, vector<16x16xf32> -> vector<16x16xf32>
    %59 = arith.addf %52, %58 : vector<16x16xf32>
    %60 = vector.extract_strided_slice %14 {offsets = [0, 0, 2, 0], sizes = [1, 6, 4, 16], strides = [1, 1, 1, 1]} : vector<1x6x6x16xf32> to vector<1x6x4x16xf32>
    %61 = vector.extract_strided_slice %60 {offsets = [0, 0, 0, 0], sizes = [1, 4, 4, 16], strides = [1, 1, 1, 1]} : vector<1x6x4x16xf32> to vector<1x4x4x16xf32>
    %62 = arith.truncf %61 : vector<1x4x4x16xf32> to vector<1x4x4x16xbf16>
    %63 = vector.shape_cast %62 : vector<1x4x4x16xbf16> to vector<16x16xbf16>
    %c0_38 = arith.constant 0 : index
    %c2_39 = arith.constant 2 : index
    %c0_40 = arith.constant 0 : index
    %c0_41 = arith.constant 0 : index
    %64 = vector.load %arg5[%c0_38, %c2_39, %c0_40, %c0_41] : memref<3x3x16x16xbf16, #tpu.memory_space<vmem>>, vector<1x1x16x16xbf16>
    %65 = vector.shape_cast %64 : vector<1x1x16x16xbf16> to vector<16x16xbf16>
    %cst_42 = arith.constant dense<0.000000e+00> : vector<16x16xf32>
    %66 = tpu.matmul %63, %65, %cst_42 {dimension_numbers = #tpu.dot_dimension_numbers<[1], [0], [0], [1], [0, 0, 1, 1], [], []>} : vector<16x16xbf16>, vector<16x16xbf16>, vector<16x16xf32> -> vector<16x16xf32>
    %67 = arith.addf %59, %66 : vector<16x16xf32>
    %68 = vector.extract_strided_slice %60 {offsets = [0, 1, 0, 0], sizes = [1, 4, 4, 16], strides = [1, 1, 1, 1]} : vector<1x6x4x16xf32> to vector<1x4x4x16xf32>
    %69 = arith.truncf %68 : vector<1x4x4x16xf32> to vector<1x4x4x16xbf16>
    %70 = vector.shape_cast %69 : vector<1x4x4x16xbf16> to vector<16x16xbf16>
    %c1_43 = arith.constant 1 : index
    %c2_44 = arith.constant 2 : index
    %c0_45 = arith.constant 0 : index
    %c0_46 = arith.constant 0 : index
    %71 = vector.load %arg5[%c1_43, %c2_44, %c0_45, %c0_46] : memref<3x3x16x16xbf16, #tpu.memory_space<vmem>>, vector<1x1x16x16xbf16>
    %72 = vector.shape_cast %71 : vector<1x1x16x16xbf16> to vector<16x16xbf16>
    %cst_47 = arith.constant dense<0.000000e+00> : vector<16x16xf32>
    %73 = tpu.matmul %70, %72, %cst_47 {dimension_numbers = #tpu.dot_dimension_numbers<[1], [0], [0], [1], [0, 0, 1, 1], [], []>} : vector<16x16xbf16>, vector<16x16xbf16>, vector<16x16xf32> -> vector<16x16xf32>
    %74 = arith.addf %67, %73 : vector<16x16xf32>
    %75 = vector.extract_strided_slice %60 {offsets = [0, 2, 0, 0], sizes = [1, 4, 4, 16], strides = [1, 1, 1, 1]} : vector<1x6x4x16xf32> to vector<1x4x4x16xf32>
    %76 = arith.truncf %75 : vector<1x4x4x16xf32> to vector<1x4x4x16xbf16>
    %77 = vector.shape_cast %76 : vector<1x4x4x16xbf16> to vector<16x16xbf16>
    %c2_48 = arith.constant 2 : index
    %c2_49 = arith.constant 2 : index
    %c0_50 = arith.constant 0 : index
    %c0_51 = arith.constant 0 : index
    %78 = vector.load %arg5[%c2_48, %c2_49, %c0_50, %c0_51] : memref<3x3x16x16xbf16, #tpu.memory_space<vmem>>, vector<1x1x16x16xbf16>
    %79 = vector.shape_cast %78 : vector<1x1x16x16xbf16> to vector<16x16xbf16>
    %cst_52 = arith.constant dense<0.000000e+00> : vector<16x16xf32>
    %80 = tpu.matmul %77, %79, %cst_52 {dimension_numbers = #tpu.dot_dimension_numbers<[1], [0], [0], [1], [0, 0, 1, 1], [], []>} : vector<16x16xbf16>, vector<16x16xbf16>, vector<16x16xf32> -> vector<16x16xf32>
    %81 = arith.addf %74, %80 : vector<16x16xf32>
    %82 = vector.shape_cast %81 : vector<16x16xf32> to vector<1x4x4x16xf32>
    %c0_53 = arith.constant 0 : index
    %c0_54 = arith.constant 0 : index
    %c0_55 = arith.constant 0 : index
    %c0_56 = arith.constant 0 : index
    %83 = vector.load %arg6[%c0_53, %c0_54, %c0_55, %c0_56] : memref<1x4x4x16xf32, #tpu.memory_space<vmem>>, vector<1x4x4x16xf32>
    tpu.vector_store %arg6[%c0_53, %c0_54, %c0_55, %c0_56], %82 {strides = array<i32>} : memref<1x4x4x16xf32, #tpu.memory_space<vmem>>, vector<1x4x4x16xf32>,
    %cst_57 = arith.constant dense<0.000000e+00> : vector<16xf32>
    %84 = vector.multi_reduction <add>, %81, %cst_57 [0] : vector<16x16xf32> to vector<16xf32>
    %85 = vector.shape_cast %84 : vector<16xf32> to vector<1x16xf32>
    %86 = arith.mulf %81, %81 : vector<16x16xf32>
    %cst_58 = arith.constant dense<0.000000e+00> : vector<16xf32>
    %87 = vector.multi_reduction <add>, %86, %cst_58 [0] : vector<16x16xf32> to vector<16xf32>
    %88 = vector.shape_cast %87 : vector<16xf32> to vector<1x16xf32>
    %89 = tpu.concatenate %85, %88 in 0 : vector<1x16xf32>, vector<1x16xf32> -> vector<2x16xf32>
    %90 = vector.shape_cast %89 : vector<2x16xf32> to vector<1x2x16xf32>
    %c0_59 = arith.constant 0 : index
    %c0_60 = arith.constant 0 : index
    %c0_61 = arith.constant 0 : index
    %91 = vector.load %arg7[%c0_59, %c0_60, %c0_61] : memref<1x2x16xf32, #tpu.memory_space<vmem>>, vector<1x2x16xf32>
    tpu.vector_store %arg7[%c0_59, %c0_60, %c0_61], %90 {strides = array<i32>} : memref<1x2x16xf32, #tpu.memory_space<vmem>>, vector<1x2x16xf32>,
    return
  }
  func.func @transform_0(%arg0: i32, %arg1: i32) -> (i32, i32, i32, i32) {
    %c0_i32 = arith.constant 0 : i32
    %c0_i32_0 = arith.constant 0 : i32
    %c0_i32_1 = arith.constant 0 : i32
    %c0_i32_2 = arith.constant 0 : i32
    return %arg0, %c0_i32, %c0_i32_0, %c0_i32_1 : i32, i32, i32, i32
  }
  func.func @transform_1(%arg0: i32, %arg1: i32) -> (i32, i32) {
    %c0_i32 = arith.constant 0 : i32
    %c0_i32_0 = arith.constant 0 : i32
    %c0_i32_1 = arith.constant 0 : i32
    return %c0_i32, %c0_i32_0 : i32, i32
  }
  func.func @transform_2(%arg0: i32, %arg1: i32) -> (i32, i32) {
    %c0_i32 = arith.constant 0 : i32
    %c0_i32_0 = arith.constant 0 : i32
    %c0_i32_1 = arith.constant 0 : i32
    return %c0_i32, %c0_i32_0 : i32, i32
  }
  func.func @transform_3(%arg0: i32, %arg1: i32) -> (i32, i32, i32, i32) {
    %c0_i32 = arith.constant 0 : i32
    %c0_i32_0 = arith.constant 0 : i32
    %c0_i32_1 = arith.constant 0 : i32
    %c0_i32_2 = arith.constant 0 : i32
    return %c0_i32, %c0_i32_0, %c0_i32_1, %arg1 : i32, i32, i32, i32
  }
  func.func @transform_4(%arg0: i32, %arg1: i32) -> (i32, i32, i32, i32) {
    %c0_i32 = arith.constant 0 : i32
    %c0_i32_0 = arith.constant 0 : i32
    %c0_i32_1 = arith.constant 0 : i32
    return %arg0, %c0_i32, %c0_i32_0, %arg1 : i32, i32, i32, i32
  }
  func.func @transform_5(%arg0: i32, %arg1: i32) -> (i32, i32, i32) {
    %c0_i32 = arith.constant 0 : i32
    %c0_i32_0 = arith.constant 0 : i32
    return %arg0, %c0_i32, %arg1 : i32, i32, i32
  }
}

module attributes {stable_mosaic.version = 11 : i64} {
  func.func @_conv3x3_tiled_kernel(%arg0: i32, %arg1: i32, %arg2: i32, %arg3: memref<2x10x18x8xbf16, #tpu.memory_space<vmem>>, %arg4: memref<3x3x8x16xbf16, #tpu.memory_space<vmem>>, %arg5: memref<2x8x16x16xf32, #tpu.memory_space<vmem>>, %arg6: memref<1x2x16xf32, #tpu.memory_space<vmem>>) attributes {dimension_semantics = [#tpu.dimension_semantics<parallel>, #tpu.dimension_semantics<parallel>, #tpu.dimension_semantics<arbitrary>], iteration_bounds = array<i64: 2, 1, 1>, scalar_prefetch = 0 : i64, scratch_operands = 0 : i64, tpu.core_type = #tpu.core_type<tc>, window_params = [{transform_indices = @transform_0, window_bounds = array<i64: 2, 10, 18, 8>}, {transform_indices = @transform_1, window_bounds = array<i64: 3, 3, 8, 16>}, {transform_indices = @transform_2, window_bounds = array<i64: 2, 8, 16, 16>}, {transform_indices = @transform_3, window_bounds = array<i64: 1, 2, 16>}]} {
    %c0 = arith.constant 0 : index
    %c0_0 = arith.constant 0 : index
    %c0_1 = arith.constant 0 : index
    %c0_2 = arith.constant 0 : index
    %0 = vector.load %arg3[%c0, %c0_0, %c0_1, %c0_2] : memref<2x10x18x8xbf16, #tpu.memory_space<vmem>>, vector<2x10x18x8xbf16>
    %cst = arith.constant 0.000000e+00 : f32
    %1 = vector.broadcast %cst : f32 to vector<256x16xf32>
    %2 = vector.extract_strided_slice %0 {offsets = [0, 0, 0, 0], sizes = [2, 10, 16, 8], strides = [1, 1, 1, 1]} : vector<2x10x18x8xbf16> to vector<2x10x16x8xbf16>
    %3 = vector.extract_strided_slice %2 {offsets = [0, 0, 0, 0], sizes = [2, 8, 16, 8], strides = [1, 1, 1, 1]} : vector<2x10x16x8xbf16> to vector<2x8x16x8xbf16>
    %4 = vector.shape_cast %3 : vector<2x8x16x8xbf16> to vector<256x8xbf16>
    %c0_3 = arith.constant 0 : index
    %c0_4 = arith.constant 0 : index
    %c0_5 = arith.constant 0 : index
    %c0_6 = arith.constant 0 : index
    %5 = vector.load %arg4[%c0_3, %c0_4, %c0_5, %c0_6] : memref<3x3x8x16xbf16, #tpu.memory_space<vmem>>, vector<1x1x8x16xbf16>
    %6 = vector.shape_cast %5 : vector<1x1x8x16xbf16> to vector<8x16xbf16>
    %cst_7 = arith.constant dense<0.000000e+00> : vector<256x16xf32>
    %7 = tpu.matmul %4, %6, %cst_7 {dimension_numbers = #tpu.dot_dimension_numbers<[1], [0], [0], [1], [0, 0, 1, 1], [], []>} : vector<256x8xbf16>, vector<8x16xbf16>, vector<256x16xf32> -> vector<256x16xf32>
    %8 = arith.addf %1, %7 : vector<256x16xf32>
    %9 = vector.extract_strided_slice %2 {offsets = [0, 1, 0, 0], sizes = [2, 8, 16, 8], strides = [1, 1, 1, 1]} : vector<2x10x16x8xbf16> to vector<2x8x16x8xbf16>
    %10 = vector.shape_cast %9 : vector<2x8x16x8xbf16> to vector<256x8xbf16>
    %c1 = arith.constant 1 : index
    %c0_8 = arith.constant 0 : index
    %c0_9 = arith.constant 0 : index
    %c0_10 = arith.constant 0 : index
    %11 = vector.load %arg4[%c1, %c0_8, %c0_9, %c0_10] : memref<3x3x8x16xbf16, #tpu.memory_space<vmem>>, vector<1x1x8x16xbf16>
    %12 = vector.shape_cast %11 : vector<1x1x8x16xbf16> to vector<8x16xbf16>
    %cst_11 = arith.constant dense<0.000000e+00> : vector<256x16xf32>
    %13 = tpu.matmul %10, %12, %cst_11 {dimension_numbers = #tpu.dot_dimension_numbers<[1], [0], [0], [1], [0, 0, 1, 1], [], []>} : vector<256x8xbf16>, vector<8x16xbf16>, vector<256x16xf32> -> vector<256x16xf32>
    %14 = arith.addf %8, %13 : vector<256x16xf32>
    %15 = vector.extract_strided_slice %2 {offsets = [0, 2, 0, 0], sizes = [2, 8, 16, 8], strides = [1, 1, 1, 1]} : vector<2x10x16x8xbf16> to vector<2x8x16x8xbf16>
    %16 = vector.shape_cast %15 : vector<2x8x16x8xbf16> to vector<256x8xbf16>
    %c2 = arith.constant 2 : index
    %c0_12 = arith.constant 0 : index
    %c0_13 = arith.constant 0 : index
    %c0_14 = arith.constant 0 : index
    %17 = vector.load %arg4[%c2, %c0_12, %c0_13, %c0_14] : memref<3x3x8x16xbf16, #tpu.memory_space<vmem>>, vector<1x1x8x16xbf16>
    %18 = vector.shape_cast %17 : vector<1x1x8x16xbf16> to vector<8x16xbf16>
    %cst_15 = arith.constant dense<0.000000e+00> : vector<256x16xf32>
    %19 = tpu.matmul %16, %18, %cst_15 {dimension_numbers = #tpu.dot_dimension_numbers<[1], [0], [0], [1], [0, 0, 1, 1], [], []>} : vector<256x8xbf16>, vector<8x16xbf16>, vector<256x16xf32> -> vector<256x16xf32>
    %20 = arith.addf %14, %19 : vector<256x16xf32>
    %21 = vector.extract_strided_slice %0 {offsets = [0, 0, 1, 0], sizes = [2, 10, 16, 8], strides = [1, 1, 1, 1]} : vector<2x10x18x8xbf16> to vector<2x10x16x8xbf16>
    %22 = vector.extract_strided_slice %21 {offsets = [0, 0, 0, 0], sizes = [2, 8, 16, 8], strides = [1, 1, 1, 1]} : vector<2x10x16x8xbf16> to vector<2x8x16x8xbf16>
    %23 = vector.shape_cast %22 : vector<2x8x16x8xbf16> to vector<256x8xbf16>
    %c0_16 = arith.constant 0 : index
    %c1_17 = arith.constant 1 : index
    %c0_18 = arith.constant 0 : index
    %c0_19 = arith.constant 0 : index
    %24 = vector.load %arg4[%c0_16, %c1_17, %c0_18, %c0_19] : memref<3x3x8x16xbf16, #tpu.memory_space<vmem>>, vector<1x1x8x16xbf16>
    %25 = vector.shape_cast %24 : vector<1x1x8x16xbf16> to vector<8x16xbf16>
    %cst_20 = arith.constant dense<0.000000e+00> : vector<256x16xf32>
    %26 = tpu.matmul %23, %25, %cst_20 {dimension_numbers = #tpu.dot_dimension_numbers<[1], [0], [0], [1], [0, 0, 1, 1], [], []>} : vector<256x8xbf16>, vector<8x16xbf16>, vector<256x16xf32> -> vector<256x16xf32>
    %27 = arith.addf %20, %26 : vector<256x16xf32>
    %28 = vector.extract_strided_slice %21 {offsets = [0, 1, 0, 0], sizes = [2, 8, 16, 8], strides = [1, 1, 1, 1]} : vector<2x10x16x8xbf16> to vector<2x8x16x8xbf16>
    %29 = vector.shape_cast %28 : vector<2x8x16x8xbf16> to vector<256x8xbf16>
    %c1_21 = arith.constant 1 : index
    %c1_22 = arith.constant 1 : index
    %c0_23 = arith.constant 0 : index
    %c0_24 = arith.constant 0 : index
    %30 = vector.load %arg4[%c1_21, %c1_22, %c0_23, %c0_24] : memref<3x3x8x16xbf16, #tpu.memory_space<vmem>>, vector<1x1x8x16xbf16>
    %31 = vector.shape_cast %30 : vector<1x1x8x16xbf16> to vector<8x16xbf16>
    %cst_25 = arith.constant dense<0.000000e+00> : vector<256x16xf32>
    %32 = tpu.matmul %29, %31, %cst_25 {dimension_numbers = #tpu.dot_dimension_numbers<[1], [0], [0], [1], [0, 0, 1, 1], [], []>} : vector<256x8xbf16>, vector<8x16xbf16>, vector<256x16xf32> -> vector<256x16xf32>
    %33 = arith.addf %27, %32 : vector<256x16xf32>
    %34 = vector.extract_strided_slice %21 {offsets = [0, 2, 0, 0], sizes = [2, 8, 16, 8], strides = [1, 1, 1, 1]} : vector<2x10x16x8xbf16> to vector<2x8x16x8xbf16>
    %35 = vector.shape_cast %34 : vector<2x8x16x8xbf16> to vector<256x8xbf16>
    %c2_26 = arith.constant 2 : index
    %c1_27 = arith.constant 1 : index
    %c0_28 = arith.constant 0 : index
    %c0_29 = arith.constant 0 : index
    %36 = vector.load %arg4[%c2_26, %c1_27, %c0_28, %c0_29] : memref<3x3x8x16xbf16, #tpu.memory_space<vmem>>, vector<1x1x8x16xbf16>
    %37 = vector.shape_cast %36 : vector<1x1x8x16xbf16> to vector<8x16xbf16>
    %cst_30 = arith.constant dense<0.000000e+00> : vector<256x16xf32>
    %38 = tpu.matmul %35, %37, %cst_30 {dimension_numbers = #tpu.dot_dimension_numbers<[1], [0], [0], [1], [0, 0, 1, 1], [], []>} : vector<256x8xbf16>, vector<8x16xbf16>, vector<256x16xf32> -> vector<256x16xf32>
    %39 = arith.addf %33, %38 : vector<256x16xf32>
    %40 = vector.extract_strided_slice %0 {offsets = [0, 0, 2, 0], sizes = [2, 10, 16, 8], strides = [1, 1, 1, 1]} : vector<2x10x18x8xbf16> to vector<2x10x16x8xbf16>
    %41 = vector.extract_strided_slice %40 {offsets = [0, 0, 0, 0], sizes = [2, 8, 16, 8], strides = [1, 1, 1, 1]} : vector<2x10x16x8xbf16> to vector<2x8x16x8xbf16>
    %42 = vector.shape_cast %41 : vector<2x8x16x8xbf16> to vector<256x8xbf16>
    %c0_31 = arith.constant 0 : index
    %c2_32 = arith.constant 2 : index
    %c0_33 = arith.constant 0 : index
    %c0_34 = arith.constant 0 : index
    %43 = vector.load %arg4[%c0_31, %c2_32, %c0_33, %c0_34] : memref<3x3x8x16xbf16, #tpu.memory_space<vmem>>, vector<1x1x8x16xbf16>
    %44 = vector.shape_cast %43 : vector<1x1x8x16xbf16> to vector<8x16xbf16>
    %cst_35 = arith.constant dense<0.000000e+00> : vector<256x16xf32>
    %45 = tpu.matmul %42, %44, %cst_35 {dimension_numbers = #tpu.dot_dimension_numbers<[1], [0], [0], [1], [0, 0, 1, 1], [], []>} : vector<256x8xbf16>, vector<8x16xbf16>, vector<256x16xf32> -> vector<256x16xf32>
    %46 = arith.addf %39, %45 : vector<256x16xf32>
    %47 = vector.extract_strided_slice %40 {offsets = [0, 1, 0, 0], sizes = [2, 8, 16, 8], strides = [1, 1, 1, 1]} : vector<2x10x16x8xbf16> to vector<2x8x16x8xbf16>
    %48 = vector.shape_cast %47 : vector<2x8x16x8xbf16> to vector<256x8xbf16>
    %c1_36 = arith.constant 1 : index
    %c2_37 = arith.constant 2 : index
    %c0_38 = arith.constant 0 : index
    %c0_39 = arith.constant 0 : index
    %49 = vector.load %arg4[%c1_36, %c2_37, %c0_38, %c0_39] : memref<3x3x8x16xbf16, #tpu.memory_space<vmem>>, vector<1x1x8x16xbf16>
    %50 = vector.shape_cast %49 : vector<1x1x8x16xbf16> to vector<8x16xbf16>
    %cst_40 = arith.constant dense<0.000000e+00> : vector<256x16xf32>
    %51 = tpu.matmul %48, %50, %cst_40 {dimension_numbers = #tpu.dot_dimension_numbers<[1], [0], [0], [1], [0, 0, 1, 1], [], []>} : vector<256x8xbf16>, vector<8x16xbf16>, vector<256x16xf32> -> vector<256x16xf32>
    %52 = arith.addf %46, %51 : vector<256x16xf32>
    %53 = vector.extract_strided_slice %40 {offsets = [0, 2, 0, 0], sizes = [2, 8, 16, 8], strides = [1, 1, 1, 1]} : vector<2x10x16x8xbf16> to vector<2x8x16x8xbf16>
    %54 = vector.shape_cast %53 : vector<2x8x16x8xbf16> to vector<256x8xbf16>
    %c2_41 = arith.constant 2 : index
    %c2_42 = arith.constant 2 : index
    %c0_43 = arith.constant 0 : index
    %c0_44 = arith.constant 0 : index
    %55 = vector.load %arg4[%c2_41, %c2_42, %c0_43, %c0_44] : memref<3x3x8x16xbf16, #tpu.memory_space<vmem>>, vector<1x1x8x16xbf16>
    %56 = vector.shape_cast %55 : vector<1x1x8x16xbf16> to vector<8x16xbf16>
    %cst_45 = arith.constant dense<0.000000e+00> : vector<256x16xf32>
    %57 = tpu.matmul %54, %56, %cst_45 {dimension_numbers = #tpu.dot_dimension_numbers<[1], [0], [0], [1], [0, 0, 1, 1], [], []>} : vector<256x8xbf16>, vector<8x16xbf16>, vector<256x16xf32> -> vector<256x16xf32>
    %58 = arith.addf %52, %57 : vector<256x16xf32>
    %59 = vector.shape_cast %58 : vector<256x16xf32> to vector<2x8x16x16xf32>
    %c0_i32 = arith.constant 0 : i32
    %60 = arith.cmpi eq, %arg2, %c0_i32 : i32
    %61 = arith.extui %60 : i1 to i32
    %c0_i32_46 = arith.constant 0 : i32
    %62 = arith.cmpi ne, %61, %c0_i32_46 : i32
    scf.if %62 {
      %c0_51 = arith.constant 0 : index
      %c0_52 = arith.constant 0 : index
      %c0_53 = arith.constant 0 : index
      %c0_54 = arith.constant 0 : index
      %69 = vector.load %arg5[%c0_51, %c0_52, %c0_53, %c0_54] : memref<2x8x16x16xf32, #tpu.memory_space<vmem>>, vector<2x8x16x16xf32>
      tpu.vector_store %arg5[%c0_51, %c0_52, %c0_53, %c0_54], %59 {strides = array<i32>} : memref<2x8x16x16xf32, #tpu.memory_space<vmem>>, vector<2x8x16x16xf32>,
    } else {
    }
    %c0_i32_47 = arith.constant 0 : i32
    %63 = arith.cmpi sgt, %arg2, %c0_i32_47 : i32
    %64 = arith.extui %63 : i1 to i32
    %c0_i32_48 = arith.constant 0 : i32
    %65 = arith.cmpi ne, %64, %c0_i32_48 : i32
    scf.if %65 {
      %c0_51 = arith.constant 0 : index
      %c0_52 = arith.constant 0 : index
      %c0_53 = arith.constant 0 : index
      %c0_54 = arith.constant 0 : index
      %69 = vector.load %arg5[%c0_51, %c0_52, %c0_53, %c0_54] : memref<2x8x16x16xf32, #tpu.memory_space<vmem>>, vector<2x8x16x16xf32>
      %70 = arith.addf %69, %59 : vector<2x8x16x16xf32>
      %c0_55 = arith.constant 0 : index
      %c0_56 = arith.constant 0 : index
      %c0_57 = arith.constant 0 : index
      %c0_58 = arith.constant 0 : index
      %71 = vector.load %arg5[%c0_55, %c0_56, %c0_57, %c0_58] : memref<2x8x16x16xf32, #tpu.memory_space<vmem>>, vector<2x8x16x16xf32>
      tpu.vector_store %arg5[%c0_55, %c0_56, %c0_57, %c0_58], %70 {strides = array<i32>} : memref<2x8x16x16xf32, #tpu.memory_space<vmem>>, vector<2x8x16x16xf32>,
    } else {
    }
    %c0_i32_49 = arith.constant 0 : i32
    %66 = arith.cmpi eq, %arg2, %c0_i32_49 : i32
    %67 = arith.extui %66 : i1 to i32
    %c0_i32_50 = arith.constant 0 : i32
    %68 = arith.cmpi ne, %67, %c0_i32_50 : i32
    scf.if %68 {
      %c0_51 = arith.constant 0 : index
      %c0_52 = arith.constant 0 : index
      %c0_53 = arith.constant 0 : index
      %c0_54 = arith.constant 0 : index
      %69 = vector.load %arg5[%c0_51, %c0_52, %c0_53, %c0_54] : memref<2x8x16x16xf32, #tpu.memory_space<vmem>>, vector<2x8x16x16xf32>
      %cst_55 = arith.constant dense<0.000000e+00> : vector<16xf32>
      %70 = vector.multi_reduction <add>, %69, %cst_55 [0, 1, 2] : vector<2x8x16x16xf32> to vector<16xf32>
      %71 = vector.shape_cast %70 : vector<16xf32> to vector<1x16xf32>
      %72 = arith.mulf %69, %69 : vector<2x8x16x16xf32>
      %cst_56 = arith.constant dense<0.000000e+00> : vector<16xf32>
      %73 = vector.multi_reduction <add>, %72, %cst_56 [0, 1, 2] : vector<2x8x16x16xf32> to vector<16xf32>
      %74 = vector.shape_cast %73 : vector<16xf32> to vector<1x16xf32>
      %75 = tpu.concatenate %71, %74 in 0 : vector<1x16xf32>, vector<1x16xf32> -> vector<2x16xf32>
      %76 = vector.shape_cast %75 : vector<2x16xf32> to vector<1x2x16xf32>
      %c0_57 = arith.constant 0 : index
      %c0_58 = arith.constant 0 : index
      %c0_59 = arith.constant 0 : index
      %77 = vector.load %arg6[%c0_57, %c0_58, %c0_59] : memref<1x2x16xf32, #tpu.memory_space<vmem>>, vector<1x2x16xf32>
      tpu.vector_store %arg6[%c0_57, %c0_58, %c0_59], %76 {strides = array<i32>} : memref<1x2x16xf32, #tpu.memory_space<vmem>>, vector<1x2x16xf32>,
    } else {
    }
    return
  }
  func.func @transform_0(%arg0: i32, %arg1: i32, %arg2: i32) -> (i32, i32, i32, i32) {
    %c0_i32 = arith.constant 0 : i32
    %c0_i32_0 = arith.constant 0 : i32
    %c0_i32_1 = arith.constant 0 : i32
    return %c0_i32, %arg0, %c0_i32_0, %arg2 : i32, i32, i32, i32
  }
  func.func @transform_1(%arg0: i32, %arg1: i32, %arg2: i32) -> (i32, i32, i32, i32) {
    %c0_i32 = arith.constant 0 : i32
    %c0_i32_0 = arith.constant 0 : i32
    %c0_i32_1 = arith.constant 0 : i32
    return %c0_i32, %c0_i32_0, %arg2, %arg1 : i32, i32, i32, i32
  }
  func.func @transform_2(%arg0: i32, %arg1: i32, %arg2: i32) -> (i32, i32, i32, i32) {
    %c0_i32 = arith.constant 0 : i32
    %c0_i32_0 = arith.constant 0 : i32
    %c0_i32_1 = arith.constant 0 : i32
    return %c0_i32, %arg0, %c0_i32_0, %arg1 : i32, i32, i32, i32
  }
  func.func @transform_3(%arg0: i32, %arg1: i32, %arg2: i32) -> (i32, i32, i32) {
    %c0_i32 = arith.constant 0 : i32
    %c0_i32_0 = arith.constant 0 : i32
    return %arg0, %c0_i32, %arg1 : i32, i32, i32
  }
}

</mosaic_0001>

<llo_original>
// kernel: tpu_custom_call.1
$region0: #{tpu_custom_call.1}
  #allocation0 [shape = 'u32[]', space=smem, size = 0x4, offset = 0x4, fixed_abs, tag = 'smem constant byte address 0x4 - core index']
  #allocation1 [shape = 'u32[72,128]{1,0:T(1,128)}', space=vmem, size = 0x9000, scoped, tag = 'internal scratch']
  %s0 = inlined_call_operand.hbm [shape: f32[1,4,4,16], index: 0, kind: input, shape index: {}]
  %s1 = inlined_call_operand.hbm [shape: f32[1,16], index: 1, kind: input, shape index: {}]
  %s2 = inlined_call_operand.vmem [shape: f32[1,16], index: 2, kind: input, shape index: {}]
  %s3 = inlined_call_operand.hbm [shape: bf16[3,3,16,16], index: 3, kind: input, shape index: {}]
  %s4 = inlined_call_operand.hbm [shape: f32[1,4,4,16], index: 4, kind: output, shape index: {0}]
  %s5 = inlined_call_operand.hbm [shape: f32[1,2,16], index: 5, kind: output, shape index: {1}]
  %6 = xla_tuple %s4, %s5
  %s7 = sld [smem:[#allocation0]]
  $region46: #{tpu_custom_call.1} parent=0
    _
  %s9 = ssub.s32 1, %s7
  %s10 = scalar_select 0, %s9, %s7
  $region1: #{tpu_custom_call.1} parent=0
    #allocation2 [shape = 'u8[8192]{0}', space=vmem, size = 0x2000, scoped, tag = 'input window, operand 0, single buffered']
    #allocation3 [shape = 's32[1]{0}', space=sflag, size = 0x4, scoped, tag = 'scoped memory for tpu_custom_call.1']
    #allocation4 [shape = 's32[1]{0}', space=sflag, size = 0x4, scoped, tag = 'scoped memory for tpu_custom_call.1']
    #allocation5 [shape = 'u8[512]{0}', space=vmem, size = 0x400, scoped, tag = 'input window, operand 1, single buffered']
    #allocation6 [shape = 's32[1]{0}', space=sflag, size = 0x4, scoped, tag = 'scoped memory for tpu_custom_call.1']
    #allocation7 [shape = 'u8[36864]{0}', space=vmem, size = 0x9000, scoped, tag = 'input window, operand 3, single buffered']
    #allocation8 [shape = 'u8[8192]{0}', space=vmem, size = 0x2000, scoped, tag = 'output window, operand 0, single buffered']
    #allocation9 [shape = 'u8[1024]{0}', space=vmem, size = 0x400, scoped, tag = 'output window, operand 1, single buffered']
    #allocation10 [shape = 's32[1]{0}', space=sflag, size = 0x4, scoped, tag = 'scoped memory for tpu_custom_call.1']
    %11 = vsyncpa [#allocation3], 0
    %12 = vsyncpa [#allocation6], 0
    %13 = vsyncpa [#allocation4], 0
    %14 = vsyncpa [#allocation10], 0
    // Predicated region
    $region2: #{tpu_custom_call.1} parent=1 // pred_check
      _
    $region3: #{tpu_custom_call.1} parent=1 // pred_check_branch
      %16 = sbr.rel (0) target = $region5
    $region4: #{tpu_custom_call.1} parent=1 // pred_region
      %18 = vsyncadd [#allocation3], 0
      %s19 = sshll.u32 %s0, 4
      %s20 = int_to_ptr.hbm [resolvable:$true] %s19
      %s21 = sshll.u32 [#allocation2], 4
      %s22 = int_to_ptr.vmem [resolvable:$true] %s21
      %27 = dma.hbm_to_vmem [thread:$0]  %s20, 256, %s22, [#allocation3], 64, 64, 4
    $region5: #{tpu_custom_call.1} parent=1 // pred_fallthru
      _
    // Predicated region
    $region6: #{tpu_custom_call.1} parent=1 // pred_check
      _
    $region7: #{tpu_custom_call.1} parent=1 // pred_check_branch
      %29 = sbr.rel (0) target = $region9
    $region8: #{tpu_custom_call.1} parent=1 // pred_region
      %31 = vsyncadd [#allocation6], 0
      %s33 = sshll.u32 %s1, 4
      %s34 = int_to_ptr.hbm [resolvable:$true] %s33
      %s35 = sshll.u32 [#allocation5], 4
      %s36 = int_to_ptr.vmem [resolvable:$true] %s35
      %38 = dma.hbm_to_vmem [thread:$0]  %s34, 16, %s36, [#allocation6]
    $region9: #{tpu_custom_call.1} parent=1 // pred_fallthru
      _
    // Predicated region
    $region10: #{tpu_custom_call.1} parent=1 // pred_check
      _
    $region11: #{tpu_custom_call.1} parent=1 // pred_check_branch
      %40 = sbr.rel (0) target = $region13
    $region12: #{tpu_custom_call.1} parent=1 // pred_region
      _
    $region13: #{tpu_custom_call.1} parent=1 // pred_fallthru
      _
    // Predicated region
    $region14: #{tpu_custom_call.1} parent=1 // pred_check
      _
    $region15: #{tpu_custom_call.1} parent=1 // pred_check_branch
      %42 = sbr.rel (0) target = $region17
    $region16: #{tpu_custom_call.1} parent=1 // pred_region
      %44 = vsyncadd [#allocation6], 0
      %s45 = sshll.u32 %s3, 4
      %s46 = int_to_ptr.hbm [resolvable:$true] %s45
      %s47 = sshll.u32 [#allocation7], 4
      %s48 = int_to_ptr.vmem [resolvable:$true] %s47
      %53 = dma.hbm_to_vmem [thread:$0]  %s46, 1152, %s48, [#allocation6], 64, 64, 4
    $region17: #{tpu_custom_call.1} parent=1 // pred_fallthru
      _
    // Predicated region
    $region18: #{tpu_custom_call.1} parent=1 // pred_check
      _
    $region19: #{tpu_custom_call.1} parent=1 // pred_check_branch
      %55 = sbr.rel (0) target = $region21
    $region20: #{tpu_custom_call.1} parent=1 // pred_region
      %57 = dma.done [#allocation3], 256
    $region21: #{tpu_custom_call.1} parent=1 // pred_fallthru
      _
    // Predicated region
    $region22: #{tpu_custom_call.1} parent=1 // pred_check
      _
    $region23: #{tpu_custom_call.1} parent=1 // pred_check_branch
      %59 = sbr.rel (0) target = $region25
    $region24: #{tpu_custom_call.1} parent=1 // pred_region
      %61 = dma.done [#allocation6], 16
    $region25: #{tpu_custom_call.1} parent=1 // pred_fallthru
      _
    // Predicated region
    $region26: #{tpu_custom_call.1} parent=1 // pred_check
      _
    $region27: #{tpu_custom_call.1} parent=1 // pred_check_branch
      %63 = sbr.rel (0) target = $region29
    $region28: #{tpu_custom_call.1} parent=1 // pred_region
      %65 = dma.done [#allocation6], 1152
    $region29: #{tpu_custom_call.1} parent=1 // pred_fallthru
      _
    %v67 = vld [vmem:[#allocation2] sm:$0xf]
    %v68 = vld [vmem:[#allocation2 + $0x4] sm:$0xf]
    %v69 = vld [vmem:[#allocation2 + $0x8] sm:$0xf]
    %v70 = vld [vmem:[#allocation2 + $0xc] sm:$0xf]
    %v71 = vld [vmem:[#allocation5] sm:$0x1]
    %v72 = vld [vmem:[%s2] sm:$0x1]
    %v74 = vperm.slane %v71, 0
    %v76 = vmul.f32 %v67, %v74
    %v77 = vmul.f32 %v68, %v74
    %v78 = vmul.f32 %v69, %v74
    %v79 = vmul.f32 %v70, %v74
    %v81 = vperm.slane %v72, 0
    %v83 = vadd.f32 %v76, %v81
    %v84 = vadd.f32 %v77, %v81
    %v85 = vadd.f32 %v78, %v81
    %v86 = vadd.f32 %v79, %v81
    %v87 = vmax.f32 %v83, 0.0
    %v88 = vmax.f32 %v84, 0.0
    %v89 = vmax.f32 %v85, 0.0
    %v90 = vmax.f32 %v86, 0.0
    %v95 = vrot.slane %v87, 7
    %v96 = vrot.slane %v88, 7
    %v97 = vrot.slane %v89, 7
    %v98 = vrot.slane %v90, 7
    %vm103 = vcmask 1040384
    %v104 = vsel %vm103, 0.0, %v95
    %v105 = vsel %vm103, 0.0, %v96
    %v106 = vsel %vm103, 0.0, %v97
    %v107 = vsel %vm103, 0.0, %v98
    %vm108 = vcmask 1044480
    %v109 = vsel %vm108, %v104, 0.0
    %v110 = vsel %vm108, %v105, 0.0
    %v111 = vsel %vm108, %v106, 0.0
    %v112 = vsel %vm108, %v107, 0.0
    %v113 = vpack.c.bf16 0.0, 0.0
    %v114 = vpack.c.bf16 %v109, %v109
    %v115 = vpack.c.bf16 %v110, %v110
    %v116 = vpack.c.bf16 %v111, %v111
    %v117 = vld [vmem:[#allocation7] sm:$0xf]
    %v118 = vld [vmem:[#allocation7 + $0x4] sm:$0xf]
    %v119 = vpack.c.bf16 %v112, %v112
    %s120 = scalar_lea.vmem [#allocation7], 24
    %v121 = vld [vmem:[%s120] sm:$0xf]
    %v122 = vld [vmem:[%s120 + $0x4] sm:$0xf]
    %124 = vst [vmem:[#allocation1] ss:$4 sm:$0xff] %v114
    %s126 = scalar_lea.vmem [#allocation1], 1
    %127 = vst [vmem:[%s126] ss:$4 sm:$0xff] %v115
    %s129 = scalar_lea.vmem [#allocation1], 2
    %130 = vst [vmem:[%s129] ss:$4 sm:$0xff] %v116
    %s132 = scalar_lea.vmem [#allocation1], 3
    %133 = vst [vmem:[%s132] ss:$4 sm:$0xff] %v119
    %v134 = vld.sshfl [vmem:[#allocation1] sm:$0xff pattern:$0x73625140]
    %v137 = vunpack.c.l.b16 %v121
    %v138 = vunpack.c.l.b16 %v122
    %v139 = vpack.c.b16 %v138, %v137
    %vm141 = vcmask 130048
    %v142 = vsel %vm141, %v134, 0
    %144 = vmatpush.bf16.msra.mxu0 0
    %145 = vmatpush.bf16.msra.mxu0 0
    %146 = vmatpush.bf16.msra.mxu0 0
    %147 = vmatpush.bf16.msra.mxu0 0
    %148 = vmatpush.bf16.msra.mxu0 0
    %149 = vmatpush.bf16.msra.mxu0 0
    %150 = vmatpush.bf16.msra.mxu0 0
    %151 = vmatpush.bf16.msra.mxu0 %v139
    %152 = vmatmul.bf16.gmra.mxu0 %v142
    %v153 = vpop.f32.mrf.mxu0
    %v154 = vadd.f32 0.0, %v153
    %v155 = vpop.f32.mrf.mxu0
    %v156 = vadd.f32 0.0, %v155
    %157 = vdwg.mxu0
    %159 = vst [vmem:[#allocation1] ss:$4 sm:$0xff] %v113
    %s160 = scalar_lea.vmem [#allocation1], 1
    %161 = vst [vmem:[%s160] ss:$4 sm:$0xff] %v114
    %s162 = scalar_lea.vmem [#allocation1], 2
    %163 = vst [vmem:[%s162] ss:$4 sm:$0xff] %v115
    %s164 = scalar_lea.vmem [#allocation1], 3
    %165 = vst [vmem:[%s164] ss:$4 sm:$0xff] %v116
    %v166 = vld.sshfl [vmem:[#allocation1] sm:$0xff pattern:$0x73625140]
    %v169 = vunpack.c.l.b16 %v117
    %v170 = vunpack.c.l.b16 %v118
    %v171 = vpack.c.b16 %v170, %v169
    %v173 = vsel %vm141, %v166, 0
    %175 = vmatpush.bf16.msra.mxu0 0
    %176 = vmatpush.bf16.msra.mxu0 0
    %177 = vmatpush.bf16.msra.mxu0 0
    %178 = vmatpush.bf16.msra.mxu0 0
    %179 = vmatpush.bf16.msra.mxu0 0
    %180 = vmatpush.bf16.msra.mxu0 0
    %181 = vmatpush.bf16.msra.mxu0 0
    %182 = vmatpush.bf16.msra.mxu0 %v171
    %183 = vmatmul.bf16.gmra.mxu0 %v173
    %v184 = vpop.f32.mrf.mxu0
    %v185 = vadd.f32 %v154, %v184
    %v186 = vpop.f32.mrf.mxu0
    %v187 = vadd.f32 %v156, %v186
    %188 = vdwg.mxu0
    %s189 = scalar_lea.vmem [#allocation7], 48
    %v190 = vld [vmem:[%s189] sm:$0xf]
    %v191 = vld [vmem:[%s189 + $0x4] sm:$0xf]
    %192 = vst [vmem:[#allocation1] ss:$4 sm:$0xff] %v115
    %s193 = scalar_lea.vmem [#allocation1], 1
    %194 = vst [vmem:[%s193] ss:$4 sm:$0xff] %v116
    %s195 = scalar_lea.vmem [#allocation1], 2
    %196 = vst [vmem:[%s195] ss:$4 sm:$0xff] %v119
    %s197 = scalar_lea.vmem [#allocation1], 3
    %198 = vst [vmem:[%s197] ss:$4 sm:$0xff] %v113
    %v199 = vld.sshfl [vmem:[#allocation1] sm:$0xff pattern:$0x73625140]
    %v202 = vunpack.c.l.b16 %v190
    %v203 = vunpack.c.l.b16 %v191
    %v204 = vpack.c.b16 %v203, %v202
    %v206 = vsel %vm141, %v199, 0
    %208 = vmatpush.bf16.msra.mxu0 0
    %209 = vmatpush.bf16.msra.mxu0 0
    %210 = vmatpush.bf16.msra.mxu0 0
    %211 = vmatpush.bf16.msra.mxu0 0
    %212 = vmatpush.bf16.msra.mxu0 0
    %213 = vmatpush.bf16.msra.mxu0 0
    %214 = vmatpush.bf16.msra.mxu0 0
    %215 = vmatpush.bf16.msra.mxu0 %v204
    %216 = vmatmul.bf16.gmra.mxu0 %v206
    %v217 = vpop.f32.mrf.mxu0
    %v218 = vadd.f32 0.0, %v217
    %v219 = vpop.f32.mrf.mxu0
    %v220 = vadd.f32 0.0, %v219
    %221 = vdwg.mxu0
    %v222 = vadd.f32 %v185, %v218
    %v223 = vadd.f32 %v187, %v220
    %v228 = vrot.slane %v113, 2
    %v229 = vrot.slane %v114, 2
    %v230 = vrot.slane %v115, 2
    %v231 = vrot.slane %v116, 2
    %vm232 = vcmask 1041408
    %v234 = vsel %vm232, %v113, %v228
    %vm235 = vcmask 1043458
    %v236 = vsel %vm235, %v113, %v228
    %v238 = vrot.slane %v236, 2
    %v240 = vsel %vm232, %v114, %v229
    %v241 = vsel %vm235, %v114, %v229
    %v243 = vrot.slane %v241, 2
    %v245 = vsel %vm232, %v115, %v230
    %v246 = vsel %vm235, %v115, %v230
    %v248 = vrot.slane %v246, 2
    %v250 = vsel %vm232, %v116, %v231
    %v251 = vsel %vm235, %v116, %v231
    %v253 = vrot.slane %v251, 2
    %vm254 = vsmask.f32 1280
    %vm255 = vsmask.f32 3336
    %vm256 = vmor %vm254, %vm255
    %vm257 = vsmask.f32 5392
    %vm258 = vmor %vm256, %vm257
    %vm259 = vsmask.f32 7448
    %vm260 = vmor %vm258, %vm259
    %v261 = vshrl.u32 %v234, 16
    %v263 = vrot.slane %v261, 6
    %v264 = vshll.u32 %v234, 16
    %v266 = vrot.slane %v264, 7
    %v267 = vor.u32 %v263, %v266
    %v268 = vrot.slane %v267, 2
    %v270 = vshll.u32 %v238, 16
    %v272 = vrot.slane %v270, 7
    %v273 = vsel %vm260, %v268, %v272
    %v274 = vshrl.u32 %v240, 16
    %v276 = vrot.slane %v274, 6
    %v277 = vshll.u32 %v240, 16
    %v279 = vrot.slane %v277, 7
    %v280 = vor.u32 %v276, %v279
    %v281 = vrot.slane %v280, 2
    %v283 = vshll.u32 %v243, 16
    %v285 = vrot.slane %v283, 7
    %v286 = vsel %vm260, %v281, %v285
    %v287 = vshrl.u32 %v245, 16
    %v289 = vrot.slane %v287, 6
    %v290 = vshll.u32 %v245, 16
    %v292 = vrot.slane %v290, 7
    %v293 = vor.u32 %v289, %v292
    %v294 = vrot.slane %v293, 2
    %v296 = vshll.u32 %v248, 16
    %v298 = vrot.slane %v296, 7
    %v299 = vsel %vm260, %v294, %v298
    %v300 = vshrl.u32 %v250, 16
    %v302 = vrot.slane %v300, 6
    %v303 = vshll.u32 %v250, 16
    %v305 = vrot.slane %v303, 7
    %v306 = vor.u32 %v302, %v305
    %v307 = vrot.slane %v306, 2
    %v309 = vshll.u32 %v253, 16
    %v311 = vrot.slane %v309, 7
    %v312 = vsel %vm260, %v307, %v311
    %s313 = scalar_lea.vmem [#allocation7], 8
    %v314 = vld [vmem:[%s313] sm:$0xf]
    %v315 = vld [vmem:[%s313 + $0x4] sm:$0xf]
    %317 = vst [vmem:[#allocation1] ss:$4 sm:$0xff] %v273
    %s319 = scalar_lea.vmem [#allocation1], 1
    %320 = vst [vmem:[%s319] ss:$4 sm:$0xff] %v286
    %s322 = scalar_lea.vmem [#allocation1], 2
    %323 = vst [vmem:[%s322] ss:$4 sm:$0xff] %v299
    %s325 = scalar_lea.vmem [#allocation1], 3
    %326 = vst [vmem:[%s325] ss:$4 sm:$0xff] %v312
    %v327 = vld.sshfl [vmem:[#allocation1] sm:$0xff pattern:$0x73625140]
    %v330 = vunpack.c.l.b16 %v314
    %v331 = vunpack.c.l.b16 %v315
    %v332 = vpack.c.b16 %v331, %v330
    %v334 = vsel %vm141, %v327, 0
    %336 = vmatpush.bf16.msra.mxu0 0
    %337 = vmatpush.bf16.msra.mxu0 0
    %338 = vmatpush.bf16.msra.mxu0 0
    %339 = vmatpush.bf16.msra.mxu0 0
    %340 = vmatpush.bf16.msra.mxu0 0
    %341 = vmatpush.bf16.msra.mxu0 0
    %342 = vmatpush.bf16.msra.mxu0 0
    %343 = vmatpush.bf16.msra.mxu0 %v332
    %344 = vmatmul.bf16.gmra.mxu0 %v334
    %v345 = vpop.f32.mrf.mxu0
    %v346 = vadd.f32 0.0, %v345
    %v347 = vpop.f32.mrf.mxu0
    %v348 = vadd.f32 0.0, %v347
    %349 = vdwg.mxu0
    %v350 = vadd.f32 %v222, %v346
    %v351 = vadd.f32 %v223, %v348
    %v353 = vrot.slane %v119, 2
    %v355 = vsel %vm232, %v119, %v353
    %v356 = vsel %vm235, %v119, %v353
    %v358 = vrot.slane %v356, 2
    %v359 = vshrl.u32 %v355, 16
    %v361 = vrot.slane %v359, 6
    %v362 = vshll.u32 %v355, 16
    %v364 = vrot.slane %v362, 7
    %v365 = vor.u32 %v361, %v364
    %v366 = vrot.slane %v365, 2
    %v368 = vshll.u32 %v358, 16
    %v370 = vrot.slane %v368, 7
    %v371 = vsel %vm260, %v366, %v370
    %s372 = scalar_lea.vmem [#allocation7], 32
    %v373 = vld [vmem:[%s372] sm:$0xf]
    %v374 = vld [vmem:[%s372 + $0x4] sm:$0xf]
    %375 = vst [vmem:[#allocation1] ss:$4 sm:$0xff] %v286
    %s376 = scalar_lea.vmem [#allocation1], 1
    %377 = vst [vmem:[%s376] ss:$4 sm:$0xff] %v299
    %s378 = scalar_lea.vmem [#allocation1], 2
    %379 = vst [vmem:[%s378] ss:$4 sm:$0xff] %v312
    %s381 = scalar_lea.vmem [#allocation1], 3
    %382 = vst [vmem:[%s381] ss:$4 sm:$0xff] %v371
    %v383 = vld.sshfl [vmem:[#allocation1] sm:$0xff pattern:$0x73625140]
    %v386 = vunpack.c.l.b16 %v373
    %v387 = vunpack.c.l.b16 %v374
    %v388 = vpack.c.b16 %v387, %v386
    %v390 = vsel %vm141, %v383, 0
    %392 = vmatpush.bf16.msra.mxu0 0
    %393 = vmatpush.bf16.msra.mxu0 0
    %394 = vmatpush.bf16.msra.mxu0 0
    %395 = vmatpush.bf16.msra.mxu0 0
    %396 = vmatpush.bf16.msra.mxu0 0
    %397 = vmatpush.bf16.msra.mxu0 0
    %398 = vmatpush.bf16.msra.mxu0 0
    %399 = vmatpush.bf16.msra.mxu0 %v388
    %400 = vmatmul.bf16.gmra.mxu0 %v390
    %v401 = vpop.f32.mrf.mxu0
    %v402 = vadd.f32 0.0, %v401
    %v403 = vpop.f32.mrf.mxu0
    %v404 = vadd.f32 0.0, %v403
    %405 = vdwg.mxu0
    %v406 = vadd.f32 %v350, %v402
    %v407 = vadd.f32 %v351, %v404
    %s408 = scalar_lea.vmem [#allocation7], 56
    %v409 = vld [vmem:[%s408] sm:$0xf]
    %v410 = vld [vmem:[%s408 + $0x4] sm:$0xf]
    %411 = vst [vmem:[#allocation1] ss:$4 sm:$0xff] %v299
    %s412 = scalar_lea.vmem [#allocation1], 1
    %413 = vst [vmem:[%s412] ss:$4 sm:$0xff] %v312
    %s414 = scalar_lea.vmem [#allocation1], 2
    %415 = vst [vmem:[%s414] ss:$4 sm:$0xff] %v371
    %s416 = scalar_lea.vmem [#allocation1], 3
    %417 = vst [vmem:[%s416] ss:$4 sm:$0xff] %v273
    %v418 = vld.sshfl [vmem:[#allocation1] sm:$0xff pattern:$0x73625140]
    %v421 = vunpack.c.l.b16 %v409
    %v422 = vunpack.c.l.b16 %v410
    %v423 = vpack.c.b16 %v422, %v421
    %v425 = vsel %vm141, %v418, 0
    %427 = vmatpush.bf16.msra.mxu0 0
    %428 = vmatpush.bf16.msra.mxu0 0
    %429 = vmatpush.bf16.msra.mxu0 0
    %430 = vmatpush.bf16.msra.mxu0 0
    %431 = vmatpush.bf16.msra.mxu0 0
    %432 = vmatpush.bf16.msra.mxu0 0
    %433 = vmatpush.bf16.msra.mxu0 0
    %434 = vmatpush.bf16.msra.mxu0 %v423
    %435 = vmatmul.bf16.gmra.mxu0 %v425
    %v436 = vpop.f32.mrf.mxu0
    %v437 = vadd.f32 0.0, %v436
    %v438 = vpop.f32.mrf.mxu0
    %v439 = vadd.f32 0.0, %v438
    %440 = vdwg.mxu0
    %v441 = vadd.f32 %v406, %v437
    %v442 = vadd.f32 %v407, %v439
    %vm447 = vcmask 1040384
    %vm448 = vcmask 1042434
    %vm449 = vmor %vm447, %vm448
    %vm450 = vcmask 1044484
    %vm451 = vmor %vm449, %vm450
    %vm452 = vcmask 1046534
    %vm453 = vmor %vm451, %vm452
    %v454 = vrot.slane %v234, 7
    %v455 = vrot.slane %v454, 2
    %v456 = vrot.slane %v238, 7
    %v457 = vsel %vm453, %v455, %v456
    %v458 = vrot.slane %v240, 7
    %v459 = vrot.slane %v458, 2
    %v460 = vrot.slane %v243, 7
    %v461 = vsel %vm453, %v459, %v460
    %v462 = vrot.slane %v245, 7
    %v463 = vrot.slane %v462, 2
    %v464 = vrot.slane %v248, 7
    %v465 = vsel %vm453, %v463, %v464
    %v466 = vrot.slane %v250, 7
    %v467 = vrot.slane %v466, 2
    %v468 = vrot.slane %v253, 7
    %v469 = vsel %vm453, %v467, %v468
    %s470 = scalar_lea.vmem [#allocation7], 16
    %v471 = vld [vmem:[%s470] sm:$0xf]
    %v472 = vld [vmem:[%s470 + $0x4] sm:$0xf]
    %474 = vst [vmem:[#allocation1] ss:$4 sm:$0xff] %v457
    %s476 = scalar_lea.vmem [#allocation1], 1
    %477 = vst [vmem:[%s476] ss:$4 sm:$0xff] %v461
    %s479 = scalar_lea.vmem [#allocation1], 2
    %480 = vst [vmem:[%s479] ss:$4 sm:$0xff] %v465
    %s482 = scalar_lea.vmem [#allocation1], 3
    %483 = vst [vmem:[%s482] ss:$4 sm:$0xff] %v469
    %v484 = vld.sshfl [vmem:[#allocation1] sm:$0xff pattern:$0x73625140]
    %v487 = vunpack.c.l.b16 %v471
    %v488 = vunpack.c.l.b16 %v472
    %v489 = vpack.c.b16 %v488, %v487
    %v491 = vsel %vm141, %v484, 0
    %493 = vmatpush.bf16.msra.mxu0 0
    %494 = vmatpush.bf16.msra.mxu0 0
    %495 = vmatpush.bf16.msra.mxu0 0
    %496 = vmatpush.bf16.msra.mxu0 0
    %497 = vmatpush.bf16.msra.mxu0 0
    %498 = vmatpush.bf16.msra.mxu0 0
    %499 = vmatpush.bf16.msra.mxu0 0
    %500 = vmatpush.bf16.msra.mxu0 %v489
    %501 = vmatmul.bf16.gmra.mxu0 %v491
    %v502 = vpop.f32.mrf.mxu0
    %v503 = vadd.f32 0.0, %v502
    %v504 = vpop.f32.mrf.mxu0
    %v505 = vadd.f32 0.0, %v504
    %506 = vdwg.mxu0
    %v507 = vadd.f32 %v441, %v503
    %v508 = vadd.f32 %v442, %v505
    %v510 = vrot.slane %v355, 7
    %v511 = vrot.slane %v510, 2
    %v512 = vrot.slane %v358, 7
    %v513 = vsel %vm453, %v511, %v512
    %s514 = scalar_lea.vmem [#allocation7], 40
    %v515 = vld [vmem:[%s514] sm:$0xf]
    %v516 = vld [vmem:[%s514 + $0x4] sm:$0xf]
    %517 = vst [vmem:[#allocation1] ss:$4 sm:$0xff] %v461
    %s518 = scalar_lea.vmem [#allocation1], 1
    %519 = vst [vmem:[%s518] ss:$4 sm:$0xff] %v465
    %s520 = scalar_lea.vmem [#allocation1], 2
    %521 = vst [vmem:[%s520] ss:$4 sm:$0xff] %v469
    %s523 = scalar_lea.vmem [#allocation1], 3
    %524 = vst [vmem:[%s523] ss:$4 sm:$0xff] %v513
    %v525 = vld.sshfl [vmem:[#allocation1] sm:$0xff pattern:$0x73625140]
    %v528 = vunpack.c.l.b16 %v515
    %v529 = vunpack.c.l.b16 %v516
    %v530 = vpack.c.b16 %v529, %v528
    %v532 = vsel %vm141, %v525, 0
    %534 = vmatpush.bf16.msra.mxu0 0
    %535 = vmatpush.bf16.msra.mxu0 0
    %536 = vmatpush.bf16.msra.mxu0 0
    %537 = vmatpush.bf16.msra.mxu0 0
    %538 = vmatpush.bf16.msra.mxu0 0
    %539 = vmatpush.bf16.msra.mxu0 0
    %540 = vmatpush.bf16.msra.mxu0 0
    %541 = vmatpush.bf16.msra.mxu0 %v530
    %542 = vmatmul.bf16.gmra.mxu0 %v532
    %v543 = vpop.f32.mrf.mxu0
    %v544 = vadd.f32 0.0, %v543
    %v545 = vpop.f32.mrf.mxu0
    %v546 = vadd.f32 0.0, %v545
    %547 = vdwg.mxu0
    %v548 = vadd.f32 %v507, %v544
    %v549 = vadd.f32 %v508, %v546
    %s550 = scalar_lea.vmem [#allocation7], 64
    %v551 = vld [vmem:[%s550] sm:$0xf]
    %v552 = vld [vmem:[%s550 + $0x4] sm:$0xf]
    %553 = vst [vmem:[#allocation1] ss:$4 sm:$0xff] %v465
    %s554 = scalar_lea.vmem [#allocation1], 1
    %555 = vst [vmem:[%s554] ss:$4 sm:$0xff] %v469
    %s556 = scalar_lea.vmem [#allocation1], 2
    %557 = vst [vmem:[%s556] ss:$4 sm:$0xff] %v513
    %s558 = scalar_lea.vmem [#allocation1], 3
    %559 = vst [vmem:[%s558] ss:$4 sm:$0xff] %v457
    %v560 = vld.sshfl [vmem:[#allocation1] sm:$0xff pattern:$0x73625140]
    %v563 = vunpack.c.l.b16 %v551
    %v564 = vunpack.c.l.b16 %v552
    %v565 = vpack.c.b16 %v564, %v563
    %v567 = vsel %vm141, %v560, 0
    %569 = vmatpush.bf16.msra.mxu0 0
    %570 = vmatpush.bf16.msra.mxu0 0
    %571 = vmatpush.bf16.msra.mxu0 0
    %572 = vmatpush.bf16.msra.mxu0 0
    %573 = vmatpush.bf16.msra.mxu0 0
    %574 = vmatpush.bf16.msra.mxu0 0
    %575 = vmatpush.bf16.msra.mxu0 0
    %576 = vmatpush.bf16.msra.mxu0 %v565
    %577 = vmatmul.bf16.gmra.mxu0 %v567
    %v578 = vpop.f32.mrf.mxu0
    %v579 = vadd.f32 0.0, %v578
    %v580 = vpop.f32.mrf.mxu0
    %v581 = vadd.f32 0.0, %v580
    %582 = vdwg.mxu0
    %v583 = vadd.f32 %v548, %v579
    %v584 = vadd.f32 %v549, %v581
    %v587 = vrot.slane %v583, 4
    %v588 = vrot.slane %v584, 4
    %vm591 = vcmask 125952
    %592 = vst.msk [vmem:[#allocation8] sm:$0xf] %vm591, %v583
    %593 = vst.msk [vmem:[#allocation8 + $0x4] sm:$0xf] %vm591, %v587
    %594 = vst.msk [vmem:[#allocation8 + $0x8] sm:$0xf] %vm591, %v584
    %595 = vst.msk [vmem:[#allocation8 + $0xc] sm:$0xf] %vm591, %v588
    %v596 = vsel %vm141, %v583, 0.0
    %v597 = vsel %vm141, %v584, 0.0
    %v598 = vadd.f32 %v596, %v597
    %v599 = vrot.slane %v598, 4
    %v600 = vadd.f32 %v598, %v599
    %v601 = vrot.slane %v600, 2
    %v602 = vadd.f32 %v600, %v601
    %v603 = vrot.slane %v602, 1
    %v604 = vadd.f32 %v602, %v603
    %v605 = vmul.f32 %v583, %v583
    %v606 = vmul.f32 %v584, %v584
    %v607 = vsel %vm141, %v605, 0.0
    %v608 = vsel %vm141, %v606, 0.0
    %v609 = vadd.f32 %v607, %v608
    %v610 = vrot.slane %v609, 4
    %v611 = vadd.f32 %v609, %v610
    %v612 = vrot.slane %v611, 2
    %v613 = vadd.f32 %v611, %v612
    %v614 = vrot.slane %v613, 1
    %v615 = vadd.f32 %v613, %v614
    %v616 = vsel %vm103, %v604, %v615
    %vm617 = vcmask 123904
    %618 = vst.msk [vmem:[#allocation9] sm:$0x3] %vm617, %v616
    // Predicated region
    $region30: #{tpu_custom_call.1} parent=1 // pred_check
      _
    $region31: #{tpu_custom_call.1} parent=1 // pred_check_branch
      %620 = sbr.rel (0) target = $region33
    $region32: #{tpu_custom_call.1} parent=1 // pred_region
      %622 = vsyncadd [#allocation4], 0
      %s623 = sshll.u32 [#allocation8], 4
      %s624 = int_to_ptr.vmem [resolvable:$true] %s623
      %s625 = sshll.u32 %s4, 4
      %s626 = int_to_ptr.hbm [resolvable:$true] %s625
      %631 = dma.vmem_to_hbm [thread:$0]  %s624, 256, %s626, [#allocation4], 64, 64, 4
    $region33: #{tpu_custom_call.1} parent=1 // pred_fallthru
      _
    // Predicated region
    $region34: #{tpu_custom_call.1} parent=1 // pred_check
      _
    $region35: #{tpu_custom_call.1} parent=1 // pred_check_branch
      %633 = sbr.rel (0) target = $region37
    $region36: #{tpu_custom_call.1} parent=1 // pred_region
      %635 = vsyncadd [#allocation10], 0
      %s637 = sshll.u32 [#allocation9], 4
      %s638 = int_to_ptr.vmem [resolvable:$true] %s637
      %s639 = sshll.u32 %s5, 4
      %s640 = int_to_ptr.hbm [resolvable:$true] %s639
      %642 = dma.vmem_to_hbm [thread:$0]  %s638, 32, %s640, [#allocation10]
    $region37: #{tpu_custom_call.1} parent=1 // pred_fallthru
      _
    // Predicated region
    $region38: #{tpu_custom_call.1} parent=1 // pred_check
      _
    $region39: #{tpu_custom_call.1} parent=1 // pred_check_branch
      %644 = sbr.rel (0) target = $region41
    $region40: #{tpu_custom_call.1} parent=1 // pred_region
      %646 = dma.done [#allocation4], 256
    $region41: #{tpu_custom_call.1} parent=1 // pred_fallthru
      _
    // Predicated region
    $region42: #{tpu_custom_call.1} parent=1 // pred_check
      _
    $region43: #{tpu_custom_call.1} parent=1 // pred_check_branch
      %648 = sbr.rel (0) target = $region45
    $region44: #{tpu_custom_call.1} parent=1 // pred_region
      %650 = dma.done [#allocation10], 32
    $region45: #{tpu_custom_call.1} parent=1 // pred_fallthru
      _
    %651 = vsyncpa [#allocation3], 1
    %652 = vsyncpa [#allocation6], 1
    %653 = vsyncpa [#allocation4], 1
    %654 = vsyncpa [#allocation10], 1

// kernel: tpu_custom_call.1
$region0: #{tpu_custom_call.1}
  #allocation0 [shape = 'u32[]', space=smem, size = 0x4, offset = 0x4, fixed_abs, tag = 'smem constant byte address 0x4 - core index']
  #allocation1 [shape = 'u32[72,128]{1,0:T(1,128)}', space=vmem, size = 0x9000, scoped, tag = 'internal scratch']
  #allocation7 [shape = 's32[]', space=sflag, size = 0x4, offset = 0, fixed_abs, tag = 'sflag constant byte address 0x0 - dummy sync flag']
  %s0 = inlined_call_operand.vmem [shape: bf16[2,20,18,8], index: 0, kind: input, shape index: {}]
  %s1 = inlined_call_operand.vmem [shape: bf16[3,3,8,16], index: 1, kind: input, shape index: {}]
  %s2 = inlined_call_operand.hbm [shape: f32[2,16,16,16], index: 2, kind: output, shape index: {0}]
  %s3 = inlined_call_operand.hbm [shape: f32[2,2,16], index: 3, kind: output, shape index: {1}]
  %4 = xla_tuple %s2, %s3
  %s5 = sld [smem:[#allocation0]]
  $region102: #{tpu_custom_call.1} parent=0
    _
  %s7 = ssub.s32 1, %s5
  %s8 = scalar_select 0, %s7, %s5
  $region1: #{tpu_custom_call.1} parent=0
    #allocation2 [shape = 'u8[245760]{0}', space=vmem, size = 0x3c000, scoped, tag = 'input window, operand 0']
    #allocation3 [shape = 'u8[262144]{0}', space=vmem, size = 0x40000, scoped, tag = 'output window, operand 0']
    #allocation4 [shape = 's32[2]{0}', space=sflag, size = 0x8, scoped, tag = 'scoped memory for tpu_custom_call.1']
    #allocation5 [shape = 'u8[2048]{0}', space=vmem, size = 0x800, scoped, tag = 'output window, operand 1']
    #allocation6 [shape = 's32[2]{0}', space=sflag, size = 0x8, scoped, tag = 'scoped memory for tpu_custom_call.1']
    %9 = vsyncpa [#allocation4], 0
    %s10 = scalar_lea.sflag [#allocation4], 1
    %11 = vsyncpa %s10, 0
    %12 = vsyncpa [#allocation6], 0
    %s13 = scalar_lea.sflag [#allocation6], 1
    %14 = vsyncpa %s13, 0
    loop: start=0, step=1, limit=4
    $region2: #{tpu_custom_call.1} parent=1 // loop_pre_header
      _
    $region3: #{tpu_custom_call.1} parent=1 // loop_header
      %s16 = sphi 0, %s20
      %p17 = scmp.ge.s32.totalorder %s16, 4
      %s23 = sphi 0, %s42
      %s24 = sphi 0, %s38
      %s25 = sphi 0, %s34
      %s26 = sphi 0, %s23
      %s27 = sphi 0, %s24
      %s28 = sphi 0, %s25
      %s29 = sphi 0, %s26
      %s30 = sphi 0, %s27
      %s31 = sphi 0, %s28
      %s47 = sphi 0, %s49
      %s50 = sphi 0, %s47
      %s51 = sphi 0, %s50
      %s67 = sphi 0, %s51
      %s75 = sphi 0, %s77
      %s78 = sphi 0, %s75
      %s79 = sphi 0, %s78
      %s95 = sphi 0, %s79
      %s103 = sphi 0, %s105
      %s106 = sphi 0, %s103
      %s107 = sphi 0, %s106
      %s123 = sphi 0, %s107
      %s131 = sphi 0, %s133
      %s134 = sphi 0, %s131
      %s135 = sphi 0, %s134
      %s151 = sphi 0, %s135
    $region4: #{tpu_custom_call.1} parent=1 // loop_header_branch
      %19 = sbr.rel (%p17) target = $region8
    $region5: #{tpu_custom_call.1} parent=1 // loop_body
      %s21 = ssub.s32 %s16, 1
      %s22 = ssub.s32 %s16, 2
      %s32 = sadd.s32 1, %s25
      %p33 = scmp.ge.s32.totalorder %s32, 1
      %s34 = scalar_select %p33, 0, %s32
      %s35 = sadd.s32 1, %s24
      %s36 = scalar_select %p33, %s35, %s24
      %p37 = scmp.ge.s32.totalorder %s36, 1
      %s38 = scalar_select %p37, 0, %s36
      %s39 = sadd.s32 1, %s23
      %s40 = scalar_select %p37, %s39, %s23
      %p41 = scmp.ge.s32.totalorder %s40, 2
      %s42 = scalar_select %p41, 0, %s40
      %s43 = ssub.s32 %s23, %s42
      %s44 = ssub.s32 %s25, %s34
      %s45 = sor.u32 %s43, %s44
      %p46 = scmp.eq.s32.totalorder %s45, 0
      %s48 = sadd.s32 %s47, 1
      %s49 = scalar_select %p46, %s47, %s48
      %p52 = pneg %p46
      %p53 = scmp.eq.s32.totalorder %s16, 1
      %p54 = por %p52, %p53
      %p55 = scmp.ne.s32.totalorder %s47, %s50
      %p56 = scmp.eq.s32.totalorder %s16, 0
      %p57 = por %p55, %p56
      %p58 = scmp.ne.s32.totalorder %s47, %s50
      %p59 = scmp.eq.s32.totalorder %s21, 1
      %p60 = por %p58, %p59
      %p61 = scmp.ne.s32.totalorder %s50, %s51
      %p62 = scmp.eq.s32.totalorder %s21, 0
      %p63 = por %p61, %p62
      %p64 = scmp.ne.s32.totalorder %s50, %s51
      %p65 = scmp.eq.s32.totalorder %s22, 1
      %p66 = por %p64, %p65
      %p68 = scmp.ne.s32.totalorder %s51, %s67
      %p69 = scmp.eq.s32.totalorder %s22, 0
      %p70 = por %p68, %p69
      %s71 = ssub.s32 %s25, %s34
      %s72 = ssub.s32 %s24, %s38
      %s73 = sor.u32 %s71, %s72
      %p74 = scmp.eq.s32.totalorder %s73, 0
      %s76 = sadd.s32 %s75, 1
      %s77 = scalar_select %p74, %s75, %s76
      %p80 = pneg %p74
      %p81 = scmp.eq.s32.totalorder %s16, 1
      %p82 = por %p80, %p81
      %p83 = scmp.ne.s32.totalorder %s75, %s78
      %p84 = scmp.eq.s32.totalorder %s16, 0
      %p85 = por %p83, %p84
      %p86 = scmp.ne.s32.totalorder %s75, %s78
      %p87 = scmp.eq.s32.totalorder %s21, 1
      %p88 = por %p86, %p87
      %p89 = scmp.ne.s32.totalorder %s78, %s79
      %p90 = scmp.eq.s32.totalorder %s21, 0
      %p91 = por %p89, %p90
      %p92 = scmp.ne.s32.totalorder %s78, %s79
      %p93 = scmp.eq.s32.totalorder %s22, 1
      %p94 = por %p92, %p93
      %p96 = scmp.ne.s32.totalorder %s79, %s95
      %p97 = scmp.eq.s32.totalorder %s22, 0
      %p98 = por %p96, %p97
      %s99 = ssub.s32 %s23, %s42
      %s100 = ssub.s32 %s24, %s38
      %s101 = sor.u32 %s99, %s100
      %p102 = scmp.eq.s32.totalorder %s101, 0
      %s104 = sadd.s32 %s103, 1
      %s105 = scalar_select %p102, %s103, %s104
      %p108 = pneg %p102
      %p109 = scmp.eq.s32.totalorder %s16, 1
      %p110 = por %p108, %p109
      %p111 = scmp.ne.s32.totalorder %s103, %s106
      %p112 = scmp.eq.s32.totalorder %s16, 0
      %p113 = por %p111, %p112
      %p114 = scmp.ne.s32.totalorder %s103, %s106
      %p115 = scmp.eq.s32.totalorder %s21, 1
      %p116 = por %p114, %p115
      %p117 = scmp.ne.s32.totalorder %s106, %s107
      %p118 = scmp.eq.s32.totalorder %s21, 0
      %p119 = por %p117, %p118
      %p120 = scmp.ne.s32.totalorder %s106, %s107
      %p121 = scmp.eq.s32.totalorder %s22, 1
      %p122 = por %p120, %p121
      %p124 = scmp.ne.s32.totalorder %s107, %s123
      %p125 = scmp.eq.s32.totalorder %s22, 0
      %p126 = por %p124, %p125
      %s127 = ssub.s32 %s23, %s42
      %s128 = ssub.s32 %s24, %s38
      %s129 = sor.u32 %s127, %s128
      %p130 = scmp.eq.s32.totalorder %s129, 0
      %s132 = sadd.s32 %s131, 1
      %s133 = scalar_select %p130, %s131, %s132
      %p136 = pneg %p130
      %p137 = scmp.eq.s32.totalorder %s16, 1
      %p138 = por %p136, %p137
      %p139 = scmp.ne.s32.totalorder %s131, %s134
      %p140 = scmp.eq.s32.totalorder %s16, 0
      %p141 = por %p139, %p140
      %p142 = scmp.ne.s32.totalorder %s131, %s134
      %p143 = scmp.eq.s32.totalorder %s21, 1
      %p144 = por %p142, %p143
      %p145 = scmp.ne.s32.totalorder %s134, %s135
      %p146 = scmp.eq.s32.totalorder %s21, 0
      %p147 = por %p145, %p146
      %p148 = scmp.ne.s32.totalorder %s134, %s135
      %p149 = scmp.eq.s32.totalorder %s22, 1
      %p150 = por %p148, %p149
      %p152 = scmp.ne.s32.totalorder %s135, %s151
      %p153 = scmp.eq.s32.totalorder %s22, 0
      %p154 = por %p152, %p153
      %p155 = scmp.le.s32.totalorder 1, %s16
      %p156 = scmp.lt.s32.totalorder %s16, 3
      %p157 = pnand %p155, %p156
      %p158 = pneg %p157
      // Predicated region
      $region9: #{tpu_custom_call.1} parent=5 // pred_check
        _
      $region10: #{tpu_custom_call.1} parent=5 // pred_check_branch
        %160 = sbr.rel (%p157) target = $region12
      $region11: #{tpu_custom_call.1} parent=5 // pred_region
        %s161 = ssub.s32 %s16, 1
        // Predicated region
        $region13: #{tpu_custom_call.1} parent=11 // pred_check
          %p162 = pneg %p91
        $region14: #{tpu_custom_call.1} parent=11 // pred_check_branch
          %164 = sbr.rel (%p162) target = $region16
        $region15: #{tpu_custom_call.1} parent=11 // pred_region
          %p165 = scmp.lt.s32.totalorder %s28, 0
          %s166 = scalar_select %p165, %s28, 0
          %p167 = scmp.lt.s32.totalorder %s27, 0
          %s168 = scalar_select %p167, %s27, 0
          %s169 = sadd.s32 %s168, %s166
          %s170 = smul.addr %s169, 4
          %s171 = scalar_lea.vmem %s1, %s170
        $region16: #{tpu_custom_call.1} parent=11 // pred_fallthru
          _
      $region12: #{tpu_custom_call.1} parent=5 // pred_fallthru
        _
      %p172 = scmp.lt.s32.totalorder %s16, 2
      // Predicated region
      $region17: #{tpu_custom_call.1} parent=5 // pred_check
        %p173 = pneg %p172
      $region18: #{tpu_custom_call.1} parent=5 // pred_check_branch
        %175 = sbr.rel (%p173) target = $region20
      $region19: #{tpu_custom_call.1} parent=5 // pred_region
        // Predicated region
        $region21: #{tpu_custom_call.1} parent=19 // pred_check
          %p176 = pneg %p57
        $region22: #{tpu_custom_call.1} parent=19 // pred_check_branch
          %178 = sbr.rel (%p176) target = $region24
        $region23: #{tpu_custom_call.1} parent=19 // pred_region
          %s179 = sand.u32 %s47, 1
          %s180 = sand.u32 %s47, 1
          %s181 = smul.addr %s180, 240
          %s182 = scalar_lea.vmem [#allocation2], %s181
          %s183 = smul.u32 10, %s23
          %s184 = smul.addr %s183, 3
          %s185 = sadd.s32 %s25, %s184
          %s186 = smul.addr %s185, 4
          %s187 = scalar_lea.vmem %s0, %s186
          // Predicated region
          $region25: #{tpu_custom_call.1} parent=23 // pred_check
            _
          $region26: #{tpu_custom_call.1} parent=23 // pred_check_branch
            %189 = sbr.rel (0) target = $region28
          $region27: #{tpu_custom_call.1} parent=23 // pred_region
            // Predicated region
            $region29: #{tpu_custom_call.1} parent=27 // pred_check
              _
            $region30: #{tpu_custom_call.1} parent=27 // pred_check_branch
              %191 = sbr.rel target = $region32
            $region31: #{tpu_custom_call.1} parent=27 // pred_region
              // Predicated region
              $region44: #{tpu_custom_call.1} parent=31 // pred_check
                _
              $region45: #{tpu_custom_call.1} parent=31 // pred_check_branch
                %325 = sbr.rel (0) target = $region47
              $region46: #{tpu_custom_call.1} parent=31 // pred_region
                loop: start=0, step=1, limit=1
                $region48: #{tpu_custom_call.1} parent=46 // loop_pre_header
                  _
                $region49: #{tpu_custom_call.1} parent=46 // loop_header
                  %s327 = sphi 0, %s331
                  %p328 = scmp.ge.s32.totalorder %s327, 1
                  %s332 = sphi %s187, %s187
                  %s333 = sphi %s182, %s182
                $region50: #{tpu_custom_call.1} parent=46 // loop_header_branch
                  %330 = sbr.rel (%p328) target = $region54
                $region51: #{tpu_custom_call.1} parent=46 // loop_body
                  _
                $region52: #{tpu_custom_call.1} parent=46 // loop_footer
                  %s331 = sadd.s32 1, %s327
                $region53: #{tpu_custom_call.1} parent=46 // loop_footer_branch
                  %326 = sbr.rel target = $region49
                $region54: #{tpu_custom_call.1} parent=46 // loop_exit
                  _
                %s335 = ssub.s32 16, 1
                loop: start=0, step=1, limit=1
                $region55: #{tpu_custom_call.1} parent=46 // loop_pre_header
                  _
                $region56: #{tpu_custom_call.1} parent=46 // loop_header
                  %s337 = sphi 0, %s341
                  %p338 = scmp.ge.s32.totalorder %s337, 1
                  %s342 = sphi %s187, %s187
                  %s343 = sphi %s182, %s182
                $region57: #{tpu_custom_call.1} parent=46 // loop_header_branch
                  %340 = sbr.rel (%p338) target = $region61
                $region58: #{tpu_custom_call.1} parent=46 // loop_body
                  %v344 = vld [vmem:[%s342] sm:%s335]
                  %345 = vst [vmem:[%s343] sm:%s335] %v344
                  %v346 = vld [vmem:[%s342 + $0x4] sm:%s335]
                  %347 = vst [vmem:[%s343 + $0x4] sm:%s335] %v346
                  %v348 = vld [vmem:[%s342 + $0x8] sm:%s335]
                  %349 = vst [vmem:[%s343 + $0x8] sm:%s335] %v348
                  %v350 = vld [vmem:[%s342 + $0xc] sm:%s335]
                  %351 = vst [vmem:[%s343 + $0xc] sm:%s335] %v350
                  %v352 = vld [vmem:[%s342 + $0x10] sm:%s335]
                  %353 = vst [vmem:[%s343 + $0x10] sm:%s335] %v352
                  %v354 = vld [vmem:[%s342 + $0x14] sm:%s335]
                  %355 = vst [vmem:[%s343 + $0x14] sm:%s335] %v354
                  %v356 = vld [vmem:[%s342 + $0x18] sm:%s335]
                  %357 = vst [vmem:[%s343 + $0x18] sm:%s335] %v356
                  %v358 = vld [vmem:[%s342 + $0x1c] sm:%s335]
                  %359 = vst [vmem:[%s343 + $0x1c] sm:%s335] %v358
                  %v360 = vld [vmem:[%s342 + $0x20] sm:%s335]
                  %361 = vst [vmem:[%s343 + $0x20] sm:%s335] %v360
                  %v362 = vld [vmem:[%s342 + $0x24] sm:%s335]
                  %363 = vst [vmem:[%s343 + $0x24] sm:%s335] %v362
                  %v364 = vld [vmem:[%s342 + $0x28] sm:%s335]
                  %365 = vst [vmem:[%s343 + $0x28] sm:%s335] %v364
                  %v366 = vld [vmem:[%s342 + $0x2c] sm:%s335]
                  %367 = vst [vmem:[%s343 + $0x2c] sm:%s335] %v366
                  %v368 = vld [vmem:[%s342 + $0x30] sm:%s335]
                  %369 = vst [vmem:[%s343 + $0x30] sm:%s335] %v368
                  %v370 = vld [vmem:[%s342 + $0x34] sm:%s335]
                  %371 = vst [vmem:[%s343 + $0x34] sm:%s335] %v370
                  %v372 = vld [vmem:[%s342 + $0x38] sm:%s335]
                  %373 = vst [vmem:[%s343 + $0x38] sm:%s335] %v372
                  %v374 = vld [vmem:[%s342 + $0x3c] sm:%s335]
                  %375 = vst [vmem:[%s343 + $0x3c] sm:%s335] %v374
                  %v376 = vld [vmem:[%s342 + $0x40] sm:%s335]
                  %377 = vst [vmem:[%s343 + $0x40] sm:%s335] %v376
                  %v378 = vld [vmem:[%s342 + $0x44] sm:%s335]
                  %379 = vst [vmem:[%s343 + $0x44] sm:%s335] %v378
                  %v380 = vld [vmem:[%s342 + $0x48] sm:%s335]
                  %381 = vst [vmem:[%s343 + $0x48] sm:%s335] %v380
                  %v382 = vld [vmem:[%s342 + $0x4c] sm:%s335]
                  %383 = vst [vmem:[%s343 + $0x4c] sm:%s335] %v382
                  %v384 = vld [vmem:[%s342 + $0x50] sm:%s335]
                  %385 = vst [vmem:[%s343 + $0x50] sm:%s335] %v384
                  %v386 = vld [vmem:[%s342 + $0x54] sm:%s335]
                  %387 = vst [vmem:[%s343 + $0x54] sm:%s335] %v386
                  %v388 = vld [vmem:[%s342 + $0x58] sm:%s335]
                  %389 = vst [vmem:[%s343 + $0x58] sm:%s335] %v388
                  %v390 = vld [vmem:[%s342 + $0x5c] sm:%s335]
                  %391 = vst [vmem:[%s343 + $0x5c] sm:%s335] %v390
                  %v392 = vld [vmem:[%s342 + $0x60] sm:%s335]
                  %393 = vst [vmem:[%s343 + $0x60] sm:%s335] %v392
                  %v394 = vld [vmem:[%s342 + $0x64] sm:%s335]
                  %395 = vst [vmem:[%s343 + $0x64] sm:%s335] %v394
                  %v396 = vld [vmem:[%s342 + $0x68] sm:%s335]
                  %397 = vst [vmem:[%s343 + $0x68] sm:%s335] %v396
                  %v398 = vld [vmem:[%s342 + $0x6c] sm:%s335]
                  %399 = vst [vmem:[%s343 + $0x6c] sm:%s335] %v398
                  %v400 = vld [vmem:[%s342 + $0x70] sm:%s335]
                  %401 = vst [vmem:[%s343 + $0x70] sm:%s335] %v400
                  %v402 = vld [vmem:[%s342 + $0x74] sm:%s335]
                  %403 = vst [vmem:[%s343 + $0x74] sm:%s335] %v402
                  %v404 = vld [vmem:[%s342 + $0xf0] sm:%s335]
                  %405 = vst [vmem:[%s343 + $0x78] sm:%s335] %v404
                  %v406 = vld [vmem:[%s342 + $0xf4] sm:%s335]
                  %407 = vst [vmem:[%s343 + $0x7c] sm:%s335] %v406
                  %v408 = vld [vmem:[%s342 + $0xf8] sm:%s335]
                  %409 = vst [vmem:[%s343 + $0x80] sm:%s335] %v408
                  %v410 = vld [vmem:[%s342 + $0xfc] sm:%s335]
                  %411 = vst [vmem:[%s343 + $0x84] sm:%s335] %v410
                  %v412 = vld [vmem:[%s342 + $0x100] sm:%s335]
                  %413 = vst [vmem:[%s343 + $0x88] sm:%s335] %v412
                  %v414 = vld [vmem:[%s342 + $0x104] sm:%s335]
                  %415 = vst [vmem:[%s343 + $0x8c] sm:%s335] %v414
                  %v416 = vld [vmem:[%s342 + $0x108] sm:%s335]
                  %417 = vst [vmem:[%s343 + $0x90] sm:%s335] %v416
                  %v418 = vld [vmem:[%s342 + $0x10c] sm:%s335]
                  %419 = vst [vmem:[%s343 + $0x94] sm:%s335] %v418
                  %v420 = vld [vmem:[%s342 + $0x110] sm:%s335]
                  %421 = vst [vmem:[%s343 + $0x98] sm:%s335] %v420
                  %v422 = vld [vmem:[%s342 + $0x114] sm:%s335]
                  %423 = vst [vmem:[%s343 + $0x9c] sm:%s335] %v422
                  %v424 = vld [vmem:[%s342 + $0x118] sm:%s335]
                  %425 = vst [vmem:[%s343 + $0xa0] sm:%s335] %v424
                  %v426 = vld [vmem:[%s342 + $0x11c] sm:%s335]
                  %427 = vst [vmem:[%s343 + $0xa4] sm:%s335] %v426
                  %v428 = vld [vmem:[%s342 + $0x120] sm:%s335]
                  %429 = vst [vmem:[%s343 + $0xa8] sm:%s335] %v428
                  %v430 = vld [vmem:[%s342 + $0x124] sm:%s335]
                  %431 = vst [vmem:[%s343 + $0xac] sm:%s335] %v430
                  %v432 = vld [vmem:[%s342 + $0x128] sm:%s335]
                  %433 = vst [vmem:[%s343 + $0xb0] sm:%s335] %v432
                  %v434 = vld [vmem:[%s342 + $0x12c] sm:%s335]
                  %435 = vst [vmem:[%s343 + $0xb4] sm:%s335] %v434
                  %v436 = vld [vmem:[%s342 + $0x130] sm:%s335]
                  %437 = vst [vmem:[%s343 + $0xb8] sm:%s335] %v436
                  %v438 = vld [vmem:[%s342 + $0x134] sm:%s335]
                  %439 = vst [vmem:[%s343 + $0xbc] sm:%s335] %v438
                  %v440 = vld [vmem:[%s342 + $0x138] sm:%s335]
                  %441 = vst [vmem:[%s343 + $0xc0] sm:%s335] %v440
                  %v442 = vld [vmem:[%s342 + $0x13c] sm:%s335]
                  %443 = vst [vmem:[%s343 + $0xc4] sm:%s335] %v442
                  %v444 = vld [vmem:[%s342 + $0x140] sm:%s335]
                  %445 = vst [vmem:[%s343 + $0xc8] sm:%s335] %v444
                  %v446 = vld [vmem:[%s342 + $0x144] sm:%s335]
                  %447 = vst [vmem:[%s343 + $0xcc] sm:%s335] %v446
                  %v448 = vld [vmem:[%s342 + $0x148] sm:%s335]
                  %449 = vst [vmem:[%s343 + $0xd0] sm:%s335] %v448
                  %v450 = vld [vmem:[%s342 + $0x14c] sm:%s335]
                  %451 = vst [vmem:[%s343 + $0xd4] sm:%s335] %v450
                  %v452 = vld [vmem:[%s342 + $0x150] sm:%s335]
                  %453 = vst [vmem:[%s343 + $0xd8] sm:%s335] %v452
                  %v454 = vld [vmem:[%s342 + $0x154] sm:%s335]
                  %455 = vst [vmem:[%s343 + $0xdc] sm:%s335] %v454
                  %v456 = vld [vmem:[%s342 + $0x158] sm:%s335]
                  %457 = vst [vmem:[%s343 + $0xe0] sm:%s335] %v456
                  %v458 = vld [vmem:[%s342 + $0x15c] sm:%s335]
                  %459 = vst [vmem:[%s343 + $0xe4] sm:%s335] %v458
                  %v460 = vld [vmem:[%s342 + $0x160] sm:%s335]
                  %461 = vst [vmem:[%s343 + $0xe8] sm:%s335] %v460
                  %v462 = vld [vmem:[%s342 + $0x164] sm:%s335]
                  %463 = vst [vmem:[%s343 + $0xec] sm:%s335] %v462
                $region59: #{tpu_custom_call.1} parent=46 // loop_footer
                  %s341 = sadd.s32 1, %s337
                $region60: #{tpu_custom_call.1} parent=46 // loop_footer_branch
                  %336 = sbr.rel target = $region56
                $region61: #{tpu_custom_call.1} parent=46 // loop_exit
                  _
              $region47: #{tpu_custom_call.1} parent=31 // pred_fallthru
                _
            $region32: #{tpu_custom_call.1} parent=27 // pred_fallthru
              _
            // Predicated region
            $region33: #{tpu_custom_call.1} parent=27 // pred_check
              _
            $region34: #{tpu_custom_call.1} parent=27 // pred_check_branch
              %193 = sbr.rel (0) target = $region36
            $region35: #{tpu_custom_call.1} parent=27 // pred_region
              %s195 = ssub.s32 16, 1
              loop: start=0, step=1, limit=1
              $region37: #{tpu_custom_call.1} parent=35 // loop_pre_header
                _
              $region38: #{tpu_custom_call.1} parent=35 // loop_header
                %s197 = sphi 0, %s201
                %p198 = scmp.ge.s32.totalorder %s197, 1
                %s202 = sphi %s187, %s187
                %s203 = sphi %s182, %s182
              $region39: #{tpu_custom_call.1} parent=35 // loop_header_branch
                %200 = sbr.rel (%p198) target = $region43
              $region40: #{tpu_custom_call.1} parent=35 // loop_body
                %v204 = vld [vmem:[%s202] sm:%s195]
                %205 = vst [vmem:[%s203] sm:%s195] %v204
                %v206 = vld [vmem:[%s202 + $0x4] sm:%s195]
                %207 = vst [vmem:[%s203 + $0x4] sm:%s195] %v206
                %v208 = vld [vmem:[%s202 + $0x8] sm:%s195]
                %209 = vst [vmem:[%s203 + $0x8] sm:%s195] %v208
                %v210 = vld [vmem:[%s202 + $0xc] sm:%s195]
                %211 = vst [vmem:[%s203 + $0xc] sm:%s195] %v210
                %v212 = vld [vmem:[%s202 + $0x10] sm:%s195]
                %213 = vst [vmem:[%s203 + $0x10] sm:%s195] %v212
                %v214 = vld [vmem:[%s202 + $0x14] sm:%s195]
                %215 = vst [vmem:[%s203 + $0x14] sm:%s195] %v214
                %v216 = vld [vmem:[%s202 + $0x18] sm:%s195]
                %217 = vst [vmem:[%s203 + $0x18] sm:%s195] %v216
                %v218 = vld [vmem:[%s202 + $0x1c] sm:%s195]
                %219 = vst [vmem:[%s203 + $0x1c] sm:%s195] %v218
                %v220 = vld [vmem:[%s202 + $0x20] sm:%s195]
                %221 = vst [vmem:[%s203 + $0x20] sm:%s195] %v220
                %v222 = vld [vmem:[%s202 + $0x24] sm:%s195]
                %223 = vst [vmem:[%s203 + $0x24] sm:%s195] %v222
                %v224 = vld [vmem:[%s202 + $0x28] sm:%s195]
                %225 = vst [vmem:[%s203 + $0x28] sm:%s195] %v224
                %v226 = vld [vmem:[%s202 + $0x2c] sm:%s195]
                %227 = vst [vmem:[%s203 + $0x2c] sm:%s195] %v226
                %v228 = vld [vmem:[%s202 + $0x30] sm:%s195]
                %229 = vst [vmem:[%s203 + $0x30] sm:%s195] %v228
                %v230 = vld [vmem:[%s202 + $0x34] sm:%s195]
                %231 = vst [vmem:[%s203 + $0x34] sm:%s195] %v230
                %v232 = vld [vmem:[%s202 + $0x38] sm:%s195]
                %233 = vst [vmem:[%s203 + $0x38] sm:%s195] %v232
                %v234 = vld [vmem:[%s202 + $0x3c] sm:%s195]
                %235 = vst [vmem:[%s203 + $0x3c] sm:%s195] %v234
                %v236 = vld [vmem:[%s202 + $0x40] sm:%s195]
                %237 = vst [vmem:[%s203 + $0x40] sm:%s195] %v236
                %v238 = vld [vmem:[%s202 + $0x44] sm:%s195]
                %239 = vst [vmem:[%s203 + $0x44] sm:%s195] %v238
                %v240 = vld [vmem:[%s202 + $0x48] sm:%s195]
                %241 = vst [vmem:[%s203 + $0x48] sm:%s195] %v240
                %v242 = vld [vmem:[%s202 + $0x4c] sm:%s195]
                %243 = vst [vmem:[%s203 + $0x4c] sm:%s195] %v242
                %v244 = vld [vmem:[%s202 + $0x50] sm:%s195]
                %245 = vst [vmem:[%s203 + $0x50] sm:%s195] %v244
                %v246 = vld [vmem:[%s202 + $0x54] sm:%s195]
                %247 = vst [vmem:[%s203 + $0x54] sm:%s195] %v246
                %v248 = vld [vmem:[%s202 + $0x58] sm:%s195]
                %249 = vst [vmem:[%s203 + $0x58] sm:%s195] %v248
                %v250 = vld [vmem:[%s202 + $0x5c] sm:%s195]
                %251 = vst [vmem:[%s203 + $0x5c] sm:%s195] %v250
                %v252 = vld [vmem:[%s202 + $0x60] sm:%s195]
                %253 = vst [vmem:[%s203 + $0x60] sm:%s195] %v252
                %v254 = vld [vmem:[%s202 + $0x64] sm:%s195]
                %255 = vst [vmem:[%s203 + $0x64] sm:%s195] %v254
                %v256 = vld [vmem:[%s202 + $0x68] sm:%s195]
                %257 = vst [vmem:[%s203 + $0x68] sm:%s195] %v256
                %v258 = vld [vmem:[%s202 + $0x6c] sm:%s195]
                %259 = vst [vmem:[%s203 + $0x6c] sm:%s195] %v258
                %v260 = vld [vmem:[%s202 + $0x70] sm:%s195]
                %261 = vst [vmem:[%s203 + $0x70] sm:%s195] %v260
                %v262 = vld [vmem:[%s202 + $0x74] sm:%s195]
                %263 = vst [vmem:[%s203 + $0x74] sm:%s195] %v262
                %v264 = vld [vmem:[%s202 + $0xf0] sm:%s195]
                %265 = vst [vmem:[%s203 + $0x78] sm:%s195] %v264
                %v266 = vld [vmem:[%s202 + $0xf4] sm:%s195]
                %267 = vst [vmem:[%s203 + $0x7c] sm:%s195] %v266
                %v268 = vld [vmem:[%s202 + $0xf8] sm:%s195]
                %269 = vst [vmem:[%s203 + $0x80] sm:%s195] %v268
                %v270 = vld [vmem:[%s202 + $0xfc] sm:%s195]
                %271 = vst [vmem:[%s203 + $0x84] sm:%s195] %v270
                %v272 = vld [vmem:[%s202 + $0x100] sm:%s195]
                %273 = vst [vmem:[%s203 + $0x88] sm:%s195] %v272
                %v274 = vld [vmem:[%s202 + $0x104] sm:%s195]
                %275 = vst [vmem:[%s203 + $0x8c] sm:%s195] %v274
                %v276 = vld [vmem:[%s202 + $0x108] sm:%s195]
                %277 = vst [vmem:[%s203 + $0x90] sm:%s195] %v276
                %v278 = vld [vmem:[%s202 + $0x10c] sm:%s195]
                %279 = vst [vmem:[%s203 + $0x94] sm:%s195] %v278
                %v280 = vld [vmem:[%s202 + $0x110] sm:%s195]
                %281 = vst [vmem:[%s203 + $0x98] sm:%s195] %v280
                %v282 = vld [vmem:[%s202 + $0x114] sm:%s195]
                %283 = vst [vmem:[%s203 + $0x9c] sm:%s195] %v282
                %v284 = vld [vmem:[%s202 + $0x118] sm:%s195]
                %285 = vst [vmem:[%s203 + $0xa0] sm:%s195] %v284
                %v286 = vld [vmem:[%s202 + $0x11c] sm:%s195]
                %287 = vst [vmem:[%s203 + $0xa4] sm:%s195] %v286
                %v288 = vld [vmem:[%s202 + $0x120] sm:%s195]
                %289 = vst [vmem:[%s203 + $0xa8] sm:%s195] %v288
                %v290 = vld [vmem:[%s202 + $0x124] sm:%s195]
                %291 = vst [vmem:[%s203 + $0xac] sm:%s195] %v290
                %v292 = vld [vmem:[%s202 + $0x128] sm:%s195]
                %293 = vst [vmem:[%s203 + $0xb0] sm:%s195] %v292
                %v294 = vld [vmem:[%s202 + $0x12c] sm:%s195]
                %295 = vst [vmem:[%s203 + $0xb4] sm:%s195] %v294
                %v296 = vld [vmem:[%s202 + $0x130] sm:%s195]
                %297 = vst [vmem:[%s203 + $0xb8] sm:%s195] %v296
                %v298 = vld [vmem:[%s202 + $0x134] sm:%s195]
                %299 = vst [vmem:[%s203 + $0xbc] sm:%s195] %v298
                %v300 = vld [vmem:[%s202 + $0x138] sm:%s195]
                %301 = vst [vmem:[%s203 + $0xc0] sm:%s195] %v300
                %v302 = vld [vmem:[%s202 + $0x13c] sm:%s195]
                %303 = vst [vmem:[%s203 + $0xc4] sm:%s195] %v302
                %v304 = vld [vmem:[%s202 + $0x140] sm:%s195]
                %305 = vst [vmem:[%s203 + $0xc8] sm:%s195] %v304
                %v306 = vld [vmem:[%s202 + $0x144] sm:%s195]
                %307 = vst [vmem:[%s203 + $0xcc] sm:%s195] %v306
                %v308 = vld [vmem:[%s202 + $0x148] sm:%s195]
                %309 = vst [vmem:[%s203 + $0xd0] sm:%s195] %v308
                %v310 = vld [vmem:[%s202 + $0x14c] sm:%s195]
                %311 = vst [vmem:[%s203 + $0xd4] sm:%s195] %v310
                %v312 = vld [vmem:[%s202 + $0x150] sm:%s195]
                %313 = vst [vmem:[%s203 + $0xd8] sm:%s195] %v312
                %v314 = vld [vmem:[%s202 + $0x154] sm:%s195]
                %315 = vst [vmem:[%s203 + $0xdc] sm:%s195] %v314
                %v316 = vld [vmem:[%s202 + $0x158] sm:%s195]
                %317 = vst [vmem:[%s203 + $0xe0] sm:%s195] %v316
                %v318 = vld [vmem:[%s202 + $0x15c] sm:%s195]
                %319 = vst [vmem:[%s203 + $0xe4] sm:%s195] %v318
                %v320 = vld [vmem:[%s202 + $0x160] sm:%s195]
                %321 = vst [vmem:[%s203 + $0xe8] sm:%s195] %v320
                %v322 = vld [vmem:[%s202 + $0x164] sm:%s195]
                %323 = vst [vmem:[%s203 + $0xec] sm:%s195] %v322
              $region41: #{tpu_custom_call.1} parent=35 // loop_footer
                %s201 = sadd.s32 1, %s197
              $region42: #{tpu_custom_call.1} parent=35 // loop_footer_branch
                %196 = sbr.rel target = $region38
              $region43: #{tpu_custom_call.1} parent=35 // loop_exit
                _
            $region36: #{tpu_custom_call.1} parent=27 // pred_fallthru
              _
          $region28: #{tpu_custom_call.1} parent=23 // pred_fallthru
            _
          %464 = vnop
        $region24: #{tpu_custom_call.1} parent=19 // pred_fallthru
          _
      $region20: #{tpu_custom_call.1} parent=5 // pred_fallthru
        _
      %p465 = scmp.le.s32.totalorder 1, %s16
      %p466 = scmp.lt.s32.totalorder %s16, 3
      %p467 = pnand %p465, %p466
      %p468 = pneg %p467
      // Predicated region
      $region62: #{tpu_custom_call.1} parent=5 // pred_check
        _
      $region63: #{tpu_custom_call.1} parent=5 // pred_check_branch
        %470 = sbr.rel (%p467) target = $region65
      $region64: #{tpu_custom_call.1} parent=5 // pred_region
        %s471 = ssub.s32 %s16, 1
        %s472 = sand.u32 %s50, 1
        %s473 = sand.u32 %s50, 1
        %s474 = smul.addr %s473, 240
        %s475 = scalar_lea.vmem [#allocation2], %s474
        // Predicated region
        $region66: #{tpu_custom_call.1} parent=64 // pred_check
          %p476 = pneg %p63
        $region67: #{tpu_custom_call.1} parent=64 // pred_check_branch
          %478 = sbr.rel (%p476) target = $region69
        $region68: #{tpu_custom_call.1} parent=64 // pred_region
          _
        $region69: #{tpu_custom_call.1} parent=64 // pred_fallthru
          _
        %s479 = sand.u32 %s50, 1
        %s480 = sand.u32 %s50, 1
        %s481 = smul.addr %s480, 240
        %s482 = scalar_lea.vmem [#allocation2], %s481
        %p483 = pneg %p63
        %p484 = pneg %p60
        %p485 = scmp.lt.s32.totalorder %s28, 0
        %s486 = scalar_select %p485, %s28, 0
        %p487 = scmp.lt.s32.totalorder %s27, 0
        %s488 = scalar_select %p487, %s27, 0
        %s489 = sadd.s32 %s488, %s486
        %s490 = smul.addr %s489, 4
        %s491 = scalar_lea.vmem %s1, %s490
        %p492 = pneg %p91
        %p493 = pneg %p88
        %p494 = pneg %p119
        %p495 = pneg %p116
        %s496 = sand.u32 %s106, 1
        %s497 = scalar_lea.sflag [#allocation4], %s496
        %s498 = sand.u32 %s106, 1
        %s499 = smul.addr %s498, 256
        %s500 = scalar_lea.vmem [#allocation3], %s499
        %p501 = pneg %p147
        %p502 = pneg %p144
        %s503 = sand.u32 %s134, 1
        %s504 = scalar_lea.sflag [#allocation6], %s503
        %s505 = sand.u32 %s134, 1
        %s506 = smul.addr %s505, 2
        %s507 = scalar_lea.vmem [#allocation5], %s506
        %s508 = smul.u32 10, %s26
        %p509 = scmp.lt.s32.totalorder %s28, 0
        %s510 = scalar_select %p509, %s28, 0
        %p511 = scmp.lt.s32.totalorder %s27, 0
        %s512 = scalar_select %p511, %s27, 0
        %s513 = sadd.s32 %s512, %s510
        %s514 = smul.addr %s513, 4
        %s515 = scalar_lea.vmem %s1, %s514
        %s516 = smul.u32 8, %s26
        %v518 = vld [vmem:[%s475] sm:$0xf]
        %v519 = vld [vmem:[%s475 + $0x4] sm:$0xf]
        %v520 = vld [vmem:[%s475 + $0x8] sm:$0x1]
        %v521 = vld [vmem:[%s475 + $0xc] sm:$0xf]
        %v522 = vld [vmem:[%s475 + $0x10] sm:$0xf]
        %v523 = vld [vmem:[%s475 + $0x14] sm:$0x1]
        %v524 = vld [vmem:[%s475 + $0x18] sm:$0xf]
        %v525 = vld [vmem:[%s475 + $0x1c] sm:$0xf]
        %v526 = vld [vmem:[%s475 + $0x20] sm:$0x1]
        %v527 = vld [vmem:[%s475 + $0x24] sm:$0xf]
        %v528 = vld [vmem:[%s475 + $0x28] sm:$0xf]
        %v529 = vld [vmem:[%s475 + $0x2c] sm:$0x1]
        %v530 = vld [vmem:[%s475 + $0x30] sm:$0xf]
        %v531 = vld [vmem:[%s475 + $0x34] sm:$0xf]
        %v532 = vld [vmem:[%s475 + $0x38] sm:$0x1]
        %v533 = vld [vmem:[%s475 + $0x3c] sm:$0xf]
        %v534 = vld [vmem:[%s475 + $0x40] sm:$0xf]
        %v535 = vld [vmem:[%s475 + $0x44] sm:$0x1]
        %v536 = vld [vmem:[%s475 + $0x48] sm:$0xf]
        %v537 = vld [vmem:[%s475 + $0x4c] sm:$0xf]
        %v538 = vld [vmem:[%s475 + $0x50] sm:$0x1]
        %v539 = vld [vmem:[%s475 + $0x54] sm:$0xf]
        %v540 = vld [vmem:[%s475 + $0x58] sm:$0xf]
        %v541 = vld [vmem:[%s475 + $0x5c] sm:$0x1]
        %v542 = vld [vmem:[%s475 + $0x60] sm:$0xf]
        %v543 = vld [vmem:[%s475 + $0x64] sm:$0xf]
        %v544 = vld [vmem:[%s475 + $0x68] sm:$0x1]
        %v545 = vld [vmem:[%s475 + $0x6c] sm:$0xf]
        %v546 = vld [vmem:[%s475 + $0x70] sm:$0xf]
        %v547 = vld [vmem:[%s475 + $0x74] sm:$0x1]
        %v548 = vld [vmem:[%s475 + $0x78] sm:$0xf]
        %v549 = vld [vmem:[%s475 + $0x7c] sm:$0xf]
        %v550 = vld [vmem:[%s475 + $0x80] sm:$0x1]
        %v551 = vld [vmem:[%s475 + $0x84] sm:$0xf]
        %v552 = vld [vmem:[%s475 + $0x88] sm:$0xf]
        %v553 = vld [vmem:[%s475 + $0x8c] sm:$0x1]
        %v554 = vld [vmem:[%s475 + $0x90] sm:$0xf]
        %v555 = vld [vmem:[%s475 + $0x94] sm:$0xf]
        %v556 = vld [vmem:[%s475 + $0x98] sm:$0x1]
        %v557 = vld [vmem:[%s475 + $0x9c] sm:$0xf]
        %v558 = vld [vmem:[%s475 + $0xa0] sm:$0xf]
        %v559 = vld [vmem:[%s475 + $0xa4] sm:$0x1]
        %v560 = vld [vmem:[%s475 + $0xa8] sm:$0xf]
        %v561 = vld [vmem:[%s475 + $0xac] sm:$0xf]
        %v562 = vld [vmem:[%s475 + $0xb0] sm:$0x1]
        %v563 = vld [vmem:[%s475 + $0xb4] sm:$0xf]
        %v564 = vld [vmem:[%s475 + $0xb8] sm:$0xf]
        %v565 = vld [vmem:[%s475 + $0xbc] sm:$0x1]
        %v566 = vld [vmem:[%s475 + $0xc0] sm:$0xf]
        %v567 = vld [vmem:[%s475 + $0xc4] sm:$0xf]
        %v568 = vld [vmem:[%s475 + $0xc8] sm:$0x1]
        %v569 = vld [vmem:[%s475 + $0xcc] sm:$0xf]
        %v570 = vld [vmem:[%s475 + $0xd0] sm:$0xf]
        %v571 = vld [vmem:[%s475 + $0xd4] sm:$0x1]
        %v572 = vld [vmem:[%s475 + $0xd8] sm:$0xf]
        %v573 = vld [vmem:[%s475 + $0xdc] sm:$0xf]
        %v574 = vld [vmem:[%s475 + $0xe0] sm:$0x1]
        %v575 = vld [vmem:[%s475 + $0xe4] sm:$0xf]
        %v576 = vld [vmem:[%s475 + $0xe8] sm:$0xf]
        %v577 = vld [vmem:[%s475 + $0xec] sm:$0x1]
        %v578 = vld [vmem:[%s515] sm:$0xf]
        %s579 = scalar_lea.vmem %s515, 12
        %v580 = vld [vmem:[%s579] sm:$0xf]
        %v613 = vunpack.c.l.b16 %v521
        %v614 = vunpack.c.l.b16 %v522
        %v615 = vunpack.c.l.b16 %v524
        %v616 = vunpack.c.l.b16 %v525
        %v617 = vunpack.c.l.b16 %v527
        %v618 = vunpack.c.l.b16 %v528
        %v619 = vunpack.c.l.b16 %v530
        %v620 = vunpack.c.l.b16 %v531
        %v621 = vunpack.c.l.b16 %v533
        %v622 = vunpack.c.l.b16 %v534
        %v623 = vunpack.c.l.b16 %v536
        %v624 = vunpack.c.l.b16 %v537
        %v625 = vunpack.c.l.b16 %v539
        %v626 = vunpack.c.l.b16 %v540
        %v627 = vunpack.c.l.b16 %v542
        %v628 = vunpack.c.l.b16 %v543
        %v629 = vunpack.c.l.b16 %v551
        %v630 = vunpack.c.l.b16 %v552
        %v631 = vunpack.c.l.b16 %v554
        %v632 = vunpack.c.l.b16 %v555
        %v633 = vunpack.c.l.b16 %v557
        %v634 = vunpack.c.l.b16 %v558
        %v635 = vunpack.c.l.b16 %v560
        %v636 = vunpack.c.l.b16 %v561
        %v637 = vunpack.c.l.b16 %v563
        %v638 = vunpack.c.l.b16 %v564
        %v639 = vunpack.c.l.b16 %v566
        %v640 = vunpack.c.l.b16 %v567
        %v641 = vunpack.c.l.b16 %v569
        %v642 = vunpack.c.l.b16 %v570
        %v643 = vunpack.c.l.b16 %v572
        %v644 = vunpack.c.l.b16 %v573
        %v645 = vpack.c.b16 %v614, %v613
        %v646 = vpack.c.b16 %v616, %v615
        %v647 = vpack.c.b16 %v618, %v617
        %v648 = vpack.c.b16 %v620, %v619
        %v649 = vpack.c.b16 %v622, %v621
        %v650 = vpack.c.b16 %v624, %v623
        %v651 = vpack.c.b16 %v626, %v625
        %v652 = vpack.c.b16 %v628, %v627
        %v653 = vpack.c.b16 %v630, %v629
        %v654 = vpack.c.b16 %v632, %v631
        %v655 = vpack.c.b16 %v634, %v633
        %v656 = vpack.c.b16 %v636, %v635
        %v657 = vpack.c.b16 %v638, %v637
        %v658 = vpack.c.b16 %v640, %v639
        %v659 = vpack.c.b16 %v642, %v641
        %v660 = vpack.c.b16 %v644, %v643
        %vm661 = vcmask 64512
        %v663 = vsel %vm661, %v645, 0
        %v666 = vsel %vm661, %v646, 0
        %v669 = vsel %vm661, %v647, 0
        %v672 = vsel %vm661, %v648, 0
        %v675 = vsel %vm661, %v649, 0
        %v678 = vsel %vm661, %v650, 0
        %v681 = vsel %vm661, %v651, 0
        %v684 = vsel %vm661, %v652, 0
        %v687 = vsel %vm661, %v653, 0
        %v690 = vsel %vm661, %v654, 0
        %v693 = vsel %vm661, %v655, 0
        %v696 = vsel %vm661, %v656, 0
        %v699 = vsel %vm661, %v657, 0
        %v702 = vsel %vm661, %v658, 0
        %v705 = vsel %vm661, %v659, 0
        %v708 = vsel %vm661, %v660, 0
        %vm710 = vcmask 1043456
        %v712 = vsel %vm710, %v580, 0
        %714 = vmatpush.bf16.msra.mxu0 0
        %715 = vmatpush.bf16.msra.mxu0 0
        %716 = vmatpush.bf16.msra.mxu0 0
        %717 = vmatpush.bf16.msra.mxu0 0
        %718 = vmatpush.bf16.msra.mxu0 0
        %719 = vmatpush.bf16.msra.mxu0 0
        %720 = vmatpush.bf16.msra.mxu0 0
        %721 = vmatpush.bf16.msra.mxu0 %v712
        %722 = vmatmul.bf16.gmra.mxu0 %v663
        %v723 = vpop.f32.mrf.mxu0
        %v724 = vadd.f32 0.0, %v723
        %v725 = vpop.f32.mrf.mxu0
        %v726 = vadd.f32 0.0, %v725
        %727 = vmatmul.bf16.gmra.mxu0 %v666
        %v728 = vpop.f32.mrf.mxu0
        %v729 = vadd.f32 0.0, %v728
        %v730 = vpop.f32.mrf.mxu0
        %v731 = vadd.f32 0.0, %v730
        %732 = vmatmul.bf16.gmra.mxu0 %v669
        %v733 = vpop.f32.mrf.mxu0
        %v734 = vadd.f32 0.0, %v733
        %v735 = vpop.f32.mrf.mxu0
        %v736 = vadd.f32 0.0, %v735
        %737 = vmatmul.bf16.gmra.mxu0 %v672
        %v738 = vpop.f32.mrf.mxu0
        %v739 = vadd.f32 0.0, %v738
        %v740 = vpop.f32.mrf.mxu0
        %v741 = vadd.f32 0.0, %v740
        %742 = vmatmul.bf16.gmra.mxu0 %v675
        %v743 = vpop.f32.mrf.mxu0
        %v744 = vadd.f32 0.0, %v743
        %v745 = vpop.f32.mrf.mxu0
        %v746 = vadd.f32 0.0, %v745
        %747 = vmatmul.bf16.gmra.mxu0 %v678
        %v748 = vpop.f32.mrf.mxu0
        %v749 = vadd.f32 0.0, %v748
        %v750 = vpop.f32.mrf.mxu0
        %v751 = vadd.f32 0.0, %v750
        %752 = vmatmul.bf16.gmra.mxu0 %v681
        %v753 = vpop.f32.mrf.mxu0
        %v754 = vadd.f32 0.0, %v753
        %v755 = vpop.f32.mrf.mxu0
        %v756 = vadd.f32 0.0, %v755
        %757 = vmatmul.bf16.gmra.mxu0 %v684
        %v758 = vpop.f32.mrf.mxu0
        %v759 = vadd.f32 0.0, %v758
        %v760 = vpop.f32.mrf.mxu0
        %v761 = vadd.f32 0.0, %v760
        %762 = vmatmul.bf16.gmra.mxu0 %v687
        %v763 = vpop.f32.mrf.mxu0
        %v764 = vadd.f32 0.0, %v763
        %v765 = vpop.f32.mrf.mxu0
        %v766 = vadd.f32 0.0, %v765
        %767 = vmatmul.bf16.gmra.mxu0 %v690
        %v768 = vpop.f32.mrf.mxu0
        %v769 = vadd.f32 0.0, %v768
        %v770 = vpop.f32.mrf.mxu0
        %v771 = vadd.f32 0.0, %v770
        %772 = vmatmul.bf16.gmra.mxu0 %v693
        %v773 = vpop.f32.mrf.mxu0
        %v774 = vadd.f32 0.0, %v773
        %v775 = vpop.f32.mrf.mxu0
        %v776 = vadd.f32 0.0, %v775
        %777 = vmatmul.bf16.gmra.mxu0 %v696
        %v778 = vpop.f32.mrf.mxu0
        %v779 = vadd.f32 0.0, %v778
        %v780 = vpop.f32.mrf.mxu0
        %v781 = vadd.f32 0.0, %v780
        %782 = vmatmul.bf16.gmra.mxu0 %v699
        %v783 = vpop.f32.mrf.mxu0
        %v784 = vadd.f32 0.0, %v783
        %v785 = vpop.f32.mrf.mxu0
        %v786 = vadd.f32 0.0, %v785
        %787 = vmatmul.bf16.gmra.mxu0 %v702
        %v788 = vpop.f32.mrf.mxu0
        %v789 = vadd.f32 0.0, %v788
        %v790 = vpop.f32.mrf.mxu0
        %v791 = vadd.f32 0.0, %v790
        %792 = vmatmul.bf16.gmra.mxu0 %v705
        %v793 = vpop.f32.mrf.mxu0
        %v794 = vadd.f32 0.0, %v793
        %v795 = vpop.f32.mrf.mxu0
        %v796 = vadd.f32 0.0, %v795
        %797 = vmatmul.bf16.gmra.mxu0 %v708
        %v798 = vpop.f32.mrf.mxu0
        %v799 = vadd.f32 0.0, %v798
        %v800 = vpop.f32.mrf.mxu0
        %v801 = vadd.f32 0.0, %v800
        %802 = vdwg.mxu0
        %v807 = vunpack.c.l.b16 %v518
        %v808 = vunpack.c.l.b16 %v519
        %v809 = vunpack.c.l.b16 %v548
        %v810 = vunpack.c.l.b16 %v549
        %v811 = vpack.c.b16 %v808, %v807
        %v812 = vpack.c.b16 %v810, %v809
        %v814 = vsel %vm661, %v811, 0
        %v817 = vsel %vm661, %v812, 0
        %v820 = vsel %vm710, %v578, 0
        %822 = vmatpush.bf16.msra.mxu0 0
        %823 = vmatpush.bf16.msra.mxu0 0
        %824 = vmatpush.bf16.msra.mxu0 0
        %825 = vmatpush.bf16.msra.mxu0 0
        %826 = vmatpush.bf16.msra.mxu0 0
        %827 = vmatpush.bf16.msra.mxu0 0
        %828 = vmatpush.bf16.msra.mxu0 0
        %829 = vmatpush.bf16.msra.mxu0 %v820
        %830 = vmatmul.bf16.gmra.mxu0 %v814
        %v831 = vpop.f32.mrf.mxu0
        %v832 = vadd.f32 %v724, %v831
        %v833 = vpop.f32.mrf.mxu0
        %v834 = vadd.f32 %v726, %v833
        %835 = vmatmul.bf16.gmra.mxu0 %v663
        %v836 = vpop.f32.mrf.mxu0
        %v837 = vadd.f32 %v729, %v836
        %v838 = vpop.f32.mrf.mxu0
        %v839 = vadd.f32 %v731, %v838
        %840 = vmatmul.bf16.gmra.mxu0 %v666
        %v841 = vpop.f32.mrf.mxu0
        %v842 = vadd.f32 %v734, %v841
        %v843 = vpop.f32.mrf.mxu0
        %v844 = vadd.f32 %v736, %v843
        %845 = vmatmul.bf16.gmra.mxu0 %v669
        %v846 = vpop.f32.mrf.mxu0
        %v847 = vadd.f32 %v739, %v846
        %v848 = vpop.f32.mrf.mxu0
        %v849 = vadd.f32 %v741, %v848
        %850 = vmatmul.bf16.gmra.mxu0 %v672
        %v851 = vpop.f32.mrf.mxu0
        %v852 = vadd.f32 %v744, %v851
        %v853 = vpop.f32.mrf.mxu0
        %v854 = vadd.f32 %v746, %v853
        %855 = vmatmul.bf16.gmra.mxu0 %v675
        %v856 = vpop.f32.mrf.mxu0
        %v857 = vadd.f32 %v749, %v856
        %v858 = vpop.f32.mrf.mxu0
        %v859 = vadd.f32 %v751, %v858
        %860 = vmatmul.bf16.gmra.mxu0 %v678
        %v861 = vpop.f32.mrf.mxu0
        %v862 = vadd.f32 %v754, %v861
        %v863 = vpop.f32.mrf.mxu0
        %v864 = vadd.f32 %v756, %v863
        %865 = vmatmul.bf16.gmra.mxu0 %v681
        %v866 = vpop.f32.mrf.mxu0
        %v867 = vadd.f32 %v759, %v866
        %v868 = vpop.f32.mrf.mxu0
        %v869 = vadd.f32 %v761, %v868
        %870 = vmatmul.bf16.gmra.mxu0 %v817
        %v871 = vpop.f32.mrf.mxu0
        %v872 = vadd.f32 %v764, %v871
        %v873 = vpop.f32.mrf.mxu0
        %v874 = vadd.f32 %v766, %v873
        %875 = vmatmul.bf16.gmra.mxu0 %v687
        %v876 = vpop.f32.mrf.mxu0
        %v877 = vadd.f32 %v769, %v876
        %v878 = vpop.f32.mrf.mxu0
        %v879 = vadd.f32 %v771, %v878
        %880 = vmatmul.bf16.gmra.mxu0 %v690
        %v881 = vpop.f32.mrf.mxu0
        %v882 = vadd.f32 %v774, %v881
        %v883 = vpop.f32.mrf.mxu0
        %v884 = vadd.f32 %v776, %v883
        %885 = vmatmul.bf16.gmra.mxu0 %v693
        %v886 = vpop.f32.mrf.mxu0
        %v887 = vadd.f32 %v779, %v886
        %v888 = vpop.f32.mrf.mxu0
        %v889 = vadd.f32 %v781, %v888
        %890 = vmatmul.bf16.gmra.mxu0 %v696
        %v891 = vpop.f32.mrf.mxu0
        %v892 = vadd.f32 %v784, %v891
        %v893 = vpop.f32.mrf.mxu0
        %v894 = vadd.f32 %v786, %v893
        %895 = vmatmul.bf16.gmra.mxu0 %v699
        %v896 = vpop.f32.mrf.mxu0
        %v897 = vadd.f32 %v789, %v896
        %v898 = vpop.f32.mrf.mxu0
        %v899 = vadd.f32 %v791, %v898
        %900 = vmatmul.bf16.gmra.mxu0 %v702
        %v901 = vpop.f32.mrf.mxu0
        %v902 = vadd.f32 %v794, %v901
        %v903 = vpop.f32.mrf.mxu0
        %v904 = vadd.f32 %v796, %v903
        %905 = vmatmul.bf16.gmra.mxu0 %v705
        %v906 = vpop.f32.mrf.mxu0
        %v907 = vadd.f32 %v799, %v906
        %v908 = vpop.f32.mrf.mxu0
        %v909 = vadd.f32 %v801, %v908
        %910 = vdwg.mxu0
        %s911 = scalar_lea.vmem %s515, 24
        %v912 = vld [vmem:[%s911] sm:$0xf]
        %v917 = vunpack.c.l.b16 %v545
        %v918 = vunpack.c.l.b16 %v546
        %v919 = vunpack.c.l.b16 %v575
        %v920 = vunpack.c.l.b16 %v576
        %v921 = vpack.c.b16 %v918, %v917
        %v922 = vpack.c.b16 %v920, %v919
        %v924 = vsel %vm661, %v921, 0
        %v927 = vsel %vm661, %v922, 0
        %v930 = vsel %vm710, %v912, 0
        %932 = vmatpush.bf16.msra.mxu0 0
        %933 = vmatpush.bf16.msra.mxu0 0
        %934 = vmatpush.bf16.msra.mxu0 0
        %935 = vmatpush.bf16.msra.mxu0 0
        %936 = vmatpush.bf16.msra.mxu0 0
        %937 = vmatpush.bf16.msra.mxu0 0
        %938 = vmatpush.bf16.msra.mxu0 0
        %939 = vmatpush.bf16.msra.mxu0 %v930
        %940 = vmatmul.bf16.gmra.mxu0 %v666
        %v941 = vpop.f32.mrf.mxu0
        %v942 = vadd.f32 0.0, %v941
        %v943 = vpop.f32.mrf.mxu0
        %v944 = vadd.f32 0.0, %v943
        %945 = vmatmul.bf16.gmra.mxu0 %v669
        %v946 = vpop.f32.mrf.mxu0
        %v947 = vadd.f32 0.0, %v946
        %v948 = vpop.f32.mrf.mxu0
        %v949 = vadd.f32 0.0, %v948
        %950 = vmatmul.bf16.gmra.mxu0 %v672
        %v951 = vpop.f32.mrf.mxu0
        %v952 = vadd.f32 0.0, %v951
        %v953 = vpop.f32.mrf.mxu0
        %v954 = vadd.f32 0.0, %v953
        %955 = vmatmul.bf16.gmra.mxu0 %v675
        %v956 = vpop.f32.mrf.mxu0
        %v957 = vadd.f32 0.0, %v956
        %v958 = vpop.f32.mrf.mxu0
        %v959 = vadd.f32 0.0, %v958
        %960 = vmatmul.bf16.gmra.mxu0 %v678
        %v961 = vpop.f32.mrf.mxu0
        %v962 = vadd.f32 0.0, %v961
        %v963 = vpop.f32.mrf.mxu0
        %v964 = vadd.f32 0.0, %v963
        %965 = vmatmul.bf16.gmra.mxu0 %v681
        %v966 = vpop.f32.mrf.mxu0
        %v967 = vadd.f32 0.0, %v966
        %v968 = vpop.f32.mrf.mxu0
        %v969 = vadd.f32 0.0, %v968
        %970 = vmatmul.bf16.gmra.mxu0 %v684
        %v971 = vpop.f32.mrf.mxu0
        %v972 = vadd.f32 0.0, %v971
        %v973 = vpop.f32.mrf.mxu0
        %v974 = vadd.f32 0.0, %v973
        %975 = vmatmul.bf16.gmra.mxu0 %v924
        %v976 = vpop.f32.mrf.mxu0
        %v977 = vadd.f32 0.0, %v976
        %v978 = vpop.f32.mrf.mxu0
        %v979 = vadd.f32 0.0, %v978
        %980 = vmatmul.bf16.gmra.mxu0 %v690
        %v981 = vpop.f32.mrf.mxu0
        %v982 = vadd.f32 0.0, %v981
        %v983 = vpop.f32.mrf.mxu0
        %v984 = vadd.f32 0.0, %v983
        %985 = vmatmul.bf16.gmra.mxu0 %v693
        %v986 = vpop.f32.mrf.mxu0
        %v987 = vadd.f32 0.0, %v986
        %v988 = vpop.f32.mrf.mxu0
        %v989 = vadd.f32 0.0, %v988
        %990 = vmatmul.bf16.gmra.mxu0 %v696
        %v991 = vpop.f32.mrf.mxu0
        %v992 = vadd.f32 0.0, %v991
        %v993 = vpop.f32.mrf.mxu0
        %v994 = vadd.f32 0.0, %v993
        %995 = vmatmul.bf16.gmra.mxu0 %v699
        %v996 = vpop.f32.mrf.mxu0
        %v997 = vadd.f32 0.0, %v996
        %v998 = vpop.f32.mrf.mxu0
        %v999 = vadd.f32 0.0, %v998
        %1000 = vmatmul.bf16.gmra.mxu0 %v702
        %v1001 = vpop.f32.mrf.mxu0
        %v1002 = vadd.f32 0.0, %v1001
        %v1003 = vpop.f32.mrf.mxu0
        %v1004 = vadd.f32 0.0, %v1003
        %1005 = vmatmul.bf16.gmra.mxu0 %v705
        %v1006 = vpop.f32.mrf.mxu0
        %v1007 = vadd.f32 0.0, %v1006
        %v1008 = vpop.f32.mrf.mxu0
        %v1009 = vadd.f32 0.0, %v1008
        %1010 = vmatmul.bf16.gmra.mxu0 %v708
        %v1011 = vpop.f32.mrf.mxu0
        %v1012 = vadd.f32 0.0, %v1011
        %v1013 = vpop.f32.mrf.mxu0
        %v1014 = vadd.f32 0.0, %v1013
        %1015 = vmatmul.bf16.gmra.mxu0 %v927
        %v1016 = vpop.f32.mrf.mxu0
        %v1017 = vadd.f32 0.0, %v1016
        %v1018 = vpop.f32.mrf.mxu0
        %v1019 = vadd.f32 0.0, %v1018
        %1020 = vdwg.mxu0
        %v1021 = vadd.f32 %v832, %v942
        %v1022 = vadd.f32 %v834, %v944
        %v1023 = vadd.f32 %v837, %v947
        %v1024 = vadd.f32 %v839, %v949
        %v1025 = vadd.f32 %v842, %v952
        %v1026 = vadd.f32 %v844, %v954
        %v1027 = vadd.f32 %v847, %v957
        %v1028 = vadd.f32 %v849, %v959
        %v1029 = vadd.f32 %v852, %v962
        %v1030 = vadd.f32 %v854, %v964
        %v1031 = vadd.f32 %v857, %v967
        %v1032 = vadd.f32 %v859, %v969
        %v1033 = vadd.f32 %v862, %v972
        %v1034 = vadd.f32 %v864, %v974
        %v1035 = vadd.f32 %v867, %v977
        %v1036 = vadd.f32 %v869, %v979
        %v1037 = vadd.f32 %v872, %v982
        %v1038 = vadd.f32 %v874, %v984
        %v1039 = vadd.f32 %v877, %v987
        %v1040 = vadd.f32 %v879, %v989
        %v1041 = vadd.f32 %v882, %v992
        %v1042 = vadd.f32 %v884, %v994
        %v1043 = vadd.f32 %v887, %v997
        %v1044 = vadd.f32 %v889, %v999
        %v1045 = vadd.f32 %v892, %v1002
        %v1046 = vadd.f32 %v894, %v1004
        %v1047 = vadd.f32 %v897, %v1007
        %v1048 = vadd.f32 %v899, %v1009
        %v1049 = vadd.f32 %v902, %v1012
        %v1050 = vadd.f32 %v904, %v1014
        %v1051 = vadd.f32 %v907, %v1017
        %v1052 = vadd.f32 %v909, %v1019
        %vm1053 = vsmask.f32 3328
        %vm1054 = vsmask.f32 7440
        %vm1055 = vmor %vm1053, %vm1054
        %v1057 = vshrl.u32 %v518, 16
        %v1059 = vrot.slane %v1057, 4
        %v1060 = vshll.u32 %v518, 16
        %v1062 = vrot.slane %v1060, 5
        %v1063 = vor.u32 %v1059, %v1062
        %v1064 = vrot.slane %v1063, 4
        %v1066 = vshll.u32 %v519, 16
        %v1068 = vrot.slane %v1066, 5
        %v1069 = vsel %vm1055, %v1064, %v1068
        %v1070 = vshrl.u32 %v519, 16
        %v1072 = vrot.slane %v1070, 4
        %v1073 = vor.u32 %v1072, %v1068
        %v1074 = vrot.slane %v1073, 4
        %v1076 = vshll.u32 %v520, 16
        %v1078 = vrot.slane %v1076, 5
        %v1079 = vsel %vm1055, %v1074, %v1078
        %v1081 = vshrl.u32 %v521, 16
        %v1083 = vrot.slane %v1081, 4
        %v1084 = vshll.u32 %v521, 16
        %v1086 = vrot.slane %v1084, 5
        %v1087 = vor.u32 %v1083, %v1086
        %v1088 = vrot.slane %v1087, 4
        %v1090 = vshll.u32 %v522, 16
        %v1092 = vrot.slane %v1090, 5
        %v1093 = vsel %vm1055, %v1088, %v1092
        %v1094 = vshrl.u32 %v522, 16
        %v1096 = vrot.slane %v1094, 4
        %v1097 = vor.u32 %v1096, %v1092
        %v1098 = vrot.slane %v1097, 4
        %v1100 = vshll.u32 %v523, 16
        %v1102 = vrot.slane %v1100, 5
        %v1103 = vsel %vm1055, %v1098, %v1102
        %v1105 = vshrl.u32 %v524, 16
        %v1107 = vrot.slane %v1105, 4
        %v1108 = vshll.u32 %v524, 16
        %v1110 = vrot.slane %v1108, 5
        %v1111 = vor.u32 %v1107, %v1110
        %v1112 = vrot.slane %v1111, 4
        %v1114 = vshll.u32 %v525, 16
        %v1116 = vrot.slane %v1114, 5
        %v1117 = vsel %vm1055, %v1112, %v1116
        %v1118 = vshrl.u32 %v525, 16
        %v1120 = vrot.slane %v1118, 4
        %v1121 = vor.u32 %v1120, %v1116
        %v1122 = vrot.slane %v1121, 4
        %v1124 = vshll.u32 %v526, 16
        %v1126 = vrot.slane %v1124, 5
        %v1127 = vsel %vm1055, %v1122, %v1126
        %v1129 = vshrl.u32 %v527, 16
        %v1131 = vrot.slane %v1129, 4
        %v1132 = vshll.u32 %v527, 16
        %v1134 = vrot.slane %v1132, 5
        %v1135 = vor.u32 %v1131, %v1134
        %v1136 = vrot.slane %v1135, 4
        %v1138 = vshll.u32 %v528, 16
        %v1140 = vrot.slane %v1138, 5
        %v1141 = vsel %vm1055, %v1136, %v1140
        %v1142 = vshrl.u32 %v528, 16
        %v1144 = vrot.slane %v1142, 4
        %v1145 = vor.u32 %v1144, %v1140
        %v1146 = vrot.slane %v1145, 4
        %v1148 = vshll.u32 %v529, 16
        %v1150 = vrot.slane %v1148, 5
        %v1151 = vsel %vm1055, %v1146, %v1150
        %v1153 = vshrl.u32 %v530, 16
        %v1155 = vrot.slane %v1153, 4
        %v1156 = vshll.u32 %v530, 16
        %v1158 = vrot.slane %v1156, 5
        %v1159 = vor.u32 %v1155, %v1158
        %v1160 = vrot.slane %v1159, 4
        %v1162 = vshll.u32 %v531, 16
        %v1164 = vrot.slane %v1162, 5
        %v1165 = vsel %vm1055, %v1160, %v1164
        %v1166 = vshrl.u32 %v531, 16
        %v1168 = vrot.slane %v1166, 4
        %v1169 = vor.u32 %v1168, %v1164
        %v1170 = vrot.slane %v1169, 4
        %v1172 = vshll.u32 %v532, 16
        %v1174 = vrot.slane %v1172, 5
        %v1175 = vsel %vm1055, %v1170, %v1174
        %v1177 = vshrl.u32 %v533, 16
        %v1179 = vrot.slane %v1177, 4
        %v1180 = vshll.u32 %v533, 16
        %v1182 = vrot.slane %v1180, 5
        %v1183 = vor.u32 %v1179, %v1182
        %v1184 = vrot.slane %v1183, 4
        %v1186 = vshll.u32 %v534, 16
        %v1188 = vrot.slane %v1186, 5
        %v1189 = vsel %vm1055, %v1184, %v1188
        %v1190 = vshrl.u32 %v534, 16
        %v1192 = vrot.slane %v1190, 4
        %v1193 = vor.u32 %v1192, %v1188
        %v1194 = vrot.slane %v1193, 4
        %v1196 = vshll.u32 %v535, 16
        %v1198 = vrot.slane %v1196, 5
        %v1199 = vsel %vm1055, %v1194, %v1198
        %v1201 = vshrl.u32 %v536, 16
        %v1203 = vrot.slane %v1201, 4
        %v1204 = vshll.u32 %v536, 16
        %v1206 = vrot.slane %v1204, 5
        %v1207 = vor.u32 %v1203, %v1206
        %v1208 = vrot.slane %v1207, 4
        %v1210 = vshll.u32 %v537, 16
        %v1212 = vrot.slane %v1210, 5
        %v1213 = vsel %vm1055, %v1208, %v1212
        %v1214 = vshrl.u32 %v537, 16
        %v1216 = vrot.slane %v1214, 4
        %v1217 = vor.u32 %v1216, %v1212
        %v1218 = vrot.slane %v1217, 4
        %v1220 = vshll.u32 %v538, 16
        %v1222 = vrot.slane %v1220, 5
        %v1223 = vsel %vm1055, %v1218, %v1222
        %v1225 = vshrl.u32 %v539, 16
        %v1227 = vrot.slane %v1225, 4
        %v1228 = vshll.u32 %v539, 16
        %v1230 = vrot.slane %v1228, 5
        %v1231 = vor.u32 %v1227, %v1230
        %v1232 = vrot.slane %v1231, 4
        %v1234 = vshll.u32 %v540, 16
        %v1236 = vrot.slane %v1234, 5
        %v1237 = vsel %vm1055, %v1232, %v1236
        %v1238 = vshrl.u32 %v540, 16
        %v1240 = vrot.slane %v1238, 4
        %v1241 = vor.u32 %v1240, %v1236
        %v1242 = vrot.slane %v1241, 4
        %v1244 = vshll.u32 %v541, 16
        %v1246 = vrot.slane %v1244, 5
        %v1247 = vsel %vm1055, %v1242, %v1246
        %v1249 = vshrl.u32 %v548, 16
        %v1251 = vrot.slane %v1249, 4
        %v1252 = vshll.u32 %v548, 16
        %v1254 = vrot.slane %v1252, 5
        %v1255 = vor.u32 %v1251, %v1254
        %v1256 = vrot.slane %v1255, 4
        %v1258 = vshll.u32 %v549, 16
        %v1260 = vrot.slane %v1258, 5
        %v1261 = vsel %vm1055, %v1256, %v1260
        %v1262 = vshrl.u32 %v549, 16
        %v1264 = vrot.slane %v1262, 4
        %v1265 = vor.u32 %v1264, %v1260
        %v1266 = vrot.slane %v1265, 4
        %v1268 = vshll.u32 %v550, 16
        %v1270 = vrot.slane %v1268, 5
        %v1271 = vsel %vm1055, %v1266, %v1270
        %v1273 = vshrl.u32 %v551, 16
        %v1275 = vrot.slane %v1273, 4
        %v1276 = vshll.u32 %v551, 16
        %v1278 = vrot.slane %v1276, 5
        %v1279 = vor.u32 %v1275, %v1278
        %v1280 = vrot.slane %v1279, 4
        %v1282 = vshll.u32 %v552, 16
        %v1284 = vrot.slane %v1282, 5
        %v1285 = vsel %vm1055, %v1280, %v1284
        %v1286 = vshrl.u32 %v552, 16
        %v1288 = vrot.slane %v1286, 4
        %v1289 = vor.u32 %v1288, %v1284
        %v1290 = vrot.slane %v1289, 4
        %v1292 = vshll.u32 %v553, 16
        %v1294 = vrot.slane %v1292, 5
        %v1295 = vsel %vm1055, %v1290, %v1294
        %v1297 = vshrl.u32 %v554, 16
        %v1299 = vrot.slane %v1297, 4
        %v1300 = vshll.u32 %v554, 16
        %v1302 = vrot.slane %v1300, 5
        %v1303 = vor.u32 %v1299, %v1302
        %v1304 = vrot.slane %v1303, 4
        %v1306 = vshll.u32 %v555, 16
        %v1308 = vrot.slane %v1306, 5
        %v1309 = vsel %vm1055, %v1304, %v1308
        %v1310 = vshrl.u32 %v555, 16
        %v1312 = vrot.slane %v1310, 4
        %v1313 = vor.u32 %v1312, %v1308
        %v1314 = vrot.slane %v1313, 4
        %v1316 = vshll.u32 %v556, 16
        %v1318 = vrot.slane %v1316, 5
        %v1319 = vsel %vm1055, %v1314, %v1318
        %v1321 = vshrl.u32 %v557, 16
        %v1323 = vrot.slane %v1321, 4
        %v1324 = vshll.u32 %v557, 16
        %v1326 = vrot.slane %v1324, 5
        %v1327 = vor.u32 %v1323, %v1326
        %v1328 = vrot.slane %v1327, 4
        %v1330 = vshll.u32 %v558, 16
        %v1332 = vrot.slane %v1330, 5
        %v1333 = vsel %vm1055, %v1328, %v1332
        %v1334 = vshrl.u32 %v558, 16
        %v1336 = vrot.slane %v1334, 4
        %v1337 = vor.u32 %v1336, %v1332
        %v1338 = vrot.slane %v1337, 4
        %v1340 = vshll.u32 %v559, 16
        %v1342 = vrot.slane %v1340, 5
        %v1343 = vsel %vm1055, %v1338, %v1342
        %v1345 = vshrl.u32 %v560, 16
        %v1347 = vrot.slane %v1345, 4
        %v1348 = vshll.u32 %v560, 16
        %v1350 = vrot.slane %v1348, 5
        %v1351 = vor.u32 %v1347, %v1350
        %v1352 = vrot.slane %v1351, 4
        %v1354 = vshll.u32 %v561, 16
        %v1356 = vrot.slane %v1354, 5
        %v1357 = vsel %vm1055, %v1352, %v1356
        %v1358 = vshrl.u32 %v561, 16
        %v1360 = vrot.slane %v1358, 4
        %v1361 = vor.u32 %v1360, %v1356
        %v1362 = vrot.slane %v1361, 4
        %v1364 = vshll.u32 %v562, 16
        %v1366 = vrot.slane %v1364, 5
        %v1367 = vsel %vm1055, %v1362, %v1366
        %v1369 = vshrl.u32 %v563, 16
        %v1371 = vrot.slane %v1369, 4
        %v1372 = vshll.u32 %v563, 16
        %v1374 = vrot.slane %v1372, 5
        %v1375 = vor.u32 %v1371, %v1374
        %v1376 = vrot.slane %v1375, 4
        %v1378 = vshll.u32 %v564, 16
        %v1380 = vrot.slane %v1378, 5
        %v1381 = vsel %vm1055, %v1376, %v1380
        %v1382 = vshrl.u32 %v564, 16
        %v1384 = vrot.slane %v1382, 4
        %v1385 = vor.u32 %v1384, %v1380
        %v1386 = vrot.slane %v1385, 4
        %v1388 = vshll.u32 %v565, 16
        %v1390 = vrot.slane %v1388, 5
        %v1391 = vsel %vm1055, %v1386, %v1390
        %v1393 = vshrl.u32 %v566, 16
        %v1395 = vrot.slane %v1393, 4
        %v1396 = vshll.u32 %v566, 16
        %v1398 = vrot.slane %v1396, 5
        %v1399 = vor.u32 %v1395, %v1398
        %v1400 = vrot.slane %v1399, 4
        %v1402 = vshll.u32 %v567, 16
        %v1404 = vrot.slane %v1402, 5
        %v1405 = vsel %vm1055, %v1400, %v1404
        %v1406 = vshrl.u32 %v567, 16
        %v1408 = vrot.slane %v1406, 4
        %v1409 = vor.u32 %v1408, %v1404
        %v1410 = vrot.slane %v1409, 4
        %v1412 = vshll.u32 %v568, 16
        %v1414 = vrot.slane %v1412, 5
        %v1415 = vsel %vm1055, %v1410, %v1414
        %v1417 = vshrl.u32 %v569, 16
        %v1419 = vrot.slane %v1417, 4
        %v1420 = vshll.u32 %v569, 16
        %v1422 = vrot.slane %v1420, 5
        %v1423 = vor.u32 %v1419, %v1422
        %v1424 = vrot.slane %v1423, 4
        %v1426 = vshll.u32 %v570, 16
        %v1428 = vrot.slane %v1426, 5
        %v1429 = vsel %vm1055, %v1424, %v1428
        %v1430 = vshrl.u32 %v570, 16
        %v1432 = vrot.slane %v1430, 4
        %v1433 = vor.u32 %v1432, %v1428
        %v1434 = vrot.slane %v1433, 4
        %v1436 = vshll.u32 %v571, 16
        %v1438 = vrot.slane %v1436, 5
        %v1439 = vsel %vm1055, %v1434, %v1438
        %s1440 = scalar_lea.vmem %s515, 4
        %v1441 = vld [vmem:[%s1440] sm:$0xf]
        %v1442 = vunpack.c.l.b16 %v1069
        %v1443 = vunpack.c.l.b16 %v1079
        %v1444 = vunpack.c.l.b16 %v1093
        %v1445 = vunpack.c.l.b16 %v1103
        %v1446 = vunpack.c.l.b16 %v1117
        %v1447 = vunpack.c.l.b16 %v1127
        %v1448 = vunpack.c.l.b16 %v1141
        %v1449 = vunpack.c.l.b16 %v1151
        %v1450 = vunpack.c.l.b16 %v1165
        %v1451 = vunpack.c.l.b16 %v1175
        %v1452 = vunpack.c.l.b16 %v1189
        %v1453 = vunpack.c.l.b16 %v1199
        %v1454 = vunpack.c.l.b16 %v1213
        %v1455 = vunpack.c.l.b16 %v1223
        %v1456 = vunpack.c.l.b16 %v1237
        %v1457 = vunpack.c.l.b16 %v1247
        %v1458 = vunpack.c.l.b16 %v1261
        %v1459 = vunpack.c.l.b16 %v1271
        %v1460 = vunpack.c.l.b16 %v1285
        %v1461 = vunpack.c.l.b16 %v1295
        %v1462 = vunpack.c.l.b16 %v1309
        %v1463 = vunpack.c.l.b16 %v1319
        %v1464 = vunpack.c.l.b16 %v1333
        %v1465 = vunpack.c.l.b16 %v1343
        %v1466 = vunpack.c.l.b16 %v1357
        %v1467 = vunpack.c.l.b16 %v1367
        %v1468 = vunpack.c.l.b16 %v1381
        %v1469 = vunpack.c.l.b16 %v1391
        %v1470 = vunpack.c.l.b16 %v1405
        %v1471 = vunpack.c.l.b16 %v1415
        %v1472 = vunpack.c.l.b16 %v1429
        %v1473 = vunpack.c.l.b16 %v1439
        %v1474 = vpack.c.b16 %v1443, %v1442
        %v1475 = vpack.c.b16 %v1445, %v1444
        %v1476 = vpack.c.b16 %v1447, %v1446
        %v1477 = vpack.c.b16 %v1449, %v1448
        %v1478 = vpack.c.b16 %v1451, %v1450
        %v1479 = vpack.c.b16 %v1453, %v1452
        %v1480 = vpack.c.b16 %v1455, %v1454
        %v1481 = vpack.c.b16 %v1457, %v1456
        %v1482 = vpack.c.b16 %v1459, %v1458
        %v1483 = vpack.c.b16 %v1461, %v1460
        %v1484 = vpack.c.b16 %v1463, %v1462
        %v1485 = vpack.c.b16 %v1465, %v1464
        %v1486 = vpack.c.b16 %v1467, %v1466
        %v1487 = vpack.c.b16 %v1469, %v1468
        %v1488 = vpack.c.b16 %v1471, %v1470
        %v1489 = vpack.c.b16 %v1473, %v1472
        %v1491 = vsel %vm661, %v1474, 0
        %v1494 = vsel %vm661, %v1475, 0
        %v1497 = vsel %vm661, %v1476, 0
        %v1500 = vsel %vm661, %v1477, 0
        %v1503 = vsel %vm661, %v1478, 0
        %v1506 = vsel %vm661, %v1479, 0
        %v1509 = vsel %vm661, %v1480, 0
        %v1512 = vsel %vm661, %v1481, 0
        %v1515 = vsel %vm661, %v1482, 0
        %v1518 = vsel %vm661, %v1483, 0
        %v1521 = vsel %vm661, %v1484, 0
        %v1524 = vsel %vm661, %v1485, 0
        %v1527 = vsel %vm661, %v1486, 0
        %v1530 = vsel %vm661, %v1487, 0
        %v1533 = vsel %vm661, %v1488, 0
        %v1536 = vsel %vm661, %v1489, 0
        %v1539 = vsel %vm710, %v1441, 0
        %1541 = vmatpush.bf16.msra.mxu0 0
        %1542 = vmatpush.bf16.msra.mxu0 0
        %1543 = vmatpush.bf16.msra.mxu0 0
        %1544 = vmatpush.bf16.msra.mxu0 0
        %1545 = vmatpush.bf16.msra.mxu0 0
        %1546 = vmatpush.bf16.msra.mxu0 0
        %1547 = vmatpush.bf16.msra.mxu0 0
        %1548 = vmatpush.bf16.msra.mxu0 %v1539
        %1549 = vmatmul.bf16.gmra.mxu0 %v1491
        %v1550 = vpop.f32.mrf.mxu0
        %v1551 = vadd.f32 0.0, %v1550
        %v1552 = vpop.f32.mrf.mxu0
        %v1553 = vadd.f32 0.0, %v1552
        %1554 = vmatmul.bf16.gmra.mxu0 %v1494
        %v1555 = vpop.f32.mrf.mxu0
        %v1556 = vadd.f32 0.0, %v1555
        %v1557 = vpop.f32.mrf.mxu0
        %v1558 = vadd.f32 0.0, %v1557
        %1559 = vmatmul.bf16.gmra.mxu0 %v1497
        %v1560 = vpop.f32.mrf.mxu0
        %v1561 = vadd.f32 0.0, %v1560
        %v1562 = vpop.f32.mrf.mxu0
        %v1563 = vadd.f32 0.0, %v1562
        %1564 = vmatmul.bf16.gmra.mxu0 %v1500
        %v1565 = vpop.f32.mrf.mxu0
        %v1566 = vadd.f32 0.0, %v1565
        %v1567 = vpop.f32.mrf.mxu0
        %v1568 = vadd.f32 0.0, %v1567
        %1569 = vmatmul.bf16.gmra.mxu0 %v1503
        %v1570 = vpop.f32.mrf.mxu0
        %v1571 = vadd.f32 0.0, %v1570
        %v1572 = vpop.f32.mrf.mxu0
        %v1573 = vadd.f32 0.0, %v1572
        %1574 = vmatmul.bf16.gmra.mxu0 %v1506
        %v1575 = vpop.f32.mrf.mxu0
        %v1576 = vadd.f32 0.0, %v1575
        %v1577 = vpop.f32.mrf.mxu0
        %v1578 = vadd.f32 0.0, %v1577
        %1579 = vmatmul.bf16.gmra.mxu0 %v1509
        %v1580 = vpop.f32.mrf.mxu0
        %v1581 = vadd.f32 0.0, %v1580
        %v1582 = vpop.f32.mrf.mxu0
        %v1583 = vadd.f32 0.0, %v1582
        %1584 = vmatmul.bf16.gmra.mxu0 %v1512
        %v1585 = vpop.f32.mrf.mxu0
        %v1586 = vadd.f32 0.0, %v1585
        %v1587 = vpop.f32.mrf.mxu0
        %v1588 = vadd.f32 0.0, %v1587
        %1589 = vmatmul.bf16.gmra.mxu0 %v1515
        %v1590 = vpop.f32.mrf.mxu0
        %v1591 = vadd.f32 0.0, %v1590
        %v1592 = vpop.f32.mrf.mxu0
        %v1593 = vadd.f32 0.0, %v1592
        %1594 = vmatmul.bf16.gmra.mxu0 %v1518
        %v1595 = vpop.f32.mrf.mxu0
        %v1596 = vadd.f32 0.0, %v1595
        %v1597 = vpop.f32.mrf.mxu0
        %v1598 = vadd.f32 0.0, %v1597
        %1599 = vmatmul.bf16.gmra.mxu0 %v1521
        %v1600 = vpop.f32.mrf.mxu0
        %v1601 = vadd.f32 0.0, %v1600
        %v1602 = vpop.f32.mrf.mxu0
        %v1603 = vadd.f32 0.0, %v1602
        %1604 = vmatmul.bf16.gmra.mxu0 %v1524
        %v1605 = vpop.f32.mrf.mxu0
        %v1606 = vadd.f32 0.0, %v1605
        %v1607 = vpop.f32.mrf.mxu0
        %v1608 = vadd.f32 0.0, %v1607
        %1609 = vmatmul.bf16.gmra.mxu0 %v1527
        %v1610 = vpop.f32.mrf.mxu0
        %v1611 = vadd.f32 0.0, %v1610
        %v1612 = vpop.f32.mrf.mxu0
        %v1613 = vadd.f32 0.0, %v1612
        %1614 = vmatmul.bf16.gmra.mxu0 %v1530
        %v1615 = vpop.f32.mrf.mxu0
        %v1616 = vadd.f32 0.0, %v1615
        %v1617 = vpop.f32.mrf.mxu0
        %v1618 = vadd.f32 0.0, %v1617
        %1619 = vmatmul.bf16.gmra.mxu0 %v1533
        %v1620 = vpop.f32.mrf.mxu0
        %v1621 = vadd.f32 0.0, %v1620
        %v1622 = vpop.f32.mrf.mxu0
        %v1623 = vadd.f32 0.0, %v1622
        %1624 = vmatmul.bf16.gmra.mxu0 %v1536
        %v1625 = vpop.f32.mrf.mxu0
        %v1626 = vadd.f32 0.0, %v1625
        %v1627 = vpop.f32.mrf.mxu0
        %v1628 = vadd.f32 0.0, %v1627
        %1629 = vdwg.mxu0
        %v1630 = vadd.f32 %v1021, %v1551
        %v1631 = vadd.f32 %v1022, %v1553
        %v1632 = vadd.f32 %v1023, %v1556
        %v1633 = vadd.f32 %v1024, %v1558
        %v1634 = vadd.f32 %v1025, %v1561
        %v1635 = vadd.f32 %v1026, %v1563
        %v1636 = vadd.f32 %v1027, %v1566
        %v1637 = vadd.f32 %v1028, %v1568
        %v1638 = vadd.f32 %v1029, %v1571
        %v1639 = vadd.f32 %v1030, %v1573
        %v1640 = vadd.f32 %v1031, %v1576
        %v1641 = vadd.f32 %v1032, %v1578
        %v1642 = vadd.f32 %v1033, %v1581
        %v1643 = vadd.f32 %v1034, %v1583
        %v1644 = vadd.f32 %v1035, %v1586
        %v1645 = vadd.f32 %v1036, %v1588
        %v1646 = vadd.f32 %v1037, %v1591
        %v1647 = vadd.f32 %v1038, %v1593
        %v1648 = vadd.f32 %v1039, %v1596
        %v1649 = vadd.f32 %v1040, %v1598
        %v1650 = vadd.f32 %v1041, %v1601
        %v1651 = vadd.f32 %v1042, %v1603
        %v1652 = vadd.f32 %v1043, %v1606
        %v1653 = vadd.f32 %v1044, %v1608
        %v1654 = vadd.f32 %v1045, %v1611
        %v1655 = vadd.f32 %v1046, %v1613
        %v1656 = vadd.f32 %v1047, %v1616
        %v1657 = vadd.f32 %v1048, %v1618
        %v1658 = vadd.f32 %v1049, %v1621
        %v1659 = vadd.f32 %v1050, %v1623
        %v1660 = vadd.f32 %v1051, %v1626
        %v1661 = vadd.f32 %v1052, %v1628
        %v1663 = vshrl.u32 %v542, 16
        %v1665 = vrot.slane %v1663, 4
        %v1666 = vshll.u32 %v542, 16
        %v1668 = vrot.slane %v1666, 5
        %v1669 = vor.u32 %v1665, %v1668
        %v1670 = vrot.slane %v1669, 4
        %v1672 = vshll.u32 %v543, 16
        %v1674 = vrot.slane %v1672, 5
        %v1675 = vsel %vm1055, %v1670, %v1674
        %v1676 = vshrl.u32 %v543, 16
        %v1678 = vrot.slane %v1676, 4
        %v1679 = vor.u32 %v1678, %v1674
        %v1680 = vrot.slane %v1679, 4
        %v1682 = vshll.u32 %v544, 16
        %v1684 = vrot.slane %v1682, 5
        %v1685 = vsel %vm1055, %v1680, %v1684
        %v1687 = vshrl.u32 %v572, 16
        %v1689 = vrot.slane %v1687, 4
        %v1690 = vshll.u32 %v572, 16
        %v1692 = vrot.slane %v1690, 5
        %v1693 = vor.u32 %v1689, %v1692
        %v1694 = vrot.slane %v1693, 4
        %v1696 = vshll.u32 %v573, 16
        %v1698 = vrot.slane %v1696, 5
        %v1699 = vsel %vm1055, %v1694, %v1698
        %v1700 = vshrl.u32 %v573, 16
        %v1702 = vrot.slane %v1700, 4
        %v1703 = vor.u32 %v1702, %v1698
        %v1704 = vrot.slane %v1703, 4
        %v1706 = vshll.u32 %v574, 16
        %v1708 = vrot.slane %v1706, 5
        %v1709 = vsel %vm1055, %v1704, %v1708
        %s1710 = scalar_lea.vmem %s515, 16
        %v1711 = vld [vmem:[%s1710] sm:$0xf]
        %v1712 = vunpack.c.l.b16 %v1675
        %v1713 = vunpack.c.l.b16 %v1685
        %v1714 = vunpack.c.l.b16 %v1699
        %v1715 = vunpack.c.l.b16 %v1709
        %v1716 = vpack.c.b16 %v1713, %v1712
        %v1717 = vpack.c.b16 %v1715, %v1714
        %v1719 = vsel %vm661, %v1716, 0
        %v1722 = vsel %vm661, %v1717, 0
        %v1725 = vsel %vm710, %v1711, 0
        %1727 = vmatpush.bf16.msra.mxu0 0
        %1728 = vmatpush.bf16.msra.mxu0 0
        %1729 = vmatpush.bf16.msra.mxu0 0
        %1730 = vmatpush.bf16.msra.mxu0 0
        %1731 = vmatpush.bf16.msra.mxu0 0
        %1732 = vmatpush.bf16.msra.mxu0 0
        %1733 = vmatpush.bf16.msra.mxu0 0
        %1734 = vmatpush.bf16.msra.mxu0 %v1725
        %1735 = vmatmul.bf16.gmra.mxu0 %v1494
        %v1736 = vpop.f32.mrf.mxu0
        %v1737 = vadd.f32 0.0, %v1736
        %v1738 = vpop.f32.mrf.mxu0
        %v1739 = vadd.f32 0.0, %v1738
        %1740 = vmatmul.bf16.gmra.mxu0 %v1497
        %v1741 = vpop.f32.mrf.mxu0
        %v1742 = vadd.f32 0.0, %v1741
        %v1743 = vpop.f32.mrf.mxu0
        %v1744 = vadd.f32 0.0, %v1743
        %1745 = vmatmul.bf16.gmra.mxu0 %v1500
        %v1746 = vpop.f32.mrf.mxu0
        %v1747 = vadd.f32 0.0, %v1746
        %v1748 = vpop.f32.mrf.mxu0
        %v1749 = vadd.f32 0.0, %v1748
        %1750 = vmatmul.bf16.gmra.mxu0 %v1503
        %v1751 = vpop.f32.mrf.mxu0
        %v1752 = vadd.f32 0.0, %v1751
        %v1753 = vpop.f32.mrf.mxu0
        %v1754 = vadd.f32 0.0, %v1753
        %1755 = vmatmul.bf16.gmra.mxu0 %v1506
        %v1756 = vpop.f32.mrf.mxu0
        %v1757 = vadd.f32 0.0, %v1756
        %v1758 = vpop.f32.mrf.mxu0
        %v1759 = vadd.f32 0.0, %v1758
        %1760 = vmatmul.bf16.gmra.mxu0 %v1509
        %v1761 = vpop.f32.mrf.mxu0
        %v1762 = vadd.f32 0.0, %v1761
        %v1763 = vpop.f32.mrf.mxu0
        %v1764 = vadd.f32 0.0, %v1763
        %1765 = vmatmul.bf16.gmra.mxu0 %v1512
        %v1766 = vpop.f32.mrf.mxu0
        %v1767 = vadd.f32 0.0, %v1766
        %v1768 = vpop.f32.mrf.mxu0
        %v1769 = vadd.f32 0.0, %v1768
        %1770 = vmatmul.bf16.gmra.mxu0 %v1719
        %v1771 = vpop.f32.mrf.mxu0
        %v1772 = vadd.f32 0.0, %v1771
        %v1773 = vpop.f32.mrf.mxu0
        %v1774 = vadd.f32 0.0, %v1773
        %1775 = vmatmul.bf16.gmra.mxu0 %v1518
        %v1776 = vpop.f32.mrf.mxu0
        %v1777 = vadd.f32 0.0, %v1776
        %v1778 = vpop.f32.mrf.mxu0
        %v1779 = vadd.f32 0.0, %v1778
        %1780 = vmatmul.bf16.gmra.mxu0 %v1521
        %v1781 = vpop.f32.mrf.mxu0
        %v1782 = vadd.f32 0.0, %v1781
        %v1783 = vpop.f32.mrf.mxu0
        %v1784 = vadd.f32 0.0, %v1783
        %1785 = vmatmul.bf16.gmra.mxu0 %v1524
        %v1786 = vpop.f32.mrf.mxu0
        %v1787 = vadd.f32 0.0, %v1786
        %v1788 = vpop.f32.mrf.mxu0
        %v1789 = vadd.f32 0.0, %v1788
        %1790 = vmatmul.bf16.gmra.mxu0 %v1527
        %v1791 = vpop.f32.mrf.mxu0
        %v1792 = vadd.f32 0.0, %v1791
        %v1793 = vpop.f32.mrf.mxu0
        %v1794 = vadd.f32 0.0, %v1793
        %1795 = vmatmul.bf16.gmra.mxu0 %v1530
        %v1796 = vpop.f32.mrf.mxu0
        %v1797 = vadd.f32 0.0, %v1796
        %v1798 = vpop.f32.mrf.mxu0
        %v1799 = vadd.f32 0.0, %v1798
        %1800 = vmatmul.bf16.gmra.mxu0 %v1533
        %v1801 = vpop.f32.mrf.mxu0
        %v1802 = vadd.f32 0.0, %v1801
        %v1803 = vpop.f32.mrf.mxu0
        %v1804 = vadd.f32 0.0, %v1803
        %1805 = vmatmul.bf16.gmra.mxu0 %v1536
        %v1806 = vpop.f32.mrf.mxu0
        %v1807 = vadd.f32 0.0, %v1806
        %v1808 = vpop.f32.mrf.mxu0
        %v1809 = vadd.f32 0.0, %v1808
        %1810 = vmatmul.bf16.gmra.mxu0 %v1722
        %v1811 = vpop.f32.mrf.mxu0
        %v1812 = vadd.f32 0.0, %v1811
        %v1813 = vpop.f32.mrf.mxu0
        %v1814 = vadd.f32 0.0, %v1813
        %1815 = vdwg.mxu0
        %v1816 = vadd.f32 %v1630, %v1737
        %v1817 = vadd.f32 %v1631, %v1739
        %v1818 = vadd.f32 %v1632, %v1742
        %v1819 = vadd.f32 %v1633, %v1744
        %v1820 = vadd.f32 %v1634, %v1747
        %v1821 = vadd.f32 %v1635, %v1749
        %v1822 = vadd.f32 %v1636, %v1752
        %v1823 = vadd.f32 %v1637, %v1754
        %v1824 = vadd.f32 %v1638, %v1757
        %v1825 = vadd.f32 %v1639, %v1759
        %v1826 = vadd.f32 %v1640, %v1762
        %v1827 = vadd.f32 %v1641, %v1764
        %v1828 = vadd.f32 %v1642, %v1767
        %v1829 = vadd.f32 %v1643, %v1769
        %v1830 = vadd.f32 %v1644, %v1772
        %v1831 = vadd.f32 %v1645, %v1774
        %v1832 = vadd.f32 %v1646, %v1777
        %v1833 = vadd.f32 %v1647, %v1779
        %v1834 = vadd.f32 %v1648, %v1782
        %v1835 = vadd.f32 %v1649, %v1784
        %v1836 = vadd.f32 %v1650, %v1787
        %v1837 = vadd.f32 %v1651, %v1789
        %v1838 = vadd.f32 %v1652, %v1792
        %v1839 = vadd.f32 %v1653, %v1794
        %v1840 = vadd.f32 %v1654, %v1797
        %v1841 = vadd.f32 %v1655, %v1799
        %v1842 = vadd.f32 %v1656, %v1802
        %v1843 = vadd.f32 %v1657, %v1804
        %v1844 = vadd.f32 %v1658, %v1807
        %v1845 = vadd.f32 %v1659, %v1809
        %v1846 = vadd.f32 %v1660, %v1812
        %v1847 = vadd.f32 %v1661, %v1814
        %v1849 = vshrl.u32 %v545, 16
        %v1851 = vrot.slane %v1849, 4
        %v1852 = vshll.u32 %v545, 16
        %v1854 = vrot.slane %v1852, 5
        %v1855 = vor.u32 %v1851, %v1854
        %v1856 = vrot.slane %v1855, 4
        %v1858 = vshll.u32 %v546, 16
        %v1860 = vrot.slane %v1858, 5
        %v1861 = vsel %vm1055, %v1856, %v1860
        %v1862 = vshrl.u32 %v546, 16
        %v1864 = vrot.slane %v1862, 4
        %v1865 = vor.u32 %v1864, %v1860
        %v1866 = vrot.slane %v1865, 4
        %v1868 = vshll.u32 %v547, 16
        %v1870 = vrot.slane %v1868, 5
        %v1871 = vsel %vm1055, %v1866, %v1870
        %v1873 = vshrl.u32 %v575, 16
        %v1875 = vrot.slane %v1873, 4
        %v1876 = vshll.u32 %v575, 16
        %v1878 = vrot.slane %v1876, 5
        %v1879 = vor.u32 %v1875, %v1878
        %v1880 = vrot.slane %v1879, 4
        %v1882 = vshll.u32 %v576, 16
        %v1884 = vrot.slane %v1882, 5
        %v1885 = vsel %vm1055, %v1880, %v1884
        %v1886 = vshrl.u32 %v576, 16
        %v1888 = vrot.slane %v1886, 4
        %v1889 = vor.u32 %v1888, %v1884
        %v1890 = vrot.slane %v1889, 4
        %v1892 = vshll.u32 %v577, 16
        %v1894 = vrot.slane %v1892, 5
        %v1895 = vsel %vm1055, %v1890, %v1894
        %s1896 = scalar_lea.vmem %s515, 28
        %v1897 = vld [vmem:[%s1896] sm:$0xf]
        %v1898 = vunpack.c.l.b16 %v1861
        %v1899 = vunpack.c.l.b16 %v1871
        %v1900 = vunpack.c.l.b16 %v1885
        %v1901 = vunpack.c.l.b16 %v1895
        %v1902 = vpack.c.b16 %v1899, %v1898
        %v1903 = vpack.c.b16 %v1901, %v1900
        %v1905 = vsel %vm661, %v1902, 0
        %v1908 = vsel %vm661, %v1903, 0
        %v1911 = vsel %vm710, %v1897, 0
        %1913 = vmatpush.bf16.msra.mxu0 0
        %1914 = vmatpush.bf16.msra.mxu0 0
        %1915 = vmatpush.bf16.msra.mxu0 0
        %1916 = vmatpush.bf16.msra.mxu0 0
        %1917 = vmatpush.bf16.msra.mxu0 0
        %1918 = vmatpush.bf16.msra.mxu0 0
        %1919 = vmatpush.bf16.msra.mxu0 0
        %1920 = vmatpush.bf16.msra.mxu0 %v1911
        %1921 = vmatmul.bf16.gmra.mxu0 %v1497
        %v1922 = vpop.f32.mrf.mxu0
        %v1923 = vadd.f32 0.0, %v1922
        %v1924 = vpop.f32.mrf.mxu0
        %v1925 = vadd.f32 0.0, %v1924
        %1926 = vmatmul.bf16.gmra.mxu0 %v1500
        %v1927 = vpop.f32.mrf.mxu0
        %v1928 = vadd.f32 0.0, %v1927
        %v1929 = vpop.f32.mrf.mxu0
        %v1930 = vadd.f32 0.0, %v1929
        %1931 = vmatmul.bf16.gmra.mxu0 %v1503
        %v1932 = vpop.f32.mrf.mxu0
        %v1933 = vadd.f32 0.0, %v1932
        %v1934 = vpop.f32.mrf.mxu0
        %v1935 = vadd.f32 0.0, %v1934
        %1936 = vmatmul.bf16.gmra.mxu0 %v1506
        %v1937 = vpop.f32.mrf.mxu0
        %v1938 = vadd.f32 0.0, %v1937
        %v1939 = vpop.f32.mrf.mxu0
        %v1940 = vadd.f32 0.0, %v1939
        %1941 = vmatmul.bf16.gmra.mxu0 %v1509
        %v1942 = vpop.f32.mrf.mxu0
        %v1943 = vadd.f32 0.0, %v1942
        %v1944 = vpop.f32.mrf.mxu0
        %v1945 = vadd.f32 0.0, %v1944
        %1946 = vmatmul.bf16.gmra.mxu0 %v1512
        %v1947 = vpop.f32.mrf.mxu0
        %v1948 = vadd.f32 0.0, %v1947
        %v1949 = vpop.f32.mrf.mxu0
        %v1950 = vadd.f32 0.0, %v1949
        %1951 = vmatmul.bf16.gmra.mxu0 %v1719
        %v1952 = vpop.f32.mrf.mxu0
        %v1953 = vadd.f32 0.0, %v1952
        %v1954 = vpop.f32.mrf.mxu0
        %v1955 = vadd.f32 0.0, %v1954
        %1956 = vmatmul.bf16.gmra.mxu0 %v1905
        %v1957 = vpop.f32.mrf.mxu0
        %v1958 = vadd.f32 0.0, %v1957
        %v1959 = vpop.f32.mrf.mxu0
        %v1960 = vadd.f32 0.0, %v1959
        %1961 = vmatmul.bf16.gmra.mxu0 %v1521
        %v1962 = vpop.f32.mrf.mxu0
        %v1963 = vadd.f32 0.0, %v1962
        %v1964 = vpop.f32.mrf.mxu0
        %v1965 = vadd.f32 0.0, %v1964
        %1966 = vmatmul.bf16.gmra.mxu0 %v1524
        %v1967 = vpop.f32.mrf.mxu0
        %v1968 = vadd.f32 0.0, %v1967
        %v1969 = vpop.f32.mrf.mxu0
        %v1970 = vadd.f32 0.0, %v1969
        %1971 = vmatmul.bf16.gmra.mxu0 %v1527
        %v1972 = vpop.f32.mrf.mxu0
        %v1973 = vadd.f32 0.0, %v1972
        %v1974 = vpop.f32.mrf.mxu0
        %v1975 = vadd.f32 0.0, %v1974
        %1976 = vmatmul.bf16.gmra.mxu0 %v1530
        %v1977 = vpop.f32.mrf.mxu0
        %v1978 = vadd.f32 0.0, %v1977
        %v1979 = vpop.f32.mrf.mxu0
        %v1980 = vadd.f32 0.0, %v1979
        %1981 = vmatmul.bf16.gmra.mxu0 %v1533
        %v1982 = vpop.f32.mrf.mxu0
        %v1983 = vadd.f32 0.0, %v1982
        %v1984 = vpop.f32.mrf.mxu0
        %v1985 = vadd.f32 0.0, %v1984
        %1986 = vmatmul.bf16.gmra.mxu0 %v1536
        %v1987 = vpop.f32.mrf.mxu0
        %v1988 = vadd.f32 0.0, %v1987
        %v1989 = vpop.f32.mrf.mxu0
        %v1990 = vadd.f32 0.0, %v1989
        %1991 = vmatmul.bf16.gmra.mxu0 %v1722
        %v1992 = vpop.f32.mrf.mxu0
        %v1993 = vadd.f32 0.0, %v1992
        %v1994 = vpop.f32.mrf.mxu0
        %v1995 = vadd.f32 0.0, %v1994
        %1996 = vmatmul.bf16.gmra.mxu0 %v1908
        %v1997 = vpop.f32.mrf.mxu0
        %v1998 = vadd.f32 0.0, %v1997
        %v1999 = vpop.f32.mrf.mxu0
        %v2000 = vadd.f32 0.0, %v1999
        %2001 = vdwg.mxu0
        %v2002 = vadd.f32 %v1816, %v1923
        %v2003 = vadd.f32 %v1817, %v1925
        %v2004 = vadd.f32 %v1818, %v1928
        %v2005 = vadd.f32 %v1819, %v1930
        %v2006 = vadd.f32 %v1820, %v1933
        %v2007 = vadd.f32 %v1821, %v1935
        %v2008 = vadd.f32 %v1822, %v1938
        %v2009 = vadd.f32 %v1823, %v1940
        %v2010 = vadd.f32 %v1824, %v1943
        %v2011 = vadd.f32 %v1825, %v1945
        %v2012 = vadd.f32 %v1826, %v1948
        %v2013 = vadd.f32 %v1827, %v1950
        %v2014 = vadd.f32 %v1828, %v1953
        %v2015 = vadd.f32 %v1829, %v1955
        %v2016 = vadd.f32 %v1830, %v1958
        %v2017 = vadd.f32 %v1831, %v1960
        %v2018 = vadd.f32 %v1832, %v1963
        %v2019 = vadd.f32 %v1833, %v1965
        %v2020 = vadd.f32 %v1834, %v1968
        %v2021 = vadd.f32 %v1835, %v1970
        %v2022 = vadd.f32 %v1836, %v1973
        %v2023 = vadd.f32 %v1837, %v1975
        %v2024 = vadd.f32 %v1838, %v1978
        %v2025 = vadd.f32 %v1839, %v1980
        %v2026 = vadd.f32 %v1840, %v1983
        %v2027 = vadd.f32 %v1841, %v1985
        %v2028 = vadd.f32 %v1842, %v1988
        %v2029 = vadd.f32 %v1843, %v1990
        %v2030 = vadd.f32 %v1844, %v1993
        %v2031 = vadd.f32 %v1845, %v1995
        %v2032 = vadd.f32 %v1846, %v1998
        %v2033 = vadd.f32 %v1847, %v2000
        %vm2050 = vcmask 1042432
        %vm2051 = vcmask 1046532
        %vm2052 = vmor %vm2050, %vm2051
        %v2053 = vrot.slane %v518, 5
        %v2054 = vrot.slane %v2053, 4
        %v2055 = vrot.slane %v519, 5
        %v2056 = vsel %vm2052, %v2054, %v2055
        %v2057 = vrot.slane %v2055, 4
        %v2058 = vrot.slane %v520, 5
        %v2059 = vsel %vm2052, %v2057, %v2058
        %v2060 = vrot.slane %v521, 5
        %v2061 = vrot.slane %v2060, 4
        %v2062 = vrot.slane %v522, 5
        %v2063 = vsel %vm2052, %v2061, %v2062
        %v2064 = vrot.slane %v2062, 4
        %v2065 = vrot.slane %v523, 5
        %v2066 = vsel %vm2052, %v2064, %v2065
        %v2067 = vrot.slane %v524, 5
        %v2068 = vrot.slane %v2067, 4
        %v2069 = vrot.slane %v525, 5
        %v2070 = vsel %vm2052, %v2068, %v2069
        %v2071 = vrot.slane %v2069, 4
        %v2072 = vrot.slane %v526, 5
        %v2073 = vsel %vm2052, %v2071, %v2072
        %v2074 = vrot.slane %v527, 5
        %v2075 = vrot.slane %v2074, 4
        %v2076 = vrot.slane %v528, 5
        %v2077 = vsel %vm2052, %v2075, %v2076
        %v2078 = vrot.slane %v2076, 4
        %v2079 = vrot.slane %v529, 5
        %v2080 = vsel %vm2052, %v2078, %v2079
        %v2081 = vrot.slane %v530, 5
        %v2082 = vrot.slane %v2081, 4
        %v2083 = vrot.slane %v531, 5
        %v2084 = vsel %vm2052, %v2082, %v2083
        %v2085 = vrot.slane %v2083, 4
        %v2086 = vrot.slane %v532, 5
        %v2087 = vsel %vm2052, %v2085, %v2086
        %v2088 = vrot.slane %v533, 5
        %v2089 = vrot.slane %v2088, 4
        %v2090 = vrot.slane %v534, 5
        %v2091 = vsel %vm2052, %v2089, %v2090
        %v2092 = vrot.slane %v2090, 4
        %v2093 = vrot.slane %v535, 5
        %v2094 = vsel %vm2052, %v2092, %v2093
        %v2095 = vrot.slane %v536, 5
        %v2096 = vrot.slane %v2095, 4
        %v2097 = vrot.slane %v537, 5
        %v2098 = vsel %vm2052, %v2096, %v2097
        %v2099 = vrot.slane %v2097, 4
        %v2100 = vrot.slane %v538, 5
        %v2101 = vsel %vm2052, %v2099, %v2100
        %v2102 = vrot.slane %v539, 5
        %v2103 = vrot.slane %v2102, 4
        %v2104 = vrot.slane %v540, 5
        %v2105 = vsel %vm2052, %v2103, %v2104
        %v2106 = vrot.slane %v2104, 4
        %v2107 = vrot.slane %v541, 5
        %v2108 = vsel %vm2052, %v2106, %v2107
        %v2109 = vrot.slane %v548, 5
        %v2110 = vrot.slane %v2109, 4
        %v2111 = vrot.slane %v549, 5
        %v2112 = vsel %vm2052, %v2110, %v2111
        %v2113 = vrot.slane %v2111, 4
        %v2114 = vrot.slane %v550, 5
        %v2115 = vsel %vm2052, %v2113, %v2114
        %v2116 = vrot.slane %v551, 5
        %v2117 = vrot.slane %v2116, 4
        %v2118 = vrot.slane %v552, 5
        %v2119 = vsel %vm2052, %v2117, %v2118
        %v2120 = vrot.slane %v2118, 4
        %v2121 = vrot.slane %v553, 5
        %v2122 = vsel %vm2052, %v2120, %v2121
        %v2123 = vrot.slane %v554, 5
        %v2124 = vrot.slane %v2123, 4
        %v2125 = vrot.slane %v555, 5
        %v2126 = vsel %vm2052, %v2124, %v2125
        %v2127 = vrot.slane %v2125, 4
        %v2128 = vrot.slane %v556, 5
        %v2129 = vsel %vm2052, %v2127, %v2128
        %v2130 = vrot.slane %v557, 5
        %v2131 = vrot.slane %v2130, 4
        %v2132 = vrot.slane %v558, 5
        %v2133 = vsel %vm2052, %v2131, %v2132
        %v2134 = vrot.slane %v2132, 4
        %v2135 = vrot.slane %v559, 5
        %v2136 = vsel %vm2052, %v2134, %v2135
        %v2137 = vrot.slane %v560, 5
        %v2138 = vrot.slane %v2137, 4
        %v2139 = vrot.slane %v561, 5
        %v2140 = vsel %vm2052, %v2138, %v2139
        %v2141 = vrot.slane %v2139, 4
        %v2142 = vrot.slane %v562, 5
        %v2143 = vsel %vm2052, %v2141, %v2142
        %v2144 = vrot.slane %v563, 5
        %v2145 = vrot.slane %v2144, 4
        %v2146 = vrot.slane %v564, 5
        %v2147 = vsel %vm2052, %v2145, %v2146
        %v2148 = vrot.slane %v2146, 4
        %v2149 = vrot.slane %v565, 5
        %v2150 = vsel %vm2052, %v2148, %v2149
        %v2151 = vrot.slane %v566, 5
        %v2152 = vrot.slane %v2151, 4
        %v2153 = vrot.slane %v567, 5
        %v2154 = vsel %vm2052, %v2152, %v2153
        %v2155 = vrot.slane %v2153, 4
        %v2156 = vrot.slane %v568, 5
        %v2157 = vsel %vm2052, %v2155, %v2156
        %v2158 = vrot.slane %v569, 5
        %v2159 = vrot.slane %v2158, 4
        %v2160 = vrot.slane %v570, 5
        %v2161 = vsel %vm2052, %v2159, %v2160
        %v2162 = vrot.slane %v2160, 4
        %v2163 = vrot.slane %v571, 5
        %v2164 = vsel %vm2052, %v2162, %v2163
        %s2165 = scalar_lea.vmem %s515, 8
        %v2166 = vld [vmem:[%s2165] sm:$0xf]
        %v2167 = vunpack.c.l.b16 %v2056
        %v2168 = vunpack.c.l.b16 %v2059
        %v2169 = vunpack.c.l.b16 %v2063
        %v2170 = vunpack.c.l.b16 %v2066
        %v2171 = vunpack.c.l.b16 %v2070
        %v2172 = vunpack.c.l.b16 %v2073
        %v2173 = vunpack.c.l.b16 %v2077
        %v2174 = vunpack.c.l.b16 %v2080
        %v2175 = vunpack.c.l.b16 %v2084
        %v2176 = vunpack.c.l.b16 %v2087
        %v2177 = vunpack.c.l.b16 %v2091
        %v2178 = vunpack.c.l.b16 %v2094
        %v2179 = vunpack.c.l.b16 %v2098
        %v2180 = vunpack.c.l.b16 %v2101
        %v2181 = vunpack.c.l.b16 %v2105
        %v2182 = vunpack.c.l.b16 %v2108
        %v2183 = vunpack.c.l.b16 %v2112
        %v2184 = vunpack.c.l.b16 %v2115
        %v2185 = vunpack.c.l.b16 %v2119
        %v2186 = vunpack.c.l.b16 %v2122
        %v2187 = vunpack.c.l.b16 %v2126
        %v2188 = vunpack.c.l.b16 %v2129
        %v2189 = vunpack.c.l.b16 %v2133
        %v2190 = vunpack.c.l.b16 %v2136
        %v2191 = vunpack.c.l.b16 %v2140
        %v2192 = vunpack.c.l.b16 %v2143
        %v2193 = vunpack.c.l.b16 %v2147
        %v2194 = vunpack.c.l.b16 %v2150
        %v2195 = vunpack.c.l.b16 %v2154
        %v2196 = vunpack.c.l.b16 %v2157
        %v2197 = vunpack.c.l.b16 %v2161
        %v2198 = vunpack.c.l.b16 %v2164
        %v2199 = vpack.c.b16 %v2168, %v2167
        %v2200 = vpack.c.b16 %v2170, %v2169
        %v2201 = vpack.c.b16 %v2172, %v2171
        %v2202 = vpack.c.b16 %v2174, %v2173
        %v2203 = vpack.c.b16 %v2176, %v2175
        %v2204 = vpack.c.b16 %v2178, %v2177
        %v2205 = vpack.c.b16 %v2180, %v2179
        %v2206 = vpack.c.b16 %v2182, %v2181
        %v2207 = vpack.c.b16 %v2184, %v2183
        %v2208 = vpack.c.b16 %v2186, %v2185
        %v2209 = vpack.c.b16 %v2188, %v2187
        %v2210 = vpack.c.b16 %v2190, %v2189
        %v2211 = vpack.c.b16 %v2192, %v2191
        %v2212 = vpack.c.b16 %v2194, %v2193
        %v2213 = vpack.c.b16 %v2196, %v2195
        %v2214 = vpack.c.b16 %v2198, %v2197
        %v2216 = vsel %vm661, %v2199, 0
        %v2219 = vsel %vm661, %v2200, 0
        %v2222 = vsel %vm661, %v2201, 0
        %v2225 = vsel %vm661, %v2202, 0
        %v2228 = vsel %vm661, %v2203, 0
        %v2231 = vsel %vm661, %v2204, 0
        %v2234 = vsel %vm661, %v2205, 0
        %v2237 = vsel %vm661, %v2206, 0
        %v2240 = vsel %vm661, %v2207, 0
        %v2243 = vsel %vm661, %v2208, 0
        %v2246 = vsel %vm661, %v2209, 0
        %v2249 = vsel %vm661, %v2210, 0
        %v2252 = vsel %vm661, %v2211, 0
        %v2255 = vsel %vm661, %v2212, 0
        %v2258 = vsel %vm661, %v2213, 0
        %v2261 = vsel %vm661, %v2214, 0
        %v2264 = vsel %vm710, %v2166, 0
        %2266 = vmatpush.bf16.msra.mxu0 0
        %2267 = vmatpush.bf16.msra.mxu0 0
        %2268 = vmatpush.bf16.msra.mxu0 0
        %2269 = vmatpush.bf16.msra.mxu0 0
        %2270 = vmatpush.bf16.msra.mxu0 0
        %2271 = vmatpush.bf16.msra.mxu0 0
        %2272 = vmatpush.bf16.msra.mxu0 0
        %2273 = vmatpush.bf16.msra.mxu0 %v2264
        %2274 = vmatmul.bf16.gmra.mxu0 %v2216
        %v2275 = vpop.f32.mrf.mxu0
        %v2276 = vadd.f32 0.0, %v2275
        %v2277 = vpop.f32.mrf.mxu0
        %v2278 = vadd.f32 0.0, %v2277
        %2279 = vmatmul.bf16.gmra.mxu0 %v2219
        %v2280 = vpop.f32.mrf.mxu0
        %v2281 = vadd.f32 0.0, %v2280
        %v2282 = vpop.f32.mrf.mxu0
        %v2283 = vadd.f32 0.0, %v2282
        %2284 = vmatmul.bf16.gmra.mxu0 %v2222
        %v2285 = vpop.f32.mrf.mxu0
        %v2286 = vadd.f32 0.0, %v2285
        %v2287 = vpop.f32.mrf.mxu0
        %v2288 = vadd.f32 0.0, %v2287
        %2289 = vmatmul.bf16.gmra.mxu0 %v2225
        %v2290 = vpop.f32.mrf.mxu0
        %v2291 = vadd.f32 0.0, %v2290
        %v2292 = vpop.f32.mrf.mxu0
        %v2293 = vadd.f32 0.0, %v2292
        %2294 = vmatmul.bf16.gmra.mxu0 %v2228
        %v2295 = vpop.f32.mrf.mxu0
        %v2296 = vadd.f32 0.0, %v2295
        %v2297 = vpop.f32.mrf.mxu0
        %v2298 = vadd.f32 0.0, %v2297
        %2299 = vmatmul.bf16.gmra.mxu0 %v2231
        %v2300 = vpop.f32.mrf.mxu0
        %v2301 = vadd.f32 0.0, %v2300
        %v2302 = vpop.f32.mrf.mxu0
        %v2303 = vadd.f32 0.0, %v2302
        %2304 = vmatmul.bf16.gmra.mxu0 %v2234
        %v2305 = vpop.f32.mrf.mxu0
        %v2306 = vadd.f32 0.0, %v2305
        %v2307 = vpop.f32.mrf.mxu0
        %v2308 = vadd.f32 0.0, %v2307
        %2309 = vmatmul.bf16.gmra.mxu0 %v2237
        %v2310 = vpop.f32.mrf.mxu0
        %v2311 = vadd.f32 0.0, %v2310
        %v2312 = vpop.f32.mrf.mxu0
        %v2313 = vadd.f32 0.0, %v2312
        %2314 = vmatmul.bf16.gmra.mxu0 %v2240
        %v2315 = vpop.f32.mrf.mxu0
        %v2316 = vadd.f32 0.0, %v2315
        %v2317 = vpop.f32.mrf.mxu0
        %v2318 = vadd.f32 0.0, %v2317
        %2319 = vmatmul.bf16.gmra.mxu0 %v2243
        %v2320 = vpop.f32.mrf.mxu0
        %v2321 = vadd.f32 0.0, %v2320
        %v2322 = vpop.f32.mrf.mxu0
        %v2323 = vadd.f32 0.0, %v2322
        %2324 = vmatmul.bf16.gmra.mxu0 %v2246
        %v2325 = vpop.f32.mrf.mxu0
        %v2326 = vadd.f32 0.0, %v2325
        %v2327 = vpop.f32.mrf.mxu0
        %v2328 = vadd.f32 0.0, %v2327
        %2329 = vmatmul.bf16.gmra.mxu0 %v2249
        %v2330 = vpop.f32.mrf.mxu0
        %v2331 = vadd.f32 0.0, %v2330
        %v2332 = vpop.f32.mrf.mxu0
        %v2333 = vadd.f32 0.0, %v2332
        %2334 = vmatmul.bf16.gmra.mxu0 %v2252
        %v2335 = vpop.f32.mrf.mxu0
        %v2336 = vadd.f32 0.0, %v2335
        %v2337 = vpop.f32.mrf.mxu0
        %v2338 = vadd.f32 0.0, %v2337
        %2339 = vmatmul.bf16.gmra.mxu0 %v2255
        %v2340 = vpop.f32.mrf.mxu0
        %v2341 = vadd.f32 0.0, %v2340
        %v2342 = vpop.f32.mrf.mxu0
        %v2343 = vadd.f32 0.0, %v2342
        %2344 = vmatmul.bf16.gmra.mxu0 %v2258
        %v2345 = vpop.f32.mrf.mxu0
        %v2346 = vadd.f32 0.0, %v2345
        %v2347 = vpop.f32.mrf.mxu0
        %v2348 = vadd.f32 0.0, %v2347
        %2349 = vmatmul.bf16.gmra.mxu0 %v2261
        %v2350 = vpop.f32.mrf.mxu0
        %v2351 = vadd.f32 0.0, %v2350
        %v2352 = vpop.f32.mrf.mxu0
        %v2353 = vadd.f32 0.0, %v2352
        %2354 = vdwg.mxu0
        %v2355 = vadd.f32 %v2002, %v2276
        %v2356 = vadd.f32 %v2003, %v2278
        %v2357 = vadd.f32 %v2004, %v2281
        %v2358 = vadd.f32 %v2005, %v2283
        %v2359 = vadd.f32 %v2006, %v2286
        %v2360 = vadd.f32 %v2007, %v2288
        %v2361 = vadd.f32 %v2008, %v2291
        %v2362 = vadd.f32 %v2009, %v2293
        %v2363 = vadd.f32 %v2010, %v2296
        %v2364 = vadd.f32 %v2011, %v2298
        %v2365 = vadd.f32 %v2012, %v2301
        %v2366 = vadd.f32 %v2013, %v2303
        %v2367 = vadd.f32 %v2014, %v2306
        %v2368 = vadd.f32 %v2015, %v2308
        %v2369 = vadd.f32 %v2016, %v2311
        %v2370 = vadd.f32 %v2017, %v2313
        %v2371 = vadd.f32 %v2018, %v2316
        %v2372 = vadd.f32 %v2019, %v2318
        %v2373 = vadd.f32 %v2020, %v2321
        %v2374 = vadd.f32 %v2021, %v2323
        %v2375 = vadd.f32 %v2022, %v2326
        %v2376 = vadd.f32 %v2023, %v2328
        %v2377 = vadd.f32 %v2024, %v2331
        %v2378 = vadd.f32 %v2025, %v2333
        %v2379 = vadd.f32 %v2026, %v2336
        %v2380 = vadd.f32 %v2027, %v2338
        %v2381 = vadd.f32 %v2028, %v2341
        %v2382 = vadd.f32 %v2029, %v2343
        %v2383 = vadd.f32 %v2030, %v2346
        %v2384 = vadd.f32 %v2031, %v2348
        %v2385 = vadd.f32 %v2032, %v2351
        %v2386 = vadd.f32 %v2033, %v2353
        %v2389 = vrot.slane %v542, 5
        %v2390 = vrot.slane %v2389, 4
        %v2391 = vrot.slane %v543, 5
        %v2392 = vsel %vm2052, %v2390, %v2391
        %v2393 = vrot.slane %v2391, 4
        %v2394 = vrot.slane %v544, 5
        %v2395 = vsel %vm2052, %v2393, %v2394
        %v2396 = vrot.slane %v572, 5
        %v2397 = vrot.slane %v2396, 4
        %v2398 = vrot.slane %v573, 5
        %v2399 = vsel %vm2052, %v2397, %v2398
        %v2400 = vrot.slane %v2398, 4
        %v2401 = vrot.slane %v574, 5
        %v2402 = vsel %vm2052, %v2400, %v2401
        %s2403 = scalar_lea.vmem %s515, 20
        %v2404 = vld [vmem:[%s2403] sm:$0xf]
        %v2405 = vunpack.c.l.b16 %v2392
        %v2406 = vunpack.c.l.b16 %v2395
        %v2407 = vunpack.c.l.b16 %v2399
        %v2408 = vunpack.c.l.b16 %v2402
        %v2409 = vpack.c.b16 %v2406, %v2405
        %v2410 = vpack.c.b16 %v2408, %v2407
        %v2412 = vsel %vm661, %v2409, 0
        %v2415 = vsel %vm661, %v2410, 0
        %v2418 = vsel %vm710, %v2404, 0
        %2420 = vmatpush.bf16.msra.mxu0 0
        %2421 = vmatpush.bf16.msra.mxu0 0
        %2422 = vmatpush.bf16.msra.mxu0 0
        %2423 = vmatpush.bf16.msra.mxu0 0
        %2424 = vmatpush.bf16.msra.mxu0 0
        %2425 = vmatpush.bf16.msra.mxu0 0
        %2426 = vmatpush.bf16.msra.mxu0 0
        %2427 = vmatpush.bf16.msra.mxu0 %v2418
        %2428 = vmatmul.bf16.gmra.mxu0 %v2219
        %v2429 = vpop.f32.mrf.mxu0
        %v2430 = vadd.f32 0.0, %v2429
        %v2431 = vpop.f32.mrf.mxu0
        %v2432 = vadd.f32 0.0, %v2431
        %2433 = vmatmul.bf16.gmra.mxu0 %v2222
        %v2434 = vpop.f32.mrf.mxu0
        %v2435 = vadd.f32 0.0, %v2434
        %v2436 = vpop.f32.mrf.mxu0
        %v2437 = vadd.f32 0.0, %v2436
        %2438 = vmatmul.bf16.gmra.mxu0 %v2225
        %v2439 = vpop.f32.mrf.mxu0
        %v2440 = vadd.f32 0.0, %v2439
        %v2441 = vpop.f32.mrf.mxu0
        %v2442 = vadd.f32 0.0, %v2441
        %2443 = vmatmul.bf16.gmra.mxu0 %v2228
        %v2444 = vpop.f32.mrf.mxu0
        %v2445 = vadd.f32 0.0, %v2444
        %v2446 = vpop.f32.mrf.mxu0
        %v2447 = vadd.f32 0.0, %v2446
        %2448 = vmatmul.bf16.gmra.mxu0 %v2231
        %v2449 = vpop.f32.mrf.mxu0
        %v2450 = vadd.f32 0.0, %v2449
        %v2451 = vpop.f32.mrf.mxu0
        %v2452 = vadd.f32 0.0, %v2451
        %2453 = vmatmul.bf16.gmra.mxu0 %v2234
        %v2454 = vpop.f32.mrf.mxu0
        %v2455 = vadd.f32 0.0, %v2454
        %v2456 = vpop.f32.mrf.mxu0
        %v2457 = vadd.f32 0.0, %v2456
        %2458 = vmatmul.bf16.gmra.mxu0 %v2237
        %v2459 = vpop.f32.mrf.mxu0
        %v2460 = vadd.f32 0.0, %v2459
        %v2461 = vpop.f32.mrf.mxu0
        %v2462 = vadd.f32 0.0, %v2461
        %2463 = vmatmul.bf16.gmra.mxu0 %v2412
        %v2464 = vpop.f32.mrf.mxu0
        %v2465 = vadd.f32 0.0, %v2464
        %v2466 = vpop.f32.mrf.mxu0
        %v2467 = vadd.f32 0.0, %v2466
        %2468 = vmatmul.bf16.gmra.mxu0 %v2243
        %v2469 = vpop.f32.mrf.mxu0
        %v2470 = vadd.f32 0.0, %v2469
        %v2471 = vpop.f32.mrf.mxu0
        %v2472 = vadd.f32 0.0, %v2471
        %2473 = vmatmul.bf16.gmra.mxu0 %v2246
        %v2474 = vpop.f32.mrf.mxu0
        %v2475 = vadd.f32 0.0, %v2474
        %v2476 = vpop.f32.mrf.mxu0
        %v2477 = vadd.f32 0.0, %v2476
        %2478 = vmatmul.bf16.gmra.mxu0 %v2249
        %v2479 = vpop.f32.mrf.mxu0
        %v2480 = vadd.f32 0.0, %v2479
        %v2481 = vpop.f32.mrf.mxu0
        %v2482 = vadd.f32 0.0, %v2481
        %2483 = vmatmul.bf16.gmra.mxu0 %v2252
        %v2484 = vpop.f32.mrf.mxu0
        %v2485 = vadd.f32 0.0, %v2484
        %v2486 = vpop.f32.mrf.mxu0
        %v2487 = vadd.f32 0.0, %v2486
        %2488 = vmatmul.bf16.gmra.mxu0 %v2255
        %v2489 = vpop.f32.mrf.mxu0
        %v2490 = vadd.f32 0.0, %v2489
        %v2491 = vpop.f32.mrf.mxu0
        %v2492 = vadd.f32 0.0, %v2491
        %2493 = vmatmul.bf16.gmra.mxu0 %v2258
        %v2494 = vpop.f32.mrf.mxu0
        %v2495 = vadd.f32 0.0, %v2494
        %v2496 = vpop.f32.mrf.mxu0
        %v2497 = vadd.f32 0.0, %v2496
        %2498 = vmatmul.bf16.gmra.mxu0 %v2261
        %v2499 = vpop.f32.mrf.mxu0
        %v2500 = vadd.f32 0.0, %v2499
        %v2501 = vpop.f32.mrf.mxu0
        %v2502 = vadd.f32 0.0, %v2501
        %2503 = vmatmul.bf16.gmra.mxu0 %v2415
        %v2504 = vpop.f32.mrf.mxu0
        %v2505 = vadd.f32 0.0, %v2504
        %v2506 = vpop.f32.mrf.mxu0
        %v2507 = vadd.f32 0.0, %v2506
        %2508 = vdwg.mxu0
        %v2509 = vadd.f32 %v2355, %v2430
        %v2510 = vadd.f32 %v2356, %v2432
        %v2511 = vadd.f32 %v2357, %v2435
        %v2512 = vadd.f32 %v2358, %v2437
        %v2513 = vadd.f32 %v2359, %v2440
        %v2514 = vadd.f32 %v2360, %v2442
        %v2515 = vadd.f32 %v2361, %v2445
        %v2516 = vadd.f32 %v2362, %v2447
        %v2517 = vadd.f32 %v2363, %v2450
        %v2518 = vadd.f32 %v2364, %v2452
        %v2519 = vadd.f32 %v2365, %v2455
        %v2520 = vadd.f32 %v2366, %v2457
        %v2521 = vadd.f32 %v2367, %v2460
        %v2522 = vadd.f32 %v2368, %v2462
        %v2523 = vadd.f32 %v2369, %v2465
        %v2524 = vadd.f32 %v2370, %v2467
        %v2525 = vadd.f32 %v2371, %v2470
        %v2526 = vadd.f32 %v2372, %v2472
        %v2527 = vadd.f32 %v2373, %v2475
        %v2528 = vadd.f32 %v2374, %v2477
        %v2529 = vadd.f32 %v2375, %v2480
        %v2530 = vadd.f32 %v2376, %v2482
        %v2531 = vadd.f32 %v2377, %v2485
        %v2532 = vadd.f32 %v2378, %v2487
        %v2533 = vadd.f32 %v2379, %v2490
        %v2534 = vadd.f32 %v2380, %v2492
        %v2535 = vadd.f32 %v2381, %v2495
        %v2536 = vadd.f32 %v2382, %v2497
        %v2537 = vadd.f32 %v2383, %v2500
        %v2538 = vadd.f32 %v2384, %v2502
        %v2539 = vadd.f32 %v2385, %v2505
        %v2540 = vadd.f32 %v2386, %v2507
        %v2543 = vrot.slane %v545, 5
        %v2544 = vrot.slane %v2543, 4
        %v2545 = vrot.slane %v546, 5
        %v2546 = vsel %vm2052, %v2544, %v2545
        %v2547 = vrot.slane %v2545, 4
        %v2548 = vrot.slane %v547, 5
        %v2549 = vsel %vm2052, %v2547, %v2548
        %v2550 = vrot.slane %v575, 5
        %v2551 = vrot.slane %v2550, 4
        %v2552 = vrot.slane %v576, 5
        %v2553 = vsel %vm2052, %v2551, %v2552
        %v2554 = vrot.slane %v2552, 4
        %v2555 = vrot.slane %v577, 5
        %v2556 = vsel %vm2052, %v2554, %v2555
        %s2557 = scalar_lea.vmem %s515, 32
        %v2558 = vld [vmem:[%s2557] sm:$0xf]
        %v2559 = vunpack.c.l.b16 %v2546
        %v2560 = vunpack.c.l.b16 %v2549
        %v2561 = vunpack.c.l.b16 %v2553
        %v2562 = vunpack.c.l.b16 %v2556
        %v2563 = vpack.c.b16 %v2560, %v2559
        %v2564 = vpack.c.b16 %v2562, %v2561
        %v2566 = vsel %vm661, %v2563, 0
        %v2569 = vsel %vm661, %v2564, 0
        %v2572 = vsel %vm710, %v2558, 0
        %2574 = vmatpush.bf16.msra.mxu0 0
        %2575 = vmatpush.bf16.msra.mxu0 0
        %2576 = vmatpush.bf16.msra.mxu0 0
        %2577 = vmatpush.bf16.msra.mxu0 0
        %2578 = vmatpush.bf16.msra.mxu0 0
        %2579 = vmatpush.bf16.msra.mxu0 0
        %2580 = vmatpush.bf16.msra.mxu0 0
        %2581 = vmatpush.bf16.msra.mxu0 %v2572
        %2582 = vmatmul.bf16.gmra.mxu0 %v2222
        %v2583 = vpop.f32.mrf.mxu0
        %v2584 = vadd.f32 0.0, %v2583
        %v2585 = vpop.f32.mrf.mxu0
        %v2586 = vadd.f32 0.0, %v2585
        %2587 = vmatmul.bf16.gmra.mxu0 %v2225
        %v2588 = vpop.f32.mrf.mxu0
        %v2589 = vadd.f32 0.0, %v2588
        %v2590 = vpop.f32.mrf.mxu0
        %v2591 = vadd.f32 0.0, %v2590
        %2592 = vmatmul.bf16.gmra.mxu0 %v2228
        %v2593 = vpop.f32.mrf.mxu0
        %v2594 = vadd.f32 0.0, %v2593
        %v2595 = vpop.f32.mrf.mxu0
        %v2596 = vadd.f32 0.0, %v2595
        %2597 = vmatmul.bf16.gmra.mxu0 %v2231
        %v2598 = vpop.f32.mrf.mxu0
        %v2599 = vadd.f32 0.0, %v2598
        %v2600 = vpop.f32.mrf.mxu0
        %v2601 = vadd.f32 0.0, %v2600
        %2602 = vmatmul.bf16.gmra.mxu0 %v2234
        %v2603 = vpop.f32.mrf.mxu0
        %v2604 = vadd.f32 0.0, %v2603
        %v2605 = vpop.f32.mrf.mxu0
        %v2606 = vadd.f32 0.0, %v2605
        %2607 = vmatmul.bf16.gmra.mxu0 %v2237
        %v2608 = vpop.f32.mrf.mxu0
        %v2609 = vadd.f32 0.0, %v2608
        %v2610 = vpop.f32.mrf.mxu0
        %v2611 = vadd.f32 0.0, %v2610
        %2612 = vmatmul.bf16.gmra.mxu0 %v2412
        %v2613 = vpop.f32.mrf.mxu0
        %v2614 = vadd.f32 0.0, %v2613
        %v2615 = vpop.f32.mrf.mxu0
        %v2616 = vadd.f32 0.0, %v2615
        %2617 = vmatmul.bf16.gmra.mxu0 %v2566
        %v2618 = vpop.f32.mrf.mxu0
        %v2619 = vadd.f32 0.0, %v2618
        %v2620 = vpop.f32.mrf.mxu0
        %v2621 = vadd.f32 0.0, %v2620
        %2622 = vmatmul.bf16.gmra.mxu0 %v2246
        %v2623 = vpop.f32.mrf.mxu0
        %v2624 = vadd.f32 0.0, %v2623
        %v2625 = vpop.f32.mrf.mxu0
        %v2626 = vadd.f32 0.0, %v2625
        %2627 = vmatmul.bf16.gmra.mxu0 %v2249
        %v2628 = vpop.f32.mrf.mxu0
        %v2629 = vadd.f32 0.0, %v2628
        %v2630 = vpop.f32.mrf.mxu0
        %v2631 = vadd.f32 0.0, %v2630
        %2632 = vmatmul.bf16.gmra.mxu0 %v2252
        %v2633 = vpop.f32.mrf.mxu0
        %v2634 = vadd.f32 0.0, %v2633
        %v2635 = vpop.f32.mrf.mxu0
        %v2636 = vadd.f32 0.0, %v2635
        %2637 = vmatmul.bf16.gmra.mxu0 %v2255
        %v2638 = vpop.f32.mrf.mxu0
        %v2639 = vadd.f32 0.0, %v2638
        %v2640 = vpop.f32.mrf.mxu0
        %v2641 = vadd.f32 0.0, %v2640
        %2642 = vmatmul.bf16.gmra.mxu0 %v2258
        %v2643 = vpop.f32.mrf.mxu0
        %v2644 = vadd.f32 0.0, %v2643
        %v2645 = vpop.f32.mrf.mxu0
        %v2646 = vadd.f32 0.0, %v2645
        %2647 = vmatmul.bf16.gmra.mxu0 %v2261
        %v2648 = vpop.f32.mrf.mxu0
        %v2649 = vadd.f32 0.0, %v2648
        %v2650 = vpop.f32.mrf.mxu0
        %v2651 = vadd.f32 0.0, %v2650
        %2652 = vmatmul.bf16.gmra.mxu0 %v2415
        %v2653 = vpop.f32.mrf.mxu0
        %v2654 = vadd.f32 0.0, %v2653
        %v2655 = vpop.f32.mrf.mxu0
        %v2656 = vadd.f32 0.0, %v2655
        %2657 = vmatmul.bf16.gmra.mxu0 %v2569
        %v2658 = vpop.f32.mrf.mxu0
        %v2659 = vadd.f32 0.0, %v2658
        %v2660 = vpop.f32.mrf.mxu0
        %v2661 = vadd.f32 0.0, %v2660
        %2662 = vdwg.mxu0
        %v2663 = vadd.f32 %v2509, %v2584
        %v2664 = vadd.f32 %v2510, %v2586
        %v2665 = vadd.f32 %v2511, %v2589
        %v2666 = vadd.f32 %v2512, %v2591
        %v2667 = vadd.f32 %v2513, %v2594
        %v2668 = vadd.f32 %v2514, %v2596
        %v2669 = vadd.f32 %v2515, %v2599
        %v2670 = vadd.f32 %v2516, %v2601
        %v2671 = vadd.f32 %v2517, %v2604
        %v2672 = vadd.f32 %v2518, %v2606
        %v2673 = vadd.f32 %v2519, %v2609
        %v2674 = vadd.f32 %v2520, %v2611
        %v2675 = vadd.f32 %v2521, %v2614
        %v2676 = vadd.f32 %v2522, %v2616
        %v2677 = vadd.f32 %v2523, %v2619
        %v2678 = vadd.f32 %v2524, %v2621
        %v2679 = vadd.f32 %v2525, %v2624
        %v2680 = vadd.f32 %v2526, %v2626
        %v2681 = vadd.f32 %v2527, %v2629
        %v2682 = vadd.f32 %v2528, %v2631
        %v2683 = vadd.f32 %v2529, %v2634
        %v2684 = vadd.f32 %v2530, %v2636
        %v2685 = vadd.f32 %v2531, %v2639
        %v2686 = vadd.f32 %v2532, %v2641
        %v2687 = vadd.f32 %v2533, %v2644
        %v2688 = vadd.f32 %v2534, %v2646
        %v2689 = vadd.f32 %v2535, %v2649
        %v2690 = vadd.f32 %v2536, %v2651
        %v2691 = vadd.f32 %v2537, %v2654
        %v2692 = vadd.f32 %v2538, %v2656
        %v2693 = vadd.f32 %v2539, %v2659
        %v2694 = vadd.f32 %v2540, %v2661
        %p2695 = scmp.eq.s32.totalorder %s28, 0
        // Predicated region
        $region70: #{tpu_custom_call.1} parent=64 // pred_check
          %p2696 = pneg %p2695
        $region71: #{tpu_custom_call.1} parent=64 // pred_check_branch
          %2698 = sbr.rel (%p2696) target = $region73
        $region72: #{tpu_custom_call.1} parent=64 // pred_region
          %vm2699 = vcmask 130048
          %2700 = vst.msk [vmem:[%s500] sm:$0xff] %vm2699, %v2663
          %2701 = vst.msk [vmem:[%s500 + $0x8] sm:$0xff] %vm2699, %v2664
          %2702 = vst.msk [vmem:[%s500 + $0x10] sm:$0xff] %vm2699, %v2665
          %2703 = vst.msk [vmem:[%s500 + $0x18] sm:$0xff] %vm2699, %v2666
          %2704 = vst.msk [vmem:[%s500 + $0x20] sm:$0xff] %vm2699, %v2667
          %2705 = vst.msk [vmem:[%s500 + $0x28] sm:$0xff] %vm2699, %v2668
          %2706 = vst.msk [vmem:[%s500 + $0x30] sm:$0xff] %vm2699, %v2669
          %2707 = vst.msk [vmem:[%s500 + $0x38] sm:$0xff] %vm2699, %v2670
          %2708 = vst.msk [vmem:[%s500 + $0x40] sm:$0xff] %vm2699, %v2671
          %2709 = vst.msk [vmem:[%s500 + $0x48] sm:$0xff] %vm2699, %v2672
          %2710 = vst.msk [vmem:[%s500 + $0x50] sm:$0xff] %vm2699, %v2673
          %2711 = vst.msk [vmem:[%s500 + $0x58] sm:$0xff] %vm2699, %v2674
          %2712 = vst.msk [vmem:[%s500 + $0x60] sm:$0xff] %vm2699, %v2675
          %2713 = vst.msk [vmem:[%s500 + $0x68] sm:$0xff] %vm2699, %v2676
          %2714 = vst.msk [vmem:[%s500 + $0x70] sm:$0xff] %vm2699, %v2677
          %2715 = vst.msk [vmem:[%s500 + $0x78] sm:$0xff] %vm2699, %v2678
          %2716 = vst.msk [vmem:[%s500 + $0x80] sm:$0xff] %vm2699, %v2679
          %2717 = vst.msk [vmem:[%s500 + $0x88] sm:$0xff] %vm2699, %v2680
          %2718 = vst.msk [vmem:[%s500 + $0x90] sm:$0xff] %vm2699, %v2681
          %2719 = vst.msk [vmem:[%s500 + $0x98] sm:$0xff] %vm2699, %v2682
          %2720 = vst.msk [vmem:[%s500 + $0xa0] sm:$0xff] %vm2699, %v2683
          %2721 = vst.msk [vmem:[%s500 + $0xa8] sm:$0xff] %vm2699, %v2684
          %2722 = vst.msk [vmem:[%s500 + $0xb0] sm:$0xff] %vm2699, %v2685
          %2723 = vst.msk [vmem:[%s500 + $0xb8] sm:$0xff] %vm2699, %v2686
          %2724 = vst.msk [vmem:[%s500 + $0xc0] sm:$0xff] %vm2699, %v2687
          %2725 = vst.msk [vmem:[%s500 + $0xc8] sm:$0xff] %vm2699, %v2688
          %2726 = vst.msk [vmem:[%s500 + $0xd0] sm:$0xff] %vm2699, %v2689
          %2727 = vst.msk [vmem:[%s500 + $0xd8] sm:$0xff] %vm2699, %v2690
          %2728 = vst.msk [vmem:[%s500 + $0xe0] sm:$0xff] %vm2699, %v2691
          %2729 = vst.msk [vmem:[%s500 + $0xe8] sm:$0xff] %vm2699, %v2692
          %2730 = vst.msk [vmem:[%s500 + $0xf0] sm:$0xff] %vm2699, %v2693
          %2731 = vst.msk [vmem:[%s500 + $0xf8] sm:$0xff] %vm2699, %v2694
        $region73: #{tpu_custom_call.1} parent=64 // pred_fallthru
          _
        %p2732 = scmp.gt.s32.totalorder %s28, 0
        // Predicated region
        $region74: #{tpu_custom_call.1} parent=64 // pred_check
          %p2733 = pneg %p2732
        $region75: #{tpu_custom_call.1} parent=64 // pred_check_branch
          %2735 = sbr.rel (%p2733) target = $region77
        $region76: #{tpu_custom_call.1} parent=64 // pred_region
          %v2736 = vld [vmem:[%s500] sm:$0xff]
          %v2737 = vld [vmem:[%s500 + $0x8] sm:$0xff]
          %v2738 = vld [vmem:[%s500 + $0x10] sm:$0xff]
          %v2739 = vld [vmem:[%s500 + $0x18] sm:$0xff]
          %v2740 = vld [vmem:[%s500 + $0x20] sm:$0xff]
          %v2741 = vld [vmem:[%s500 + $0x28] sm:$0xff]
          %v2742 = vld [vmem:[%s500 + $0x30] sm:$0xff]
          %v2743 = vld [vmem:[%s500 + $0x38] sm:$0xff]
          %v2744 = vld [vmem:[%s500 + $0x40] sm:$0xff]
          %v2745 = vld [vmem:[%s500 + $0x48] sm:$0xff]
          %v2746 = vld [vmem:[%s500 + $0x50] sm:$0xff]
          %v2747 = vld [vmem:[%s500 + $0x58] sm:$0xff]
          %v2748 = vld [vmem:[%s500 + $0x60] sm:$0xff]
          %v2749 = vld [vmem:[%s500 + $0x68] sm:$0xff]
          %v2750 = vld [vmem:[%s500 + $0x70] sm:$0xff]
          %v2751 = vld [vmem:[%s500 + $0x78] sm:$0xff]
          %v2752 = vld [vmem:[%s500 + $0x80] sm:$0xff]
          %v2753 = vld [vmem:[%s500 + $0x88] sm:$0xff]
          %v2754 = vld [vmem:[%s500 + $0x90] sm:$0xff]
          %v2755 = vld [vmem:[%s500 + $0x98] sm:$0xff]
          %v2756 = vld [vmem:[%s500 + $0xa0] sm:$0xff]
          %v2757 = vld [vmem:[%s500 + $0xa8] sm:$0xff]
          %v2758 = vld [vmem:[%s500 + $0xb0] sm:$0xff]
          %v2759 = vld [vmem:[%s500 + $0xb8] sm:$0xff]
          %v2760 = vld [vmem:[%s500 + $0xc0] sm:$0xff]
          %v2761 = vld [vmem:[%s500 + $0xc8] sm:$0xff]
          %v2762 = vld [vmem:[%s500 + $0xd0] sm:$0xff]
          %v2763 = vld [vmem:[%s500 + $0xd8] sm:$0xff]
          %v2764 = vld [vmem:[%s500 + $0xe0] sm:$0xff]
          %v2765 = vld [vmem:[%s500 + $0xe8] sm:$0xff]
          %v2766 = vld [vmem:[%s500 + $0xf0] sm:$0xff]
          %v2767 = vld [vmem:[%s500 + $0xf8] sm:$0xff]
          %v2768 = vadd.f32 %v2736, %v2663
          %v2769 = vadd.f32 %v2737, %v2664
          %v2770 = vadd.f32 %v2738, %v2665
          %v2771 = vadd.f32 %v2739, %v2666
          %v2772 = vadd.f32 %v2740, %v2667
          %v2773 = vadd.f32 %v2741, %v2668
          %v2774 = vadd.f32 %v2742, %v2669
          %v2775 = vadd.f32 %v2743, %v2670
          %v2776 = vadd.f32 %v2744, %v2671
          %v2777 = vadd.f32 %v2745, %v2672
          %v2778 = vadd.f32 %v2746, %v2673
          %v2779 = vadd.f32 %v2747, %v2674
          %v2780 = vadd.f32 %v2748, %v2675
          %v2781 = vadd.f32 %v2749, %v2676
          %v2782 = vadd.f32 %v2750, %v2677
          %v2783 = vadd.f32 %v2751, %v2678
          %v2784 = vadd.f32 %v2752, %v2679
          %v2785 = vadd.f32 %v2753, %v2680
          %v2786 = vadd.f32 %v2754, %v2681
          %v2787 = vadd.f32 %v2755, %v2682
          %v2788 = vadd.f32 %v2756, %v2683
          %v2789 = vadd.f32 %v2757, %v2684
          %v2790 = vadd.f32 %v2758, %v2685
          %v2791 = vadd.f32 %v2759, %v2686
          %v2792 = vadd.f32 %v2760, %v2687
          %v2793 = vadd.f32 %v2761, %v2688
          %v2794 = vadd.f32 %v2762, %v2689
          %v2795 = vadd.f32 %v2763, %v2690
          %v2796 = vadd.f32 %v2764, %v2691
          %v2797 = vadd.f32 %v2765, %v2692
          %v2798 = vadd.f32 %v2766, %v2693
          %v2799 = vadd.f32 %v2767, %v2694
          %vm2800 = vcmask 130048
          %2801 = vst.msk [vmem:[%s500] sm:$0xff] %vm2800, %v2768
          %2802 = vst.msk [vmem:[%s500 + $0x8] sm:$0xff] %vm2800, %v2769
          %2803 = vst.msk [vmem:[%s500 + $0x10] sm:$0xff] %vm2800, %v2770
          %2804 = vst.msk [vmem:[%s500 + $0x18] sm:$0xff] %vm2800, %v2771
          %2805 = vst.msk [vmem:[%s500 + $0x20] sm:$0xff] %vm2800, %v2772
          %2806 = vst.msk [vmem:[%s500 + $0x28] sm:$0xff] %vm2800, %v2773
          %2807 = vst.msk [vmem:[%s500 + $0x30] sm:$0xff] %vm2800, %v2774
          %2808 = vst.msk [vmem:[%s500 + $0x38] sm:$0xff] %vm2800, %v2775
          %2809 = vst.msk [vmem:[%s500 + $0x40] sm:$0xff] %vm2800, %v2776
          %2810 = vst.msk [vmem:[%s500 + $0x48] sm:$0xff] %vm2800, %v2777
          %2811 = vst.msk [vmem:[%s500 + $0x50] sm:$0xff] %vm2800, %v2778
          %2812 = vst.msk [vmem:[%s500 + $0x58] sm:$0xff] %vm2800, %v2779
          %2813 = vst.msk [vmem:[%s500 + $0x60] sm:$0xff] %vm2800, %v2780
          %2814 = vst.msk [vmem:[%s500 + $0x68] sm:$0xff] %vm2800, %v2781
          %2815 = vst.msk [vmem:[%s500 + $0x70] sm:$0xff] %vm2800, %v2782
          %2816 = vst.msk [vmem:[%s500 + $0x78] sm:$0xff] %vm2800, %v2783
          %2817 = vst.msk [vmem:[%s500 + $0x80] sm:$0xff] %vm2800, %v2784
          %2818 = vst.msk [vmem:[%s500 + $0x88] sm:$0xff] %vm2800, %v2785
          %2819 = vst.msk [vmem:[%s500 + $0x90] sm:$0xff] %vm2800, %v2786
          %2820 = vst.msk [vmem:[%s500 + $0x98] sm:$0xff] %vm2800, %v2787
          %2821 = vst.msk [vmem:[%s500 + $0xa0] sm:$0xff] %vm2800, %v2788
          %2822 = vst.msk [vmem:[%s500 + $0xa8] sm:$0xff] %vm2800, %v2789
          %2823 = vst.msk [vmem:[%s500 + $0xb0] sm:$0xff] %vm2800, %v2790
          %2824 = vst.msk [vmem:[%s500 + $0xb8] sm:$0xff] %vm2800, %v2791
          %2825 = vst.msk [vmem:[%s500 + $0xc0] sm:$0xff] %vm2800, %v2792
          %2826 = vst.msk [vmem:[%s500 + $0xc8] sm:$0xff] %vm2800, %v2793
          %2827 = vst.msk [vmem:[%s500 + $0xd0] sm:$0xff] %vm2800, %v2794
          %2828 = vst.msk [vmem:[%s500 + $0xd8] sm:$0xff] %vm2800, %v2795
          %2829 = vst.msk [vmem:[%s500 + $0xe0] sm:$0xff] %vm2800, %v2796
          %2830 = vst.msk [vmem:[%s500 + $0xe8] sm:$0xff] %vm2800, %v2797
          %2831 = vst.msk [vmem:[%s500 + $0xf0] sm:$0xff] %vm2800, %v2798
          %2832 = vst.msk [vmem:[%s500 + $0xf8] sm:$0xff] %vm2800, %v2799
        $region77: #{tpu_custom_call.1} parent=64 // pred_fallthru
          _
        // Predicated region
        $region78: #{tpu_custom_call.1} parent=64 // pred_check
          %p2833 = pneg %p2695
        $region79: #{tpu_custom_call.1} parent=64 // pred_check_branch
          %2835 = sbr.rel (%p2833) target = $region81
        $region80: #{tpu_custom_call.1} parent=64 // pred_region
          %v2836 = vld [vmem:[%s500] sm:$0xff]
          %v2837 = vld [vmem:[%s500 + $0x8] sm:$0xff]
          %v2838 = vld [vmem:[%s500 + $0x10] sm:$0xff]
          %v2839 = vld [vmem:[%s500 + $0x18] sm:$0xff]
          %v2840 = vld [vmem:[%s500 + $0x20] sm:$0xff]
          %v2841 = vld [vmem:[%s500 + $0x28] sm:$0xff]
          %v2842 = vld [vmem:[%s500 + $0x30] sm:$0xff]
          %v2843 = vld [vmem:[%s500 + $0x38] sm:$0xff]
          %v2844 = vld [vmem:[%s500 + $0x40] sm:$0xff]
          %v2845 = vld [vmem:[%s500 + $0x48] sm:$0xff]
          %v2846 = vld [vmem:[%s500 + $0x50] sm:$0xff]
          %v2847 = vld [vmem:[%s500 + $0x58] sm:$0xff]
          %v2848 = vld [vmem:[%s500 + $0x60] sm:$0xff]
          %v2849 = vld [vmem:[%s500 + $0x68] sm:$0xff]
          %v2850 = vld [vmem:[%s500 + $0x70] sm:$0xff]
          %v2851 = vld [vmem:[%s500 + $0x78] sm:$0xff]
          %v2852 = vld [vmem:[%s500 + $0x80] sm:$0xff]
          %v2853 = vld [vmem:[%s500 + $0x88] sm:$0xff]
          %v2854 = vld [vmem:[%s500 + $0x90] sm:$0xff]
          %v2855 = vld [vmem:[%s500 + $0x98] sm:$0xff]
          %v2856 = vld [vmem:[%s500 + $0xa0] sm:$0xff]
          %v2857 = vld [vmem:[%s500 + $0xa8] sm:$0xff]
          %v2858 = vld [vmem:[%s500 + $0xb0] sm:$0xff]
          %v2859 = vld [vmem:[%s500 + $0xb8] sm:$0xff]
          %v2860 = vld [vmem:[%s500 + $0xc0] sm:$0xff]
          %v2861 = vld [vmem:[%s500 + $0xc8] sm:$0xff]
          %v2862 = vld [vmem:[%s500 + $0xd0] sm:$0xff]
          %v2863 = vld [vmem:[%s500 + $0xd8] sm:$0xff]
          %v2864 = vld [vmem:[%s500 + $0xe0] sm:$0xff]
          %v2865 = vld [vmem:[%s500 + $0xe8] sm:$0xff]
          %v2866 = vld [vmem:[%s500 + $0xf0] sm:$0xff]
          %v2867 = vld [vmem:[%s500 + $0xf8] sm:$0xff]
          %vm2868 = vcmask 130048
          %v2869 = vsel %vm2868, %v2836, 0.0
          %v2870 = vsel %vm2868, %v2837, 0.0
          %v2871 = vadd.f32 %v2869, %v2870
          %v2872 = vsel %vm2868, %v2838, 0.0
          %v2873 = vadd.f32 %v2871, %v2872
          %v2874 = vsel %vm2868, %v2839, 0.0
          %v2875 = vadd.f32 %v2873, %v2874
          %v2876 = vsel %vm2868, %v2840, 0.0
          %v2877 = vadd.f32 %v2875, %v2876
          %v2878 = vsel %vm2868, %v2841, 0.0
          %v2879 = vadd.f32 %v2877, %v2878
          %v2880 = vsel %vm2868, %v2842, 0.0
          %v2881 = vadd.f32 %v2879, %v2880
          %v2882 = vsel %vm2868, %v2843, 0.0
          %v2883 = vadd.f32 %v2881, %v2882
          %v2884 = vsel %vm2868, %v2844, 0.0
          %v2885 = vadd.f32 %v2883, %v2884
          %v2886 = vsel %vm2868, %v2845, 0.0
          %v2887 = vadd.f32 %v2885, %v2886
          %v2888 = vsel %vm2868, %v2846, 0.0
          %v2889 = vadd.f32 %v2887, %v2888
          %v2890 = vsel %vm2868, %v2847, 0.0
          %v2891 = vadd.f32 %v2889, %v2890
          %v2892 = vsel %vm2868, %v2848, 0.0
          %v2893 = vadd.f32 %v2891, %v2892
          %v2894 = vsel %vm2868, %v2849, 0.0
          %v2895 = vadd.f32 %v2893, %v2894
          %v2896 = vsel %vm2868, %v2850, 0.0
          %v2897 = vadd.f32 %v2895, %v2896
          %v2898 = vsel %vm2868, %v2851, 0.0
          %v2899 = vadd.f32 %v2897, %v2898
          %v2900 = vsel %vm2868, %v2852, 0.0
          %v2901 = vadd.f32 %v2899, %v2900
          %v2902 = vsel %vm2868, %v2853, 0.0
          %v2903 = vadd.f32 %v2901, %v2902
          %v2904 = vsel %vm2868, %v2854, 0.0
          %v2905 = vadd.f32 %v2903, %v2904
          %v2906 = vsel %vm2868, %v2855, 0.0
          %v2907 = vadd.f32 %v2905, %v2906
          %v2908 = vsel %vm2868, %v2856, 0.0
          %v2909 = vadd.f32 %v2907, %v2908
          %v2910 = vsel %vm2868, %v2857, 0.0
          %v2911 = vadd.f32 %v2909, %v2910
          %v2912 = vsel %vm2868, %v2858, 0.0
          %v2913 = vadd.f32 %v2911, %v2912
          %v2914 = vsel %vm2868, %v2859, 0.0
          %v2915 = vadd.f32 %v2913, %v2914
          %v2916 = vsel %vm2868, %v2860, 0.0
          %v2917 = vadd.f32 %v2915, %v2916
          %v2918 = vsel %vm2868, %v2861, 0.0
          %v2919 = vadd.f32 %v2917, %v2918
          %v2920 = vsel %vm2868, %v2862, 0.0
          %v2921 = vadd.f32 %v2919, %v2920
          %v2922 = vsel %vm2868, %v2863, 0.0
          %v2923 = vadd.f32 %v2921, %v2922
          %v2924 = vsel %vm2868, %v2864, 0.0
          %v2925 = vadd.f32 %v2923, %v2924
          %v2926 = vsel %vm2868, %v2865, 0.0
          %v2927 = vadd.f32 %v2925, %v2926
          %v2928 = vsel %vm2868, %v2866, 0.0
          %v2929 = vadd.f32 %v2927, %v2928
          %v2930 = vsel %vm2868, %v2867, 0.0
          %v2931 = vadd.f32 %v2929, %v2930
          %v2932 = vrot.slane %v2931, 4
          %v2933 = vadd.f32 %v2931, %v2932
          %v2934 = vrot.slane %v2933, 2
          %v2935 = vadd.f32 %v2933, %v2934
          %v2936 = vrot.slane %v2935, 1
          %v2937 = vadd.f32 %v2935, %v2936
          %v2938 = vmul.f32 %v2836, %v2836
          %v2939 = vmul.f32 %v2837, %v2837
          %v2940 = vmul.f32 %v2838, %v2838
          %v2941 = vmul.f32 %v2839, %v2839
          %v2942 = vmul.f32 %v2840, %v2840
          %v2943 = vmul.f32 %v2841, %v2841
          %v2944 = vmul.f32 %v2842, %v2842
          %v2945 = vmul.f32 %v2843, %v2843
          %v2946 = vmul.f32 %v2844, %v2844
          %v2947 = vmul.f32 %v2845, %v2845
          %v2948 = vmul.f32 %v2846, %v2846
          %v2949 = vmul.f32 %v2847, %v2847
          %v2950 = vmul.f32 %v2848, %v2848
          %v2951 = vmul.f32 %v2849, %v2849
          %v2952 = vmul.f32 %v2850, %v2850
          %v2953 = vmul.f32 %v2851, %v2851
          %v2954 = vmul.f32 %v2852, %v2852
          %v2955 = vmul.f32 %v2853, %v2853
          %v2956 = vmul.f32 %v2854, %v2854
          %v2957 = vmul.f32 %v2855, %v2855
          %v2958 = vmul.f32 %v2856, %v2856
          %v2959 = vmul.f32 %v2857, %v2857
          %v2960 = vmul.f32 %v2858, %v2858
          %v2961 = vmul.f32 %v2859, %v2859
          %v2962 = vmul.f32 %v2860, %v2860
          %v2963 = vmul.f32 %v2861, %v2861
          %v2964 = vmul.f32 %v2862, %v2862
          %v2965 = vmul.f32 %v2863, %v2863
          %v2966 = vmul.f32 %v2864, %v2864
          %v2967 = vmul.f32 %v2865, %v2865
          %v2968 = vmul.f32 %v2866, %v2866
          %v2969 = vmul.f32 %v2867, %v2867
          %v2970 = vsel %vm2868, %v2938, 0.0
          %v2971 = vsel %vm2868, %v2939, 0.0
          %v2972 = vadd.f32 %v2970, %v2971
          %v2973 = vsel %vm2868, %v2940, 0.0
          %v2974 = vadd.f32 %v2972, %v2973
          %v2975 = vsel %vm2868, %v2941, 0.0
          %v2976 = vadd.f32 %v2974, %v2975
          %v2977 = vsel %vm2868, %v2942, 0.0
          %v2978 = vadd.f32 %v2976, %v2977
          %v2979 = vsel %vm2868, %v2943, 0.0
          %v2980 = vadd.f32 %v2978, %v2979
          %v2981 = vsel %vm2868, %v2944, 0.0
          %v2982 = vadd.f32 %v2980, %v2981
          %v2983 = vsel %vm2868, %v2945, 0.0
          %v2984 = vadd.f32 %v2982, %v2983
          %v2985 = vsel %vm2868, %v2946, 0.0
          %v2986 = vadd.f32 %v2984, %v2985
          %v2987 = vsel %vm2868, %v2947, 0.0
          %v2988 = vadd.f32 %v2986, %v2987
          %v2989 = vsel %vm2868, %v2948, 0.0
          %v2990 = vadd.f32 %v2988, %v2989
          %v2991 = vsel %vm2868, %v2949, 0.0
          %v2992 = vadd.f32 %v2990, %v2991
          %v2993 = vsel %vm2868, %v2950, 0.0
          %v2994 = vadd.f32 %v2992, %v2993
          %v2995 = vsel %vm2868, %v2951, 0.0
          %v2996 = vadd.f32 %v2994, %v2995
          %v2997 = vsel %vm2868, %v2952, 0.0
          %v2998 = vadd.f32 %v2996, %v2997
          %v2999 = vsel %vm2868, %v2953, 0.0
          %v3000 = vadd.f32 %v2998, %v2999
          %v3001 = vsel %vm2868, %v2954, 0.0
          %v3002 = vadd.f32 %v3000, %v3001
          %v3003 = vsel %vm2868, %v2955, 0.0
          %v3004 = vadd.f32 %v3002, %v3003
          %v3005 = vsel %vm2868, %v2956, 0.0
          %v3006 = vadd.f32 %v3004, %v3005
          %v3007 = vsel %vm2868, %v2957, 0.0
          %v3008 = vadd.f32 %v3006, %v3007
          %v3009 = vsel %vm2868, %v2958, 0.0
          %v3010 = vadd.f32 %v3008, %v3009
          %v3011 = vsel %vm2868, %v2959, 0.0
          %v3012 = vadd.f32 %v3010, %v3011
          %v3013 = vsel %vm2868, %v2960, 0.0
          %v3014 = vadd.f32 %v3012, %v3013
          %v3015 = vsel %vm2868, %v2961, 0.0
          %v3016 = vadd.f32 %v3014, %v3015
          %v3017 = vsel %vm2868, %v2962, 0.0
          %v3018 = vadd.f32 %v3016, %v3017
          %v3019 = vsel %vm2868, %v2963, 0.0
          %v3020 = vadd.f32 %v3018, %v3019
          %v3021 = vsel %vm2868, %v2964, 0.0
          %v3022 = vadd.f32 %v3020, %v3021
          %v3023 = vsel %vm2868, %v2965, 0.0
          %v3024 = vadd.f32 %v3022, %v3023
          %v3025 = vsel %vm2868, %v2966, 0.0
          %v3026 = vadd.f32 %v3024, %v3025
          %v3027 = vsel %vm2868, %v2967, 0.0
          %v3028 = vadd.f32 %v3026, %v3027
          %v3029 = vsel %vm2868, %v2968, 0.0
          %v3030 = vadd.f32 %v3028, %v3029
          %v3031 = vsel %vm2868, %v2969, 0.0
          %v3032 = vadd.f32 %v3030, %v3031
          %v3033 = vrot.slane %v3032, 4
          %v3034 = vadd.f32 %v3032, %v3033
          %v3035 = vrot.slane %v3034, 2
          %v3036 = vadd.f32 %v3034, %v3035
          %v3037 = vrot.slane %v3036, 1
          %v3038 = vadd.f32 %v3036, %v3037
          %vm3039 = vcmask 1040384
          %v3040 = vsel %vm3039, %v2937, %v3038
          %vm3041 = vcmask 123904
          %3042 = vst.msk [vmem:[%s507] sm:$0x3] %vm3041, %v3040
        $region81: #{tpu_custom_call.1} parent=64 // pred_fallthru
          _
        %s3043 = sand.u32 %s106, 1
        %s3044 = scalar_lea.sflag [#allocation4], %s3043
        %s3045 = sand.u32 %s106, 1
        %s3046 = smul.addr %s3045, 256
        %s3047 = scalar_lea.vmem [#allocation3], %s3046
        %s3048 = sand.u32 %s134, 1
        %s3049 = scalar_lea.sflag [#allocation6], %s3048
        %s3050 = sand.u32 %s134, 1
        %s3051 = smul.addr %s3050, 2
        %s3052 = scalar_lea.vmem [#allocation5], %s3051
        // Predicated region
        $region82: #{tpu_custom_call.1} parent=64 // pred_check
          %p3053 = pneg %p116
        $region83: #{tpu_custom_call.1} parent=64 // pred_check_branch
          %3055 = sbr.rel (%p3053) target = $region85
        $region84: #{tpu_custom_call.1} parent=64 // pred_region
          #allocation8 [shape = 'u32[6]{0}', space=smem, size = 0x18, scoped, tag = 'DMA stride descriptor']
          %s3056 = smul.u32 8, %s26
          %3058 = vsyncadd %s3044, 0
          %s3059 = smul.addr %s3056, 2
          %s3060 = sadd.s32 %s27, %s3059
          %s3061 = smul.addr %s3060, 8
          %s3062 = scalar_lea.hbm %s2, %s3061
          %s3064 = sshll.u32 1, 14
          %s3065 = sxor.u32 4294967295, %s3064
          %s3068 = sshll.u32 7, 18
          %s3069 = sxor.u32 4294967295, %s3068
          %s3070 = sand.u32 0, %s3069
          %s3072 = sor.u32 %s3070, 0
          %s3073 = sshll.u32 %s3047, 4
          %s3074 = int_to_ptr.vmem [resolvable:$true] %s3073
          %s3075 = sshll.u32 %s3062, 4
          %s3076 = int_to_ptr.hbm [resolvable:$true] %s3075
          %3082 = sst [smem:[#allocation8]] 2048
          %s3083 = scalar_lea.smem [#allocation8], 1
          %3084 = sst [smem:[%s3083]] 4096
          %s3085 = scalar_lea.smem [#allocation8], 2
          %3086 = sst [smem:[%s3085]] 16
          %s3087 = scalar_lea.smem [#allocation8], 3
          %3088 = sst [smem:[%s3087]] 128
          %s3089 = scalar_lea.smem [#allocation8], 4
          %3090 = sst [smem:[%s3089]] 128
          %s3091 = scalar_lea.smem [#allocation8], 5
          %3092 = sst [smem:[%s3091]] 8
          %3094 = dma.general %s3074, 4096, %s3076, %s3044, [#allocation7], [#allocation8], %s3072, 0
        $region85: #{tpu_custom_call.1} parent=64 // pred_fallthru
          _
        // Predicated region
        $region86: #{tpu_custom_call.1} parent=64 // pred_check
          %p3095 = pneg %p144
        $region87: #{tpu_custom_call.1} parent=64 // pred_check_branch
          %3097 = sbr.rel (%p3095) target = $region89
        $region88: #{tpu_custom_call.1} parent=64 // pred_region
          %3099 = vsyncadd %s3049, 0
          %s3100 = sadd.s32 %s27, %s26
          %s3101 = smul.addr %s3100, 2
          %s3102 = scalar_lea.hbm %s3, %s3101
          %s3104 = sshll.u32 %s3052, 4
          %s3105 = int_to_ptr.vmem [resolvable:$true] %s3104
          %s3106 = sshll.u32 %s3102, 4
          %s3107 = int_to_ptr.hbm [resolvable:$true] %s3106
          %3109 = dma.vmem_to_hbm [thread:$0]  %s3105, 32, %s3107, %s3049
        $region89: #{tpu_custom_call.1} parent=64 // pred_fallthru
          _
      $region65: #{tpu_custom_call.1} parent=5 // pred_fallthru
        _
      %p3110 = scmp.le.s32.totalorder 2, %s16
      // Predicated region
      $region90: #{tpu_custom_call.1} parent=5 // pred_check
        %p3111 = pneg %p3110
      $region91: #{tpu_custom_call.1} parent=5 // pred_check_branch
        %3113 = sbr.rel (%p3111) target = $region93
      $region92: #{tpu_custom_call.1} parent=5 // pred_region
        %s3114 = ssub.s32 %s16, 2
        // Predicated region
        $region94: #{tpu_custom_call.1} parent=92 // pred_check
          %p3115 = pneg %p122
        $region95: #{tpu_custom_call.1} parent=92 // pred_check_branch
          %3117 = sbr.rel (%p3115) target = $region97
        $region96: #{tpu_custom_call.1} parent=92 // pred_region
          %s3118 = sand.u32 %s107, 1
          %s3119 = scalar_lea.sflag [#allocation4], %s3118
          %s3120 = sand.u32 %s107, 1
          %s3121 = smul.addr %s3120, 256
          %s3122 = scalar_lea.vmem [#allocation3], %s3121
          %3124 = dma.done %s3119, 4096
        $region97: #{tpu_custom_call.1} parent=92 // pred_fallthru
          _
        // Predicated region
        $region98: #{tpu_custom_call.1} parent=92 // pred_check
          %p3125 = pneg %p150
        $region99: #{tpu_custom_call.1} parent=92 // pred_check_branch
          %3127 = sbr.rel (%p3125) target = $region101
        $region100: #{tpu_custom_call.1} parent=92 // pred_region
          %s3128 = sand.u32 %s135, 1
          %s3129 = scalar_lea.sflag [#allocation6], %s3128
          %s3130 = sand.u32 %s135, 1
          %s3131 = smul.addr %s3130, 2
          %s3132 = scalar_lea.vmem [#allocation5], %s3131
          %3134 = dma.done %s3129, 32
        $region101: #{tpu_custom_call.1} parent=92 // pred_fallthru
          _
      $region93: #{tpu_custom_call.1} parent=5 // pred_fallthru
        _
    $region6: #{tpu_custom_call.1} parent=1 // loop_footer
      %s20 = sadd.s32 1, %s16
    $region7: #{tpu_custom_call.1} parent=1 // loop_footer_branch
      %15 = sbr.rel target = $region3
    $region8: #{tpu_custom_call.1} parent=1 // loop_exit
      _
    %3135 = vsyncpa [#allocation4], 1
    %s3136 = scalar_lea.sflag [#allocation4], 1
    %3137 = vsyncpa %s3136, 1
    %3138 = vsyncpa [#allocation6], 1
    %s3139 = scalar_lea.sflag [#allocation6], 1
    %3140 = vsyncpa %s3139, 1

</llo_original>
